<compile_context>
chip_gen: v7x
topology: tpu7x:2x2x1
jax: 0.10.0
libtpu: 0.0.40
codegen_flags: <defaults>
</compile_context>

<pallas_src>
import jax
import jax.numpy as jnp
from jax import lax
from jax.experimental import pallas as pl
from jax.experimental.pallas import tpu as pltpu


_EPS = 1e-5


# ----------------------------------------------------------------------------
# Fused residual-block kernel (one grid step == `bt` images)
# ----------------------------------------------------------------------------
def _residual_block_kernel(x_ref, sel_a_ref, sel_b_ref, n1_ref, n2_ref,
                           w1_ref, b1_ref, w2p_ref, wsc_ref, bout_ref,
                           selrows_ref, rowsel_ref, ph2_ref, phx_ref,
                           o_ref, slab_ref):
    Bt, H, WC = x_ref.shape
    Cin = sel_a_ref.shape[1]
    W = WC // Cin
    Hs = H + 2                      # per-image slab stride (one zero halo row per side)
    R = Bt * Hs                     # slab rows
    M1 = R - 2                      # banded-conv output rows computed per step
    Ho = o_ref.shape[1]
    WoCo = o_ref.shape[2]
    inv_hw = 1.0 / float(H * W)

    def plus_affine(mu, var, p_ref):
        """InstanceNorm2dPlus -> per-(image, channel) scale & combined bias so that
        out = x * scale + bias (the -mu*scale term is folded into the bias)."""
        alpha = p_ref[0:1, :]                                   # (1, Cin)
        gamma = p_ref[1:2, :]
        beta = p_ref[2:3, :]
        m = jnp.mean(mu, axis=1, keepdims=True)                 # (Bt, 1)
        v = jnp.sum((mu - m) ** 2, axis=1, keepdims=True) * (1.0 / (Cin - 1))
        means_n = (mu - m) * lax.rsqrt(v + _EPS)                # (Bt, Cin)
        scale_c = gamma * lax.rsqrt(var + _EPS)
        bias_c = gamma * alpha * means_n + beta - mu * scale_c
        return scale_c, bias_c

    def conv_banded(w_ref_):
        """3x3 conv as 3 bf16 MXU matmuls (M1, WC) @ (WC, N) over the halo slab."""
        n_out = w_ref_.shape[2]
        acc = jnp.zeros((M1, n_out), jnp.float32)
        for kh in range(w_ref_.shape[0]):
            acc = acc + jnp.dot(slab_ref[kh:kh + M1, :], w_ref_[kh],
                                preferred_element_type=jnp.float32)
        return acc

    x = x_ref[...]                                              # (Bt, H, WC) f32

    # ---- norm1 (InstanceNorm2dPlus) + ReLU ----
    s1 = jnp.sum(x, axis=1)                                     # (Bt, WC)
    s2 = jnp.sum(x * x, axis=1)                                 # (Bt, WC)
    sums = jnp.dot(jnp.concatenate([s1, s2], axis=0), sel_a_ref[...],
                   preferred_element_type=jnp.float32) * inv_hw          # (2Bt, Cin)
    mu1 = sums[:Bt]
    var1 = jnp.maximum(sums[Bt:] - mu1 * mu1, 0.0)
    sc1, bi1 = plus_affine(mu1, var1, n1_ref)
    sb1 = jnp.dot(jnp.concatenate([sc1, bi1], axis=0), sel_b_ref[...],
                  preferred_element_type=jnp.float32)                    # (2Bt, WC)
    h1 = jnp.maximum(x * sb1[:Bt][:, None, :] + sb1[Bt:][:, None, :], 0.0)
    h1b = h1.astype(jnp.bfloat16)

    # ---- stage conv1 input: per-image interior rows + exactly two zero halo rows ----
    zrow = jnp.zeros((1, WC), jnp.bfloat16)
    for b in range(Bt):
        base = b * Hs
        slab_ref[base:base + 1, :] = zrow
        slab_ref[base + 1:base + 1 + H, :] = h1b[b]
        slab_ref[base + 1 + H:base + 2 + H, :] = zrow

    # ---- conv1 (3x3, Cin -> Cin) + bias ----
    y1 = conv_banded(w1_ref) + b1_ref[...]                               # (M1, WC)

    # ---- norm2 + ReLU (per-image stats over the valid slab rows only) ----
    selrows = selrows_ref[...]                                           # (Bt, M1)
    t1 = jnp.dot(selrows, y1, preferred_element_type=jnp.float32)        # (Bt, WC)
    t2 = jnp.dot(selrows, y1 * y1, preferred_element_type=jnp.float32)
    sums2 = jnp.dot(jnp.concatenate([t1, t2], axis=0), sel_a_ref[...],
                    preferred_element_type=jnp.float32) * inv_hw         # (2Bt, Cin)
    mu2 = sums2[:Bt]
    var2 = jnp.maximum(sums2[Bt:] - mu2 * mu2, 0.0)
    sc2, bi2 = plus_affine(mu2, var2, n2_ref)
    sb2 = jnp.dot(jnp.concatenate([sc2, bi2], axis=0), sel_b_ref[...],
                  preferred_element_type=jnp.float32)                    # (2Bt, WC)
    # Broadcast per-image scale/bias to slab rows; junk/halo rows get 0 scale & bias,
    # so h2 is exactly zero there (keeps the halo invariant with one bulk store).
    rowsb = jnp.dot(rowsel_ref[...],
                    jnp.concatenate([sb2[:Bt], sb2[Bt:]], axis=1),
                    preferred_element_type=jnp.float32)                  # (M1, 2*WC)
    h2 = jnp.maximum(y1 * rowsb[:, :WC] + rowsb[:, WC:], 0.0)

    # ---- stage conv2 input: one bulk store (rows 0 and R-1 keep their zeros) ----
    slab_ref[1:1 + M1, :] = h2.astype(jnp.bfloat16)

    # ---- conv2 (3x3, Cin -> Cout, W mean-pool folded into RHS), H-pool via ph2 ----
    acc2 = conv_banded(w2p_ref)                                          # (M1, WoCo)
    out2 = jnp.dot(ph2_ref[...], acc2,
                   preferred_element_type=jnp.float32)                   # (Bt*Ho, WoCo)

    # ---- shortcut: H mean-pool commuted in front of the (1x1 conv + W-pool) matmul ----
    x2d = x.reshape(Bt * H, WC).astype(jnp.bfloat16)
    xp = jnp.dot(phx_ref[...], x2d, preferred_element_type=jnp.float32)  # (Bt*Ho, WC)
    short = jnp.dot(xp.astype(jnp.bfloat16), wsc_ref[...],
                    preferred_element_type=jnp.float32)                  # (Bt*Ho, WoCo)

    res = out2 + short + bout_ref[...]
    o_ref[...] = res.reshape(Bt, Ho, WoCo).astype(o_ref.dtype)


# ----------------------------------------------------------------------------
# Wrapper-side weight transforms (plain XLA, done once per call)
# ----------------------------------------------------------------------------
def _banded_conv_mats(w, width):
    """(KH, KW, Cin, Cout) conv kernel (stride 1, padding KW//2) -> KH banded
    matrices M[kh] of shape (W*Cin, W*Cout) such that, on lane-dense slabs,
      out[h] = sum_kh act_padded[h + kh - KH//2] @ M[kh]."""
    kh_n, kw_n, cin, cout = w.shape
    wi = jnp.arange(width)[:, None]
    wo = jnp.arange(width)[None, :]
    kw = wi - wo + kw_n // 2
    valid = (kw >= 0) & (kw < kw_n)
    kw_c = jnp.clip(kw, 0, kw_n - 1)
    mats = []
    for kh in range(kh_n):
        m = w[kh][kw_c]                                   # (W, W, Cin, Cout)
        m = jnp.where(valid[:, :, None, None], m, 0.0)
        m = jnp.transpose(m, (0, 2, 1, 3)).reshape(width * cin, width * cout)
        mats.append(m)
    return jnp.stack(mats, axis=0)                        # (KH, W*Cin, W*Cout)


def residual_block_down(x_nchw, params, bt=8):
    """ResidualBlock(input_dim, output_dim, resample='down', act=ReLU,
    normalization=InstanceNorm2dPlus) forward.  NCHW in / NCHW out."""
    B, Cin, H, W = x_nchw.shape
    Cout = params["sc_w"].shape[-1]
    assert H % 2 == 0 and W % 2 == 0 and Cin >= 2
    Ho, Wo = H // 2, W // 2
    WC, WoCo = W * Cin, Wo * Cout

    bt = max(1, min(bt, B))
    nt = -(-B // bt)                    # grid steps
    B_pad = nt * bt
    Hs = H + 2
    R = bt * Hs
    M1 = R - 2

    f32 = jnp.float32
    # NCHW -> lane-dense (B, H, W*Cin) slabs (free reshape of NHWC); pad batch.
    # TODO(synk): keep this slab layout (and bf16) between blocks in a full network
    # instead of converting NCHW<->NHWC around every block.
    x = jnp.transpose(x_nchw, (0, 2, 3, 1)).astype(f32).reshape(B, H, WC)
    if B_pad != B:
        x = jnp.concatenate([x, jnp.zeros((B_pad - B, H, WC), f32)], axis=0)

    eye_in = jnp.eye(Cin, dtype=f32)
    sel_a = jnp.kron(jnp.ones((W, 1), f32), eye_in)                 # (WC, Cin)
    sel_b = jnp.kron(jnp.ones((1, W), f32), eye_in)                 # (Cin, WC)
    pool_w = jnp.where(jnp.arange(W)[:, None] // 2 == jnp.arange(Wo)[None, :],
                       0.5, 0.0).astype(f32)                        # (W, Wo)

    # Banded conv matrices; fold the W-pool (and the 1x1 shortcut conv) into them.
    w1 = _banded_conv_mats(params["conv1_w"], W)                    # (3, WC, WC)
    w2 = _banded_conv_mats(params["conv2_w"], W)                    # (3, WC, W*Cout)
    w2p = jnp.matmul(w2, jnp.kron(pool_w, jnp.eye(Cout, dtype=f32)))  # (3, WC, WoCo)
    wsc = jnp.kron(pool_w, params["sc_w"][0, 0])                    # (WC, WoCo)

    b1_l = jnp.tile(params["conv1_b"], W).reshape(1, WC)
    bout_l = jnp.tile(params["conv2_b"] + params["sc_b"], Wo).reshape(1, WoCo)

    n1 = jnp.stack([params["n1_alpha"], params["n1_gamma"], params["n1_beta"]])
    n2 = jnp.stack([params["n2_alpha"], params["n2_gamma"], params["n2_beta"]])

    # Row-selection / pooling matrices for the batched halo-slab layout.
    r = jnp.arange(M1)
    img_r, off_r = r // Hs, r % Hs
    valid_r = off_r < H
    selrows = ((img_r[None, :] == jnp.arange(bt)[:, None]) & valid_r[None, :]
               ).astype(f32)                                        # (bt, M1)
    rowsel = selrows.T                                              # (M1, bt)
    q = jnp.arange(bt * Ho)
    bq, hq = q // Ho, q % Ho
    tgt = (bq * Hs + 2 * hq)[:, None]
    ph2 = jnp.where((r[None, :] == tgt) | (r[None, :] == tgt + 1),
                    0.5, 0.0).astype(f32)                           # (bt*Ho, M1)
    rx = jnp.arange(bt * H)[None, :]
    tgx = (bq * H + 2 * hq)[:, None]
    phx = jnp.where((rx == tgx) | (rx == tgx + 1),
                    0.5, 0.0).astype(jnp.bfloat16)                  # (bt*Ho, bt*H)

    out = pl.pallas_call(
        _residual_block_kernel,
        out_shape=jax.ShapeDtypeStruct((B_pad, Ho, WoCo), jnp.float32),
        grid=(nt,),
        in_specs=[
            pl.BlockSpec((bt, H, WC), lambda i: (i, 0, 0)),         # x (bt images)
            pl.BlockSpec((WC, Cin), lambda i: (0, 0)),              # sel_a
            pl.BlockSpec((Cin, WC), lambda i: (0, 0)),              # sel_b
            pl.BlockSpec((3, Cin), lambda i: (0, 0)),               # norm1 params
            pl.BlockSpec((3, Cin), lambda i: (0, 0)),               # norm2 params
            pl.BlockSpec((3, WC, WC), lambda i: (0, 0, 0)),         # conv1 banded
            pl.BlockSpec((1, WC), lambda i: (0, 0)),                # conv1 bias lanes
            pl.BlockSpec((3, WC, WoCo), lambda i: (0, 0, 0)),       # conv2 banded + W-pool
            pl.BlockSpec((WC, WoCo), lambda i: (0, 0)),             # shortcut 1x1 + W-pool
            pl.BlockSpec((1, WoCo), lambda i: (0, 0)),              # conv2 + shortcut bias
            pl.BlockSpec((bt, M1), lambda i: (0, 0)),               # valid-row selector
            pl.BlockSpec((M1, bt), lambda i: (0, 0)),               # row broadcast selector
            pl.BlockSpec((bt * Ho, M1), lambda i: (0, 0)),          # conv2 H-pool + compact
            pl.BlockSpec((bt * Ho, bt * H), lambda i: (0, 0)),      # shortcut H-pool
        ],
        out_specs=pl.BlockSpec((bt, Ho, WoCo), lambda i: (i, 0, 0)),
        scratch_shapes=[pltpu.VMEM((R, WC), jnp.bfloat16)],
        compiler_params=pltpu.CompilerParams(
            dimension_semantics=("parallel",),
            vmem_limit_bytes=32 * 1024 * 1024),
    )(x, sel_a, sel_b, n1, n2,
      w1.astype(jnp.bfloat16), b1_l,
      w2p.astype(jnp.bfloat16), wsc.astype(jnp.bfloat16), bout_l,
      selrows, rowsel, ph2, phx)

    out = out[:B]
    # lane-dense (B, Ho, Wo*Cout) -> NCHW
    return jnp.transpose(out.reshape(B, Ho, Wo, Cout), (0, 3, 1, 2))


# ----------------------------------------------------------------------------
# Deterministic parameter initialization (shapes from the PyTorch __init__)
# ----------------------------------------------------------------------------
def _init_conv(key, kh, kw, cin, cout):
    k_w, k_b = jax.random.split(key)
    bound = 1.0 / float(cin * kh * kw) ** 0.5
    w = jax.random.uniform(k_w, (kh, kw, cin, cout), jnp.float32, -bound, bound)
    b = jax.random.uniform(k_b, (cout,), jnp.float32, -bound, bound)
    return w, b


def _init_norm(key, c):
    k1, k2 = jax.random.split(key)
    alpha = 1.0 + 0.02 * jax.random.normal(k1, (c,), jnp.float32)
    gamma = 1.0 + 0.02 * jax.random.normal(k2, (c,), jnp.float32)
    beta = jnp.zeros((c,), jnp.float32)
    return alpha, gamma, beta


def init_residual_block(key, in_dim, out_dim):
    keys = jax.random.split(key, 5)
    n1a, n1g, n1b = _init_norm(keys[0], in_dim)
    c1w, c1b = _init_conv(keys[1], 3, 3, in_dim, in_dim)
    n2a, n2g, n2b = _init_norm(keys[2], in_dim)
    c2w, c2b = _init_conv(keys[3], 3, 3, in_dim, out_dim)
    scw, scb = _init_conv(keys[4], 1, 1, in_dim, out_dim)
    return dict(
        n1_alpha=n1a, n1_gamma=n1g, n1_beta=n1b,
        conv1_w=c1w, conv1_b=c1b,
        n2_alpha=n2a, n2_gamma=n2g, n2_beta=n2b,
        conv2_w=c2w, conv2_b=c2b,
        sc_w=scw, sc_b=scb,
    )


if __name__ == "__main__":
    key = jax.random.PRNGKey(0)
    k_par, k_in = jax.random.split(key)

    # batch=16 with bt=8 -> 2 grid steps (even, so both v7x TensorCores are used),
    # each step running the banded-conv matmuls at M = 8*(16+2)-2 = 142.
    batch, in_dim, out_dim, spatial = 16, 16, 32, 16
    params = init_residual_block(k_par, in_dim, out_dim)
    x = jax.random.normal(k_in, (batch, in_dim, spatial, spatial), jnp.float32)

    out = residual_block_down(x, params, bt=8)
    out = jax.block_until_ready(out)
    assert out.shape == (batch, out_dim, spatial // 2, spatial // 2), out.shape
    print("KERNEL_OK")
</pallas_src>

<mosaic_0001>
module attributes {stable_mosaic.version = 11 : i64} {
  func.func @_residual_block_kernel(%arg0: i32, %arg1: memref<8x16x256xf32, #tpu.memory_space<vmem>>, %arg2: memref<256x16xf32, #tpu.memory_space<vmem>>, %arg3: memref<16x256xf32, #tpu.memory_space<vmem>>, %arg4: memref<3x16xf32, #tpu.memory_space<vmem>>, %arg5: memref<3x16xf32, #tpu.memory_space<vmem>>, %arg6: memref<3x256x256xbf16, #tpu.memory_space<vmem>>, %arg7: memref<1x256xf32, #tpu.memory_space<vmem>>, %arg8: memref<3x256x256xbf16, #tpu.memory_space<vmem>>, %arg9: memref<256x256xbf16, #tpu.memory_space<vmem>>, %arg10: memref<1x256xf32, #tpu.memory_space<vmem>>, %arg11: memref<8x142xf32, #tpu.memory_space<vmem>>, %arg12: memref<142x8xf32, #tpu.memory_space<vmem>>, %arg13: memref<64x142xf32, #tpu.memory_space<vmem>>, %arg14: memref<64x128xbf16, #tpu.memory_space<vmem>>, %arg15: memref<8x8x256xf32, #tpu.memory_space<vmem>>, %arg16: memref<144x256xbf16, #tpu.memory_space<vmem>>) attributes {dimension_semantics = [#tpu.dimension_semantics<parallel>], iteration_bounds = array<i64: 2>, scalar_prefetch = 0 : i64, scratch_operands = 1 : i64, tpu.core_type = #tpu.core_type<tc>, window_params = [{transform_indices = @transform_0, window_bounds = array<i64: 8, 16, 256>}, {pipeline_mode = #tpu.pipeline_mode<synchronous>, transform_indices = @transform_1, window_bounds = array<i64: 256, 16>}, {pipeline_mode = #tpu.pipeline_mode<synchronous>, transform_indices = @transform_2, window_bounds = array<i64: 16, 256>}, {pipeline_mode = #tpu.pipeline_mode<synchronous>, transform_indices = @transform_3, window_bounds = array<i64: 3, 16>}, {pipeline_mode = #tpu.pipeline_mode<synchronous>, transform_indices = @transform_4, window_bounds = array<i64: 3, 16>}, {pipeline_mode = #tpu.pipeline_mode<synchronous>, transform_indices = @transform_5, window_bounds = array<i64: 3, 256, 256>}, {pipeline_mode = #tpu.pipeline_mode<synchronous>, transform_indices = @transform_6, window_bounds = array<i64: 1, 256>}, {pipeline_mode = #tpu.pipeline_mode<synchronous>, transform_indices = @transform_7, window_bounds = array<i64: 3, 256, 256>}, {pipeline_mode = #tpu.pipeline_mode<synchronous>, transform_indices = @transform_8, window_bounds = array<i64: 256, 256>}, {pipeline_mode = #tpu.pipeline_mode<synchronous>, transform_indices = @transform_9, window_bounds = array<i64: 1, 256>}, {pipeline_mode = #tpu.pipeline_mode<synchronous>, transform_indices = @transform_10, window_bounds = array<i64: 8, 142>}, {pipeline_mode = #tpu.pipeline_mode<synchronous>, transform_indices = @transform_11, window_bounds = array<i64: 142, 8>}, {pipeline_mode = #tpu.pipeline_mode<synchronous>, transform_indices = @transform_12, window_bounds = array<i64: 64, 142>}, {pipeline_mode = #tpu.pipeline_mode<synchronous>, transform_indices = @transform_13, window_bounds = array<i64: 64, 128>}, {transform_indices = @transform_14, window_bounds = array<i64: 8, 8, 256>}]} {
    %c0 = arith.constant 0 : index
    %c0_0 = arith.constant 0 : index
    %c0_1 = arith.constant 0 : index
    %0 = vector.load %arg1[%c0, %c0_0, %c0_1] : memref<8x16x256xf32, #tpu.memory_space<vmem>>, vector<8x16x256xf32>
    %cst = arith.constant dense<0.000000e+00> : vector<8x256xf32>
    %1 = vector.multi_reduction <add>, %0, %cst [1] : vector<8x16x256xf32> to vector<8x256xf32>
    %2 = arith.mulf %0, %0 : vector<8x16x256xf32>
    %cst_2 = arith.constant dense<0.000000e+00> : vector<8x256xf32>
    %3 = vector.multi_reduction <add>, %2, %cst_2 [1] : vector<8x16x256xf32> to vector<8x256xf32>
    %4 = tpu.concatenate %1, %3 in 0 : vector<8x256xf32>, vector<8x256xf32> -> vector<16x256xf32>
    %c0_3 = arith.constant 0 : index
    %c0_4 = arith.constant 0 : index
    %5 = vector.load %arg2[%c0_3, %c0_4] : memref<256x16xf32, #tpu.memory_space<vmem>>, vector<256x16xf32>
    %cst_5 = arith.constant dense<0.000000e+00> : vector<16x16xf32>
    %6 = tpu.matmul %4, %5, %cst_5 {dimension_numbers = #tpu.dot_dimension_numbers<[1], [0], [0], [1], [0, 0, 1, 1], [], []>} : vector<16x256xf32>, vector<256x16xf32>, vector<16x16xf32> -> vector<16x16xf32>
    %cst_6 = arith.constant 3.906250e-03 : f32
    %7 = vector.broadcast %cst_6 : f32 to vector<16x16xf32>
    %8 = arith.mulf %6, %7 : vector<16x16xf32>
    %9 = vector.extract_strided_slice %8 {offsets = [0, 0], sizes = [8, 16], strides = [1, 1]} : vector<16x16xf32> to vector<8x16xf32>
    %10 = vector.extract_strided_slice %8 {offsets = [8, 0], sizes = [8, 16], strides = [1, 1]} : vector<16x16xf32> to vector<8x16xf32>
    %11 = arith.mulf %9, %9 : vector<8x16xf32>
    %12 = arith.subf %10, %11 : vector<8x16xf32>
    %cst_7 = arith.constant 0.000000e+00 : f32
    %13 = vector.broadcast %cst_7 : f32 to vector<8x16xf32>
    %14 = arith.maximumf %12, %13 : vector<8x16xf32>
    %c0_8 = arith.constant 0 : index
    %c0_9 = arith.constant 0 : index
    %15 = vector.load %arg4[%c0_8, %c0_9] : memref<3x16xf32, #tpu.memory_space<vmem>>, vector<1x16xf32>
    %c1 = arith.constant 1 : index
    %c0_10 = arith.constant 0 : index
    %16 = vector.load %arg4[%c1, %c0_10] : memref<3x16xf32, #tpu.memory_space<vmem>>, vector<1x16xf32>
    %c2 = arith.constant 2 : index
    %c0_11 = arith.constant 0 : index
    %17 = vector.load %arg4[%c2, %c0_11] : memref<3x16xf32, #tpu.memory_space<vmem>>, vector<1x16xf32>
    %cst_12 = arith.constant dense<0.000000e+00> : vector<8xf32>
    %18 = vector.multi_reduction <add>, %9, %cst_12 [1] : vector<8x16xf32> to vector<8xf32>
    %19 = vector.shape_cast %18 : vector<8xf32> to vector<8x1xf32>
    %cst_13 = arith.constant 1.600000e+01 : f32
    %20 = vector.broadcast %cst_13 : f32 to vector<8x1xf32>
    %21 = arith.divf %19, %20 : vector<8x1xf32>
    %22 = vector.broadcast %21 : vector<8x1xf32> to vector<8x16xf32>
    %23 = arith.subf %9, %22 : vector<8x16xf32>
    %24 = arith.mulf %23, %23 : vector<8x16xf32>
    %cst_14 = arith.constant dense<0.000000e+00> : vector<8xf32>
    %25 = vector.multi_reduction <add>, %24, %cst_14 [1] : vector<8x16xf32> to vector<8xf32>
    %26 = vector.shape_cast %25 : vector<8xf32> to vector<8x1xf32>
    %cst_15 = arith.constant 0.0666666701 : f32
    %27 = vector.broadcast %cst_15 : f32 to vector<8x1xf32>
    %28 = arith.mulf %26, %27 : vector<8x1xf32>
    %29 = vector.broadcast %21 : vector<8x1xf32> to vector<8x16xf32>
    %30 = arith.subf %9, %29 : vector<8x16xf32>
    %cst_16 = arith.constant 9.99999974E-6 : f32
    %31 = vector.broadcast %cst_16 : f32 to vector<8x1xf32>
    %32 = arith.addf %28, %31 : vector<8x1xf32>
    %33 = math.rsqrt %32 : vector<8x1xf32>
    %34 = vector.broadcast %33 : vector<8x1xf32> to vector<8x16xf32>
    %35 = arith.mulf %30, %34 : vector<8x16xf32>
    %cst_17 = arith.constant 9.99999974E-6 : f32
    %36 = vector.broadcast %cst_17 : f32 to vector<8x16xf32>
    %37 = arith.addf %14, %36 : vector<8x16xf32>
    %38 = math.rsqrt %37 : vector<8x16xf32>
    %39 = vector.broadcast %16 : vector<1x16xf32> to vector<8x16xf32>
    %40 = arith.mulf %39, %38 : vector<8x16xf32>
    %41 = arith.mulf %16, %15 : vector<1x16xf32>
    %42 = vector.broadcast %41 : vector<1x16xf32> to vector<8x16xf32>
    %43 = arith.mulf %42, %35 : vector<8x16xf32>
    %44 = vector.broadcast %17 : vector<1x16xf32> to vector<8x16xf32>
    %45 = arith.addf %43, %44 : vector<8x16xf32>
    %46 = arith.mulf %9, %40 : vector<8x16xf32>
    %47 = arith.subf %45, %46 : vector<8x16xf32>
    %48 = tpu.concatenate %40, %47 in 0 : vector<8x16xf32>, vector<8x16xf32> -> vector<16x16xf32>
    %c0_18 = arith.constant 0 : index
    %c0_19 = arith.constant 0 : index
    %49 = vector.load %arg3[%c0_18, %c0_19] : memref<16x256xf32, #tpu.memory_space<vmem>>, vector<16x256xf32>
    %cst_20 = arith.constant dense<0.000000e+00> : vector<16x256xf32>
    %50 = tpu.matmul %48, %49, %cst_20 {dimension_numbers = #tpu.dot_dimension_numbers<[1], [0], [0], [1], [0, 0, 1, 1], [], []>} : vector<16x16xf32>, vector<16x256xf32>, vector<16x256xf32> -> vector<16x256xf32>
    %51 = vector.extract_strided_slice %50 {offsets = [0, 0], sizes = [8, 256], strides = [1, 1]} : vector<16x256xf32> to vector<8x256xf32>
    %52 = vector.shape_cast %51 : vector<8x256xf32> to vector<8x1x256xf32>
    %53 = vector.broadcast %52 : vector<8x1x256xf32> to vector<8x16x256xf32>
    %54 = arith.mulf %0, %53 : vector<8x16x256xf32>
    %55 = vector.extract_strided_slice %50 {offsets = [8, 0], sizes = [8, 256], strides = [1, 1]} : vector<16x256xf32> to vector<8x256xf32>
    %56 = vector.shape_cast %55 : vector<8x256xf32> to vector<8x1x256xf32>
    %57 = vector.broadcast %56 : vector<8x1x256xf32> to vector<8x16x256xf32>
    %58 = arith.addf %54, %57 : vector<8x16x256xf32>
    %cst_21 = arith.constant 0.000000e+00 : f32
    %59 = vector.broadcast %cst_21 : f32 to vector<8x16x256xf32>
    %60 = arith.maximumf %58, %59 : vector<8x16x256xf32>
    %61 = arith.truncf %60 : vector<8x16x256xf32> to vector<8x16x256xbf16>
    %cst_22 = arith.constant 0.000000e+00 : bf16
    %62 = vector.broadcast %cst_22 : bf16 to vector<1x256xbf16>
    %c0_23 = arith.constant 0 : index
    %c0_24 = arith.constant 0 : index
    %63 = vector.load %arg16[%c0_23, %c0_24] : memref<144x256xbf16, #tpu.memory_space<vmem>>, vector<1x256xbf16>
    tpu.vector_store %arg16[%c0_23, %c0_24], %62 {strides = array<i32>} : memref<144x256xbf16, #tpu.memory_space<vmem>>, vector<1x256xbf16>,
    %64 = vector.extract_strided_slice %61 {offsets = [0, 0, 0], sizes = [1, 16, 256], strides = [1, 1, 1]} : vector<8x16x256xbf16> to vector<1x16x256xbf16>
    %65 = vector.shape_cast %64 : vector<1x16x256xbf16> to vector<16x256xbf16>
    %c1_25 = arith.constant 1 : index
    %c0_26 = arith.constant 0 : index
    %66 = vector.load %arg16[%c1_25, %c0_26] : memref<144x256xbf16, #tpu.memory_space<vmem>>, vector<16x256xbf16>
    tpu.vector_store %arg16[%c1_25, %c0_26], %65 {strides = array<i32>} : memref<144x256xbf16, #tpu.memory_space<vmem>>, vector<16x256xbf16>,
    %c17 = arith.constant 17 : index
    %c0_27 = arith.constant 0 : index
    %67 = vector.load %arg16[%c17, %c0_27] : memref<144x256xbf16, #tpu.memory_space<vmem>>, vector<1x256xbf16>
    tpu.vector_store %arg16[%c17, %c0_27], %62 {strides = array<i32>} : memref<144x256xbf16, #tpu.memory_space<vmem>>, vector<1x256xbf16>,
    %c18 = arith.constant 18 : index
    %c0_28 = arith.constant 0 : index
    %68 = vector.load %arg16[%c18, %c0_28] : memref<144x256xbf16, #tpu.memory_space<vmem>>, vector<1x256xbf16>
    tpu.vector_store %arg16[%c18, %c0_28], %62 {strides = array<i32>} : memref<144x256xbf16, #tpu.memory_space<vmem>>, vector<1x256xbf16>,
    %69 = vector.extract_strided_slice %61 {offsets = [1, 0, 0], sizes = [1, 16, 256], strides = [1, 1, 1]} : vector<8x16x256xbf16> to vector<1x16x256xbf16>
    %70 = vector.shape_cast %69 : vector<1x16x256xbf16> to vector<16x256xbf16>
    %c19 = arith.constant 19 : index
    %c0_29 = arith.constant 0 : index
    %71 = vector.load %arg16[%c19, %c0_29] : memref<144x256xbf16, #tpu.memory_space<vmem>>, vector<16x256xbf16>
    tpu.vector_store %arg16[%c19, %c0_29], %70 {strides = array<i32>} : memref<144x256xbf16, #tpu.memory_space<vmem>>, vector<16x256xbf16>,
    %c35 = arith.constant 35 : index
    %c0_30 = arith.constant 0 : index
    %72 = vector.load %arg16[%c35, %c0_30] : memref<144x256xbf16, #tpu.memory_space<vmem>>, vector<1x256xbf16>
    tpu.vector_store %arg16[%c35, %c0_30], %62 {strides = array<i32>} : memref<144x256xbf16, #tpu.memory_space<vmem>>, vector<1x256xbf16>,
    %c36 = arith.constant 36 : index
    %c0_31 = arith.constant 0 : index
    %73 = vector.load %arg16[%c36, %c0_31] : memref<144x256xbf16, #tpu.memory_space<vmem>>, vector<1x256xbf16>
    tpu.vector_store %arg16[%c36, %c0_31], %62 {strides = array<i32>} : memref<144x256xbf16, #tpu.memory_space<vmem>>, vector<1x256xbf16>,
    %74 = vector.extract_strided_slice %61 {offsets = [2, 0, 0], sizes = [1, 16, 256], strides = [1, 1, 1]} : vector<8x16x256xbf16> to vector<1x16x256xbf16>
    %75 = vector.shape_cast %74 : vector<1x16x256xbf16> to vector<16x256xbf16>
    %c37 = arith.constant 37 : index
    %c0_32 = arith.constant 0 : index
    %76 = vector.load %arg16[%c37, %c0_32] : memref<144x256xbf16, #tpu.memory_space<vmem>>, vector<16x256xbf16>
    tpu.vector_store %arg16[%c37, %c0_32], %75 {strides = array<i32>} : memref<144x256xbf16, #tpu.memory_space<vmem>>, vector<16x256xbf16>,
    %c53 = arith.constant 53 : index
    %c0_33 = arith.constant 0 : index
    %77 = vector.load %arg16[%c53, %c0_33] : memref<144x256xbf16, #tpu.memory_space<vmem>>, vector<1x256xbf16>
    tpu.vector_store %arg16[%c53, %c0_33], %62 {strides = array<i32>} : memref<144x256xbf16, #tpu.memory_space<vmem>>, vector<1x256xbf16>,
    %c54 = arith.constant 54 : index
    %c0_34 = arith.constant 0 : index
    %78 = vector.load %arg16[%c54, %c0_34] : memref<144x256xbf16, #tpu.memory_space<vmem>>, vector<1x256xbf16>
    tpu.vector_store %arg16[%c54, %c0_34], %62 {strides = array<i32>} : memref<144x256xbf16, #tpu.memory_space<vmem>>, vector<1x256xbf16>,
    %79 = vector.extract_strided_slice %61 {offsets = [3, 0, 0], sizes = [1, 16, 256], strides = [1, 1, 1]} : vector<8x16x256xbf16> to vector<1x16x256xbf16>
    %80 = vector.shape_cast %79 : vector<1x16x256xbf16> to vector<16x256xbf16>
    %c55 = arith.constant 55 : index
    %c0_35 = arith.constant 0 : index
    %81 = vector.load %arg16[%c55, %c0_35] : memref<144x256xbf16, #tpu.memory_space<vmem>>, vector<16x256xbf16>
    tpu.vector_store %arg16[%c55, %c0_35], %80 {strides = array<i32>} : memref<144x256xbf16, #tpu.memory_space<vmem>>, vector<16x256xbf16>,
    %c71 = arith.constant 71 : index
    %c0_36 = arith.constant 0 : index
    %82 = vector.load %arg16[%c71, %c0_36] : memref<144x256xbf16, #tpu.memory_space<vmem>>, vector<1x256xbf16>
    tpu.vector_store %arg16[%c71, %c0_36], %62 {strides = array<i32>} : memref<144x256xbf16, #tpu.memory_space<vmem>>, vector<1x256xbf16>,
    %c72 = arith.constant 72 : index
    %c0_37 = arith.constant 0 : index
    %83 = vector.load %arg16[%c72, %c0_37] : memref<144x256xbf16, #tpu.memory_space<vmem>>, vector<1x256xbf16>
    tpu.vector_store %arg16[%c72, %c0_37], %62 {strides = array<i32>} : memref<144x256xbf16, #tpu.memory_space<vmem>>, vector<1x256xbf16>,
    %84 = vector.extract_strided_slice %61 {offsets = [4, 0, 0], sizes = [1, 16, 256], strides = [1, 1, 1]} : vector<8x16x256xbf16> to vector<1x16x256xbf16>
    %85 = vector.shape_cast %84 : vector<1x16x256xbf16> to vector<16x256xbf16>
    %c73 = arith.constant 73 : index
    %c0_38 = arith.constant 0 : index
    %86 = vector.load %arg16[%c73, %c0_38] : memref<144x256xbf16, #tpu.memory_space<vmem>>, vector<16x256xbf16>
    tpu.vector_store %arg16[%c73, %c0_38], %85 {strides = array<i32>} : memref<144x256xbf16, #tpu.memory_space<vmem>>, vector<16x256xbf16>,
    %c89 = arith.constant 89 : index
    %c0_39 = arith.constant 0 : index
    %87 = vector.load %arg16[%c89, %c0_39] : memref<144x256xbf16, #tpu.memory_space<vmem>>, vector<1x256xbf16>
    tpu.vector_store %arg16[%c89, %c0_39], %62 {strides = array<i32>} : memref<144x256xbf16, #tpu.memory_space<vmem>>, vector<1x256xbf16>,
    %c90 = arith.constant 90 : index
    %c0_40 = arith.constant 0 : index
    %88 = vector.load %arg16[%c90, %c0_40] : memref<144x256xbf16, #tpu.memory_space<vmem>>, vector<1x256xbf16>
    tpu.vector_store %arg16[%c90, %c0_40], %62 {strides = array<i32>} : memref<144x256xbf16, #tpu.memory_space<vmem>>, vector<1x256xbf16>,
    %89 = vector.extract_strided_slice %61 {offsets = [5, 0, 0], sizes = [1, 16, 256], strides = [1, 1, 1]} : vector<8x16x256xbf16> to vector<1x16x256xbf16>
    %90 = vector.shape_cast %89 : vector<1x16x256xbf16> to vector<16x256xbf16>
    %c91 = arith.constant 91 : index
    %c0_41 = arith.constant 0 : index
    %91 = vector.load %arg16[%c91, %c0_41] : memref<144x256xbf16, #tpu.memory_space<vmem>>, vector<16x256xbf16>
    tpu.vector_store %arg16[%c91, %c0_41], %90 {strides = array<i32>} : memref<144x256xbf16, #tpu.memory_space<vmem>>, vector<16x256xbf16>,
    %c107 = arith.constant 107 : index
    %c0_42 = arith.constant 0 : index
    %92 = vector.load %arg16[%c107, %c0_42] : memref<144x256xbf16, #tpu.memory_space<vmem>>, vector<1x256xbf16>
    tpu.vector_store %arg16[%c107, %c0_42], %62 {strides = array<i32>} : memref<144x256xbf16, #tpu.memory_space<vmem>>, vector<1x256xbf16>,
    %c108 = arith.constant 108 : index
    %c0_43 = arith.constant 0 : index
    %93 = vector.load %arg16[%c108, %c0_43] : memref<144x256xbf16, #tpu.memory_space<vmem>>, vector<1x256xbf16>
    tpu.vector_store %arg16[%c108, %c0_43], %62 {strides = array<i32>} : memref<144x256xbf16, #tpu.memory_space<vmem>>, vector<1x256xbf16>,
    %94 = vector.extract_strided_slice %61 {offsets = [6, 0, 0], sizes = [1, 16, 256], strides = [1, 1, 1]} : vector<8x16x256xbf16> to vector<1x16x256xbf16>
    %95 = vector.shape_cast %94 : vector<1x16x256xbf16> to vector<16x256xbf16>
    %c109 = arith.constant 109 : index
    %c0_44 = arith.constant 0 : index
    %96 = vector.load %arg16[%c109, %c0_44] : memref<144x256xbf16, #tpu.memory_space<vmem>>, vector<16x256xbf16>
    tpu.vector_store %arg16[%c109, %c0_44], %95 {strides = array<i32>} : memref<144x256xbf16, #tpu.memory_space<vmem>>, vector<16x256xbf16>,
    %c125 = arith.constant 125 : index
    %c0_45 = arith.constant 0 : index
    %97 = vector.load %arg16[%c125, %c0_45] : memref<144x256xbf16, #tpu.memory_space<vmem>>, vector<1x256xbf16>
    tpu.vector_store %arg16[%c125, %c0_45], %62 {strides = array<i32>} : memref<144x256xbf16, #tpu.memory_space<vmem>>, vector<1x256xbf16>,
    %c126 = arith.constant 126 : index
    %c0_46 = arith.constant 0 : index
    %98 = vector.load %arg16[%c126, %c0_46] : memref<144x256xbf16, #tpu.memory_space<vmem>>, vector<1x256xbf16>
    tpu.vector_store %arg16[%c126, %c0_46], %62 {strides = array<i32>} : memref<144x256xbf16, #tpu.memory_space<vmem>>, vector<1x256xbf16>,
    %99 = vector.extract_strided_slice %61 {offsets = [7, 0, 0], sizes = [1, 16, 256], strides = [1, 1, 1]} : vector<8x16x256xbf16> to vector<1x16x256xbf16>
    %100 = vector.shape_cast %99 : vector<1x16x256xbf16> to vector<16x256xbf16>
    %c127 = arith.constant 127 : index
    %c0_47 = arith.constant 0 : index
    %101 = vector.load %arg16[%c127, %c0_47] : memref<144x256xbf16, #tpu.memory_space<vmem>>, vector<16x256xbf16>
    tpu.vector_store %arg16[%c127, %c0_47], %100 {strides = array<i32>} : memref<144x256xbf16, #tpu.memory_space<vmem>>, vector<16x256xbf16>,
    %c143 = arith.constant 143 : index
    %c0_48 = arith.constant 0 : index
    %102 = vector.load %arg16[%c143, %c0_48] : memref<144x256xbf16, #tpu.memory_space<vmem>>, vector<1x256xbf16>
    tpu.vector_store %arg16[%c143, %c0_48], %62 {strides = array<i32>} : memref<144x256xbf16, #tpu.memory_space<vmem>>, vector<1x256xbf16>,
    %cst_49 = arith.constant 0.000000e+00 : f32
    %103 = vector.broadcast %cst_49 : f32 to vector<142x256xf32>
    %c0_50 = arith.constant 0 : index
    %c0_51 = arith.constant 0 : index
    %104 = vector.load %arg16[%c0_50, %c0_51] : memref<144x256xbf16, #tpu.memory_space<vmem>>, vector<142x256xbf16>
    %c0_52 = arith.constant 0 : index
    %c0_53 = arith.constant 0 : index
    %c0_54 = arith.constant 0 : index
    %105 = vector.load %arg6[%c0_52, %c0_53, %c0_54] : memref<3x256x256xbf16, #tpu.memory_space<vmem>>, vector<1x256x256xbf16>
    %106 = vector.shape_cast %105 : vector<1x256x256xbf16> to vector<256x256xbf16>
    %cst_55 = arith.constant dense<0.000000e+00> : vector<142x256xf32>
    %107 = tpu.matmul %104, %106, %cst_55 {dimension_numbers = #tpu.dot_dimension_numbers<[1], [0], [0], [1], [0, 0, 1, 1], [], []>} : vector<142x256xbf16>, vector<256x256xbf16>, vector<142x256xf32> -> vector<142x256xf32>
    %108 = arith.addf %103, %107 : vector<142x256xf32>
    %c1_56 = arith.constant 1 : index
    %c0_57 = arith.constant 0 : index
    %109 = vector.load %arg16[%c1_56, %c0_57] : memref<144x256xbf16, #tpu.memory_space<vmem>>, vector<142x256xbf16>
    %c1_58 = arith.constant 1 : index
    %c0_59 = arith.constant 0 : index
    %c0_60 = arith.constant 0 : index
    %110 = vector.load %arg6[%c1_58, %c0_59, %c0_60] : memref<3x256x256xbf16, #tpu.memory_space<vmem>>, vector<1x256x256xbf16>
    %111 = vector.shape_cast %110 : vector<1x256x256xbf16> to vector<256x256xbf16>
    %cst_61 = arith.constant dense<0.000000e+00> : vector<142x256xf32>
    %112 = tpu.matmul %109, %111, %cst_61 {dimension_numbers = #tpu.dot_dimension_numbers<[1], [0], [0], [1], [0, 0, 1, 1], [], []>} : vector<142x256xbf16>, vector<256x256xbf16>, vector<142x256xf32> -> vector<142x256xf32>
    %113 = arith.addf %108, %112 : vector<142x256xf32>
    %c2_62 = arith.constant 2 : index
    %c0_63 = arith.constant 0 : index
    %114 = vector.load %arg16[%c2_62, %c0_63] : memref<144x256xbf16, #tpu.memory_space<vmem>>, vector<142x256xbf16>
    %c2_64 = arith.constant 2 : index
    %c0_65 = arith.constant 0 : index
    %c0_66 = arith.constant 0 : index
    %115 = vector.load %arg6[%c2_64, %c0_65, %c0_66] : memref<3x256x256xbf16, #tpu.memory_space<vmem>>, vector<1x256x256xbf16>
    %116 = vector.shape_cast %115 : vector<1x256x256xbf16> to vector<256x256xbf16>
    %cst_67 = arith.constant dense<0.000000e+00> : vector<142x256xf32>
    %117 = tpu.matmul %114, %116, %cst_67 {dimension_numbers = #tpu.dot_dimension_numbers<[1], [0], [0], [1], [0, 0, 1, 1], [], []>} : vector<142x256xbf16>, vector<256x256xbf16>, vector<142x256xf32> -> vector<142x256xf32>
    %118 = arith.addf %113, %117 : vector<142x256xf32>
    %c0_68 = arith.constant 0 : index
    %c0_69 = arith.constant 0 : index
    %119 = vector.load %arg7[%c0_68, %c0_69] : memref<1x256xf32, #tpu.memory_space<vmem>>, vector<1x256xf32>
    %120 = vector.broadcast %119 : vector<1x256xf32> to vector<142x256xf32>
    %121 = arith.addf %118, %120 : vector<142x256xf32>
    %c0_70 = arith.constant 0 : index
    %c0_71 = arith.constant 0 : index
    %122 = vector.load %arg11[%c0_70, %c0_71] : memref<8x142xf32, #tpu.memory_space<vmem>>, vector<8x142xf32>
    %cst_72 = arith.constant dense<0.000000e+00> : vector<8x256xf32>
    %123 = tpu.matmul %122, %121, %cst_72 {dimension_numbers = #tpu.dot_dimension_numbers<[1], [0], [0], [1], [0, 0, 1, 1], [], []>} : vector<8x142xf32>, vector<142x256xf32>, vector<8x256xf32> -> vector<8x256xf32>
    %124 = arith.mulf %121, %121 : vector<142x256xf32>
    %cst_73 = arith.constant dense<0.000000e+00> : vector<8x256xf32>
    %125 = tpu.matmul %122, %124, %cst_73 {dimension_numbers = #tpu.dot_dimension_numbers<[1], [0], [0], [1], [0, 0, 1, 1], [], []>} : vector<8x142xf32>, vector<142x256xf32>, vector<8x256xf32> -> vector<8x256xf32>
    %126 = tpu.concatenate %123, %125 in 0 : vector<8x256xf32>, vector<8x256xf32> -> vector<16x256xf32>
    %c0_74 = arith.constant 0 : index
    %c0_75 = arith.constant 0 : index
    %127 = vector.load %arg2[%c0_74, %c0_75] : memref<256x16xf32, #tpu.memory_space<vmem>>, vector<256x16xf32>
    %cst_76 = arith.constant dense<0.000000e+00> : vector<16x16xf32>
    %128 = tpu.matmul %126, %127, %cst_76 {dimension_numbers = #tpu.dot_dimension_numbers<[1], [0], [0], [1], [0, 0, 1, 1], [], []>} : vector<16x256xf32>, vector<256x16xf32>, vector<16x16xf32> -> vector<16x16xf32>
    %cst_77 = arith.constant 3.906250e-03 : f32
    %129 = vector.broadcast %cst_77 : f32 to vector<16x16xf32>
    %130 = arith.mulf %128, %129 : vector<16x16xf32>
    %131 = vector.extract_strided_slice %130 {offsets = [0, 0], sizes = [8, 16], strides = [1, 1]} : vector<16x16xf32> to vector<8x16xf32>
    %132 = vector.extract_strided_slice %130 {offsets = [8, 0], sizes = [8, 16], strides = [1, 1]} : vector<16x16xf32> to vector<8x16xf32>
    %133 = arith.mulf %131, %131 : vector<8x16xf32>
    %134 = arith.subf %132, %133 : vector<8x16xf32>
    %cst_78 = arith.constant 0.000000e+00 : f32
    %135 = vector.broadcast %cst_78 : f32 to vector<8x16xf32>
    %136 = arith.maximumf %134, %135 : vector<8x16xf32>
    %c0_79 = arith.constant 0 : index
    %c0_80 = arith.constant 0 : index
    %137 = vector.load %arg5[%c0_79, %c0_80] : memref<3x16xf32, #tpu.memory_space<vmem>>, vector<1x16xf32>
    %c1_81 = arith.constant 1 : index
    %c0_82 = arith.constant 0 : index
    %138 = vector.load %arg5[%c1_81, %c0_82] : memref<3x16xf32, #tpu.memory_space<vmem>>, vector<1x16xf32>
    %c2_83 = arith.constant 2 : index
    %c0_84 = arith.constant 0 : index
    %139 = vector.load %arg5[%c2_83, %c0_84] : memref<3x16xf32, #tpu.memory_space<vmem>>, vector<1x16xf32>
    %cst_85 = arith.constant dense<0.000000e+00> : vector<8xf32>
    %140 = vector.multi_reduction <add>, %131, %cst_85 [1] : vector<8x16xf32> to vector<8xf32>
    %141 = vector.shape_cast %140 : vector<8xf32> to vector<8x1xf32>
    %cst_86 = arith.constant 1.600000e+01 : f32
    %142 = vector.broadcast %cst_86 : f32 to vector<8x1xf32>
    %143 = arith.divf %141, %142 : vector<8x1xf32>
    %144 = vector.broadcast %143 : vector<8x1xf32> to vector<8x16xf32>
    %145 = arith.subf %131, %144 : vector<8x16xf32>
    %146 = arith.mulf %145, %145 : vector<8x16xf32>
    %cst_87 = arith.constant dense<0.000000e+00> : vector<8xf32>
    %147 = vector.multi_reduction <add>, %146, %cst_87 [1] : vector<8x16xf32> to vector<8xf32>
    %148 = vector.shape_cast %147 : vector<8xf32> to vector<8x1xf32>
    %cst_88 = arith.constant 0.0666666701 : f32
    %149 = vector.broadcast %cst_88 : f32 to vector<8x1xf32>
    %150 = arith.mulf %148, %149 : vector<8x1xf32>
    %151 = vector.broadcast %143 : vector<8x1xf32> to vector<8x16xf32>
    %152 = arith.subf %131, %151 : vector<8x16xf32>
    %cst_89 = arith.constant 9.99999974E-6 : f32
    %153 = vector.broadcast %cst_89 : f32 to vector<8x1xf32>
    %154 = arith.addf %150, %153 : vector<8x1xf32>
    %155 = math.rsqrt %154 : vector<8x1xf32>
    %156 = vector.broadcast %155 : vector<8x1xf32> to vector<8x16xf32>
    %157 = arith.mulf %152, %156 : vector<8x16xf32>
    %cst_90 = arith.constant 9.99999974E-6 : f32
    %158 = vector.broadcast %cst_90 : f32 to vector<8x16xf32>
    %159 = arith.addf %136, %158 : vector<8x16xf32>
    %160 = math.rsqrt %159 : vector<8x16xf32>
    %161 = vector.broadcast %138 : vector<1x16xf32> to vector<8x16xf32>
    %162 = arith.mulf %161, %160 : vector<8x16xf32>
    %163 = arith.mulf %138, %137 : vector<1x16xf32>
    %164 = vector.broadcast %163 : vector<1x16xf32> to vector<8x16xf32>
    %165 = arith.mulf %164, %157 : vector<8x16xf32>
    %166 = vector.broadcast %139 : vector<1x16xf32> to vector<8x16xf32>
    %167 = arith.addf %165, %166 : vector<8x16xf32>
    %168 = arith.mulf %131, %162 : vector<8x16xf32>
    %169 = arith.subf %167, %168 : vector<8x16xf32>
    %170 = tpu.concatenate %162, %169 in 0 : vector<8x16xf32>, vector<8x16xf32> -> vector<16x16xf32>
    %c0_91 = arith.constant 0 : index
    %c0_92 = arith.constant 0 : index
    %171 = vector.load %arg3[%c0_91, %c0_92] : memref<16x256xf32, #tpu.memory_space<vmem>>, vector<16x256xf32>
    %cst_93 = arith.constant dense<0.000000e+00> : vector<16x256xf32>
    %172 = tpu.matmul %170, %171, %cst_93 {dimension_numbers = #tpu.dot_dimension_numbers<[1], [0], [0], [1], [0, 0, 1, 1], [], []>} : vector<16x16xf32>, vector<16x256xf32>, vector<16x256xf32> -> vector<16x256xf32>
    %c0_94 = arith.constant 0 : index
    %c0_95 = arith.constant 0 : index
    %173 = vector.load %arg12[%c0_94, %c0_95] : memref<142x8xf32, #tpu.memory_space<vmem>>, vector<142x8xf32>
    %174 = vector.extract_strided_slice %172 {offsets = [0, 0], sizes = [8, 256], strides = [1, 1]} : vector<16x256xf32> to vector<8x256xf32>
    %175 = vector.extract_strided_slice %172 {offsets = [8, 0], sizes = [8, 256], strides = [1, 1]} : vector<16x256xf32> to vector<8x256xf32>
    %176 = tpu.concatenate %174, %175 in 1 : vector<8x256xf32>, vector<8x256xf32> -> vector<8x512xf32>
    %cst_96 = arith.constant dense<0.000000e+00> : vector<142x512xf32>
    %177 = tpu.matmul %173, %176, %cst_96 {dimension_numbers = #tpu.dot_dimension_numbers<[1], [0], [0], [1], [0, 0, 1, 1], [], []>} : vector<142x8xf32>, vector<8x512xf32>, vector<142x512xf32> -> vector<142x512xf32>
    %178 = vector.extract_strided_slice %177 {offsets = [0, 0], sizes = [142, 256], strides = [1, 1]} : vector<142x512xf32> to vector<142x256xf32>
    %179 = arith.mulf %121, %178 : vector<142x256xf32>
    %180 = vector.extract_strided_slice %177 {offsets = [0, 256], sizes = [142, 256], strides = [1, 1]} : vector<142x512xf32> to vector<142x256xf32>
    %181 = arith.addf %179, %180 : vector<142x256xf32>
    %cst_97 = arith.constant 0.000000e+00 : f32
    %182 = vector.broadcast %cst_97 : f32 to vector<142x256xf32>
    %183 = arith.maximumf %181, %182 : vector<142x256xf32>
    %184 = arith.truncf %183 : vector<142x256xf32> to vector<142x256xbf16>
    %c1_98 = arith.constant 1 : index
    %c0_99 = arith.constant 0 : index
    %185 = vector.load %arg16[%c1_98, %c0_99] : memref<144x256xbf16, #tpu.memory_space<vmem>>, vector<142x256xbf16>
    tpu.vector_store %arg16[%c1_98, %c0_99], %184 {strides = array<i32>} : memref<144x256xbf16, #tpu.memory_space<vmem>>, vector<142x256xbf16>,
    %cst_100 = arith.constant 0.000000e+00 : f32
    %186 = vector.broadcast %cst_100 : f32 to vector<142x256xf32>
    %c0_101 = arith.constant 0 : index
    %c0_102 = arith.constant 0 : index
    %187 = vector.load %arg16[%c0_101, %c0_102] : memref<144x256xbf16, #tpu.memory_space<vmem>>, vector<142x256xbf16>
    %c0_103 = arith.constant 0 : index
    %c0_104 = arith.constant 0 : index
    %c0_105 = arith.constant 0 : index
    %188 = vector.load %arg8[%c0_103, %c0_104, %c0_105] : memref<3x256x256xbf16, #tpu.memory_space<vmem>>, vector<1x256x256xbf16>
    %189 = vector.shape_cast %188 : vector<1x256x256xbf16> to vector<256x256xbf16>
    %cst_106 = arith.constant dense<0.000000e+00> : vector<142x256xf32>
    %190 = tpu.matmul %187, %189, %cst_106 {dimension_numbers = #tpu.dot_dimension_numbers<[1], [0], [0], [1], [0, 0, 1, 1], [], []>} : vector<142x256xbf16>, vector<256x256xbf16>, vector<142x256xf32> -> vector<142x256xf32>
    %191 = arith.addf %186, %190 : vector<142x256xf32>
    %c1_107 = arith.constant 1 : index
    %c0_108 = arith.constant 0 : index
    %192 = vector.load %arg16[%c1_107, %c0_108] : memref<144x256xbf16, #tpu.memory_space<vmem>>, vector<142x256xbf16>
    %c1_109 = arith.constant 1 : index
    %c0_110 = arith.constant 0 : index
    %c0_111 = arith.constant 0 : index
    %193 = vector.load %arg8[%c1_109, %c0_110, %c0_111] : memref<3x256x256xbf16, #tpu.memory_space<vmem>>, vector<1x256x256xbf16>
    %194 = vector.shape_cast %193 : vector<1x256x256xbf16> to vector<256x256xbf16>
    %cst_112 = arith.constant dense<0.000000e+00> : vector<142x256xf32>
    %195 = tpu.matmul %192, %194, %cst_112 {dimension_numbers = #tpu.dot_dimension_numbers<[1], [0], [0], [1], [0, 0, 1, 1], [], []>} : vector<142x256xbf16>, vector<256x256xbf16>, vector<142x256xf32> -> vector<142x256xf32>
    %196 = arith.addf %191, %195 : vector<142x256xf32>
    %c2_113 = arith.constant 2 : index
    %c0_114 = arith.constant 0 : index
    %197 = vector.load %arg16[%c2_113, %c0_114] : memref<144x256xbf16, #tpu.memory_space<vmem>>, vector<142x256xbf16>
    %c2_115 = arith.constant 2 : index
    %c0_116 = arith.constant 0 : index
    %c0_117 = arith.constant 0 : index
    %198 = vector.load %arg8[%c2_115, %c0_116, %c0_117] : memref<3x256x256xbf16, #tpu.memory_space<vmem>>, vector<1x256x256xbf16>
    %199 = vector.shape_cast %198 : vector<1x256x256xbf16> to vector<256x256xbf16>
    %cst_118 = arith.constant dense<0.000000e+00> : vector<142x256xf32>
    %200 = tpu.matmul %197, %199, %cst_118 {dimension_numbers = #tpu.dot_dimension_numbers<[1], [0], [0], [1], [0, 0, 1, 1], [], []>} : vector<142x256xbf16>, vector<256x256xbf16>, vector<142x256xf32> -> vector<142x256xf32>
    %201 = arith.addf %196, %200 : vector<142x256xf32>
    %c0_119 = arith.constant 0 : index
    %c0_120 = arith.constant 0 : index
    %202 = vector.load %arg13[%c0_119, %c0_120] : memref<64x142xf32, #tpu.memory_space<vmem>>, vector<64x142xf32>
    %cst_121 = arith.constant dense<0.000000e+00> : vector<64x256xf32>
    %203 = tpu.matmul %202, %201, %cst_121 {dimension_numbers = #tpu.dot_dimension_numbers<[1], [0], [0], [1], [0, 0, 1, 1], [], []>} : vector<64x142xf32>, vector<142x256xf32>, vector<64x256xf32> -> vector<64x256xf32>
    %204 = vector.shape_cast %0 : vector<8x16x256xf32> to vector<128x256xf32>
    %205 = arith.truncf %204 : vector<128x256xf32> to vector<128x256xbf16>
    %c0_122 = arith.constant 0 : index
    %c0_123 = arith.constant 0 : index
    %206 = vector.load %arg14[%c0_122, %c0_123] : memref<64x128xbf16, #tpu.memory_space<vmem>>, vector<64x128xbf16>
    %cst_124 = arith.constant dense<0.000000e+00> : vector<64x256xf32>
    %207 = tpu.matmul %206, %205, %cst_124 {dimension_numbers = #tpu.dot_dimension_numbers<[1], [0], [0], [1], [0, 0, 1, 1], [], []>} : vector<64x128xbf16>, vector<128x256xbf16>, vector<64x256xf32> -> vector<64x256xf32>
    %208 = arith.truncf %207 : vector<64x256xf32> to vector<64x256xbf16>
    %c0_125 = arith.constant 0 : index
    %c0_126 = arith.constant 0 : index
    %209 = vector.load %arg9[%c0_125, %c0_126] : memref<256x256xbf16, #tpu.memory_space<vmem>>, vector<256x256xbf16>
    %cst_127 = arith.constant dense<0.000000e+00> : vector<64x256xf32>
    %210 = tpu.matmul %208, %209, %cst_127 {dimension_numbers = #tpu.dot_dimension_numbers<[1], [0], [0], [1], [0, 0, 1, 1], [], []>} : vector<64x256xbf16>, vector<256x256xbf16>, vector<64x256xf32> -> vector<64x256xf32>
    %211 = arith.addf %203, %210 : vector<64x256xf32>
    %c0_128 = arith.constant 0 : index
    %c0_129 = arith.constant 0 : index
    %212 = vector.load %arg10[%c0_128, %c0_129] : memref<1x256xf32, #tpu.memory_space<vmem>>, vector<1x256xf32>
    %213 = vector.broadcast %212 : vector<1x256xf32> to vector<64x256xf32>
    %214 = arith.addf %211, %213 : vector<64x256xf32>
    %215 = vector.shape_cast %214 : vector<64x256xf32> to vector<8x8x256xf32>
    %c0_130 = arith.constant 0 : index
    %c0_131 = arith.constant 0 : index
    %c0_132 = arith.constant 0 : index
    %216 = vector.load %arg15[%c0_130, %c0_131, %c0_132] : memref<8x8x256xf32, #tpu.memory_space<vmem>>, vector<8x8x256xf32>
    tpu.vector_store %arg15[%c0_130, %c0_131, %c0_132], %215 {strides = array<i32>} : memref<8x8x256xf32, #tpu.memory_space<vmem>>, vector<8x8x256xf32>,
    return
  }
  func.func @transform_0(%arg0: i32) -> (i32, i32, i32) {
    %c0_i32 = arith.constant 0 : i32
    %c0_i32_0 = arith.constant 0 : i32
    %c0_i32_1 = arith.constant 0 : i32
    return %arg0, %c0_i32, %c0_i32_0 : i32, i32, i32
  }
  func.func @transform_1(%arg0: i32) -> (i32, i32) {
    %c0_i32 = arith.constant 0 : i32
    %c0_i32_0 = arith.constant 0 : i32
    %c0_i32_1 = arith.constant 0 : i32
    return %c0_i32, %c0_i32_0 : i32, i32
  }
  func.func @transform_2(%arg0: i32) -> (i32, i32) {
    %c0_i32 = arith.constant 0 : i32
    %c0_i32_0 = arith.constant 0 : i32
    %c0_i32_1 = arith.constant 0 : i32
    return %c0_i32, %c0_i32_0 : i32, i32
  }
  func.func @transform_3(%arg0: i32) -> (i32, i32) {
    %c0_i32 = arith.constant 0 : i32
    %c0_i32_0 = arith.constant 0 : i32
    %c0_i32_1 = arith.constant 0 : i32
    return %c0_i32, %c0_i32_0 : i32, i32
  }
  func.func @transform_4(%arg0: i32) -> (i32, i32) {
    %c0_i32 = arith.constant 0 : i32
    %c0_i32_0 = arith.constant 0 : i32
    %c0_i32_1 = arith.constant 0 : i32
    return %c0_i32, %c0_i32_0 : i32, i32
  }
  func.func @transform_5(%arg0: i32) -> (i32, i32, i32) {
    %c0_i32 = arith.constant 0 : i32
    %c0_i32_0 = arith.constant 0 : i32
    %c0_i32_1 = arith.constant 0 : i32
    %c0_i32_2 = arith.constant 0 : i32
    return %c0_i32, %c0_i32_0, %c0_i32_1 : i32, i32, i32
  }
  func.func @transform_6(%arg0: i32) -> (i32, i32) {
    %c0_i32 = arith.constant 0 : i32
    %c0_i32_0 = arith.constant 0 : i32
    %c0_i32_1 = arith.constant 0 : i32
    return %c0_i32, %c0_i32_0 : i32, i32
  }
  func.func @transform_7(%arg0: i32) -> (i32, i32, i32) {
    %c0_i32 = arith.constant 0 : i32
    %c0_i32_0 = arith.constant 0 : i32
    %c0_i32_1 = arith.constant 0 : i32
    %c0_i32_2 = arith.constant 0 : i32
    return %c0_i32, %c0_i32_0, %c0_i32_1 : i32, i32, i32
  }
  func.func @transform_8(%arg0: i32) -> (i32, i32) {
    %c0_i32 = arith.constant 0 : i32
    %c0_i32_0 = arith.constant 0 : i32
    %c0_i32_1 = arith.constant 0 : i32
    return %c0_i32, %c0_i32_0 : i32, i32
  }
  func.func @transform_9(%arg0: i32) -> (i32, i32) {
    %c0_i32 = arith.constant 0 : i32
    %c0_i32_0 = arith.constant 0 : i32
    %c0_i32_1 = arith.constant 0 : i32
    return %c0_i32, %c0_i32_0 : i32, i32
  }
  func.func @transform_10(%arg0: i32) -> (i32, i32) {
    %c0_i32 = arith.constant 0 : i32
    %c0_i32_0 = arith.constant 0 : i32
    %c0_i32_1 = arith.constant 0 : i32
    return %c0_i32, %c0_i32_0 : i32, i32
  }
  func.func @transform_11(%arg0: i32) -> (i32, i32) {
    %c0_i32 = arith.constant 0 : i32
    %c0_i32_0 = arith.constant 0 : i32
    %c0_i32_1 = arith.constant 0 : i32
    return %c0_i32, %c0_i32_0 : i32, i32
  }
  func.func @transform_12(%arg0: i32) -> (i32, i32) {
    %c0_i32 = arith.constant 0 : i32
    %c0_i32_0 = arith.constant 0 : i32
    %c0_i32_1 = arith.constant 0 : i32
    return %c0_i32, %c0_i32_0 : i32, i32
  }
  func.func @transform_13(%arg0: i32) -> (i32, i32) {
    %c0_i32 = arith.constant 0 : i32
    %c0_i32_0 = arith.constant 0 : i32
    %c0_i32_1 = arith.constant 0 : i32
    return %c0_i32, %c0_i32_0 : i32, i32
  }
  func.func @transform_14(%arg0: i32) -> (i32, i32, i32) {
    %c0_i32 = arith.constant 0 : i32
    %c0_i32_0 = arith.constant 0 : i32
    %c0_i32_1 = arith.constant 0 : i32
    return %arg0, %c0_i32, %c0_i32_0 : i32, i32, i32
  }
}

</mosaic_0001>

<llo_original>
// kernel: tpu_custom_call.1
$region0: #{tpu_custom_call.1}
  #allocation0 [shape = 'u32[]', space=smem, size = 0x4, offset = 0x4, fixed_abs, tag = 'smem constant byte address 0x4 - core index']
  #allocation1 [shape = 'u32[144,128]{1,0:T(1,128)}', space=vmem, size = 0x12000, scoped, tag = 'internal scratch']
  #allocation2 [shape = 'bf16[144,256]{1,0:T(16,128)(2,1)}', space=vmem, size = 0x12000, scoped, tag = 'scratch operand']
  %s0 = inlined_call_operand.hbm [shape: f32[16,16,256], index: 0, kind: input, shape index: {}]
  %s1 = inlined_call_operand.vmem [shape: f32[256,16], index: 1, kind: input, shape index: {}]
  %s2 = inlined_call_operand.vmem [shape: f32[16,256], index: 2, kind: input, shape index: {}]
  %s3 = inlined_call_operand.hbm [shape: f32[3,16], index: 3, kind: input, shape index: {}]
  %s4 = inlined_call_operand.hbm [shape: f32[3,16], index: 4, kind: input, shape index: {}]
  %s5 = inlined_call_operand.hbm [shape: bf16[3,256,256], index: 5, kind: input, shape index: {}]
  %s6 = inlined_call_operand.vmem [shape: f32[1,256], index: 6, kind: input, shape index: {}]
  %s7 = inlined_call_operand.hbm [shape: bf16[3,256,256], index: 7, kind: input, shape index: {}]
  %s8 = inlined_call_operand.vmem [shape: bf16[256,256], index: 8, kind: input, shape index: {}]
  %s9 = inlined_call_operand.hbm [shape: f32[1,256], index: 9, kind: input, shape index: {}]
  %s10 = inlined_call_operand.vmem [shape: f32[8,142], index: 10, kind: input, shape index: {}]
  %s11 = inlined_call_operand.vmem [shape: f32[142,8], index: 11, kind: input, shape index: {}]
  %s12 = inlined_call_operand.vmem [shape: f32[64,142], index: 12, kind: input, shape index: {}]
  %s13 = inlined_call_operand.vmem [shape: bf16[64,128], index: 13, kind: input, shape index: {}]
  %s14 = inlined_call_operand.hbm [shape: f32[16,8,256], index: 14, kind: output, shape index: {}]
  %s15 = sld [smem:[#allocation0]]
  $region113: #{tpu_custom_call.1} parent=0
    _
  %s17 = ssub.s32 1, %s15
  %s18 = scalar_select 0, %s17, %s15
  $region1: #{tpu_custom_call.1} parent=0
    #allocation3 [shape = 'u8[262144]{0}', space=vmem, size = 0x40000, scoped, tag = 'input window, operand 0']
    #allocation4 [shape = 's32[2]{0}', space=sflag, size = 0x8, scoped, tag = 'scoped memory for tpu_custom_call.1']
    #allocation5 [shape = 's32[2]{0}', space=sflag, size = 0x8, scoped, tag = 'scoped memory for tpu_custom_call.1']
    #allocation6 [shape = 'u8[2048]{0}', space=vmem, size = 0x800, scoped, tag = 'input window, operand 3, single buffered']
    #allocation7 [shape = 's32[1]{0}', space=sflag, size = 0x4, scoped, tag = 'scoped memory for tpu_custom_call.1']
    #allocation8 [shape = 'u8[2048]{0}', space=vmem, size = 0x800, scoped, tag = 'input window, operand 4, single buffered']
    #allocation9 [shape = 'u8[393216]{0}', space=vmem, size = 0x60000, scoped, tag = 'input window, operand 5, single buffered']
    #allocation10 [shape = 's32[1]{0}', space=sflag, size = 0x4, scoped, tag = 'scoped memory for tpu_custom_call.1']
    #allocation11 [shape = 'u8[393216]{0}', space=vmem, size = 0x60000, scoped, tag = 'input window, operand 7, single buffered']
    #allocation12 [shape = 'u8[1024]{0}', space=vmem, size = 0x400, scoped, tag = 'input window, operand 9, single buffered']
    #allocation13 [shape = 's32[1]{0}', space=sflag, size = 0x4, scoped, tag = 'scoped memory for tpu_custom_call.1']
    #allocation14 [shape = 'u8[131072]{0}', space=vmem, size = 0x20000, scoped, tag = 'output window, operand 0']
    %19 = vsyncpa [#allocation4], 0
    %s20 = scalar_lea.sflag [#allocation4], 1
    %21 = vsyncpa %s20, 0
    %22 = vsyncpa [#allocation7], 0
    %23 = vsyncpa [#allocation10], 0
    %24 = vsyncpa [#allocation13], 0
    %25 = vsyncpa [#allocation5], 0
    %s26 = scalar_lea.sflag [#allocation5], 1
    %27 = vsyncpa %s26, 0
    loop: start=0, step=1, limit=4
    $region2: #{tpu_custom_call.1} parent=1 // loop_pre_header
      _
    $region3: #{tpu_custom_call.1} parent=1 // loop_header
      %s29 = sphi 0, %s33
      %p30 = scmp.ge.s32.totalorder %s29, 4
      %s39 = sphi 0, %s41
      %s42 = sphi 0, %s39
      %s43 = sphi 0, %s42
      %s59 = sphi 0, %s43
      %s63 = sphi 0, %s63
      %s65 = sphi 0, %s63
      %s66 = sphi 0, %s65
      %s80 = sphi 0, %s66
      %s84 = sphi 0, %s84
      %s86 = sphi 0, %s84
      %s87 = sphi 0, %s86
      %s101 = sphi 0, %s87
      %s105 = sphi 0, %s105
      %s107 = sphi 0, %s105
      %s108 = sphi 0, %s107
      %s122 = sphi 0, %s108
      %s126 = sphi 0, %s126
      %s128 = sphi 0, %s126
      %s129 = sphi 0, %s128
      %s143 = sphi 0, %s129
      %s147 = sphi 0, %s147
      %s149 = sphi 0, %s147
      %s150 = sphi 0, %s149
      %s164 = sphi 0, %s150
      %s168 = sphi 0, %s168
      %s170 = sphi 0, %s168
      %s171 = sphi 0, %s170
      %s185 = sphi 0, %s171
      %s189 = sphi 0, %s189
      %s191 = sphi 0, %s189
      %s192 = sphi 0, %s191
      %s206 = sphi 0, %s192
      %s210 = sphi 0, %s210
      %s212 = sphi 0, %s210
      %s213 = sphi 0, %s212
      %s227 = sphi 0, %s213
      %s231 = sphi 0, %s231
      %s233 = sphi 0, %s231
      %s234 = sphi 0, %s233
      %s248 = sphi 0, %s234
      %s252 = sphi 0, %s252
      %s254 = sphi 0, %s252
      %s255 = sphi 0, %s254
      %s269 = sphi 0, %s255
      %s273 = sphi 0, %s273
      %s275 = sphi 0, %s273
      %s276 = sphi 0, %s275
      %s290 = sphi 0, %s276
      %s294 = sphi 0, %s294
      %s296 = sphi 0, %s294
      %s297 = sphi 0, %s296
      %s311 = sphi 0, %s297
      %s315 = sphi 0, %s315
      %s317 = sphi 0, %s315
      %s318 = sphi 0, %s317
      %s332 = sphi 0, %s318
      %s338 = sphi 0, %s340
      %s341 = sphi 0, %s338
      %s342 = sphi 0, %s341
      %s358 = sphi 0, %s342
    $region4: #{tpu_custom_call.1} parent=1 // loop_header_branch
      %32 = sbr.rel (%p30) target = $region8
    $region5: #{tpu_custom_call.1} parent=1 // loop_body
      %s34 = ssub.s32 %s29, 1
      %s35 = ssub.s32 %s29, 2
      %s36 = sadd.s32 %s29, 1
      %s37 = ssub.s32 %s29, %s36
      %p38 = scmp.eq.s32.totalorder %s37, 0
      %s40 = sadd.s32 %s39, 1
      %s41 = scalar_select %p38, %s39, %s40
      %p44 = pneg %p38
      %p45 = scmp.eq.s32.totalorder %s29, 1
      %p46 = por %p44, %p45
      %p47 = scmp.ne.s32.totalorder %s39, %s42
      %p48 = scmp.eq.s32.totalorder %s29, 0
      %p49 = por %p47, %p48
      %p50 = scmp.ne.s32.totalorder %s39, %s42
      %p51 = scmp.eq.s32.totalorder %s34, 1
      %p52 = por %p50, %p51
      %p53 = scmp.ne.s32.totalorder %s42, %s43
      %p54 = scmp.eq.s32.totalorder %s34, 0
      %p55 = por %p53, %p54
      %p56 = scmp.ne.s32.totalorder %s42, %s43
      %p57 = scmp.eq.s32.totalorder %s35, 1
      %p58 = por %p56, %p57
      %p60 = scmp.ne.s32.totalorder %s43, %s59
      %p61 = scmp.eq.s32.totalorder %s35, 0
      %p62 = por %p60, %p61
      %s64 = sadd.s32 %s63, 1
      %p67 = scmp.eq.s32.totalorder %s29, 1
      %p68 = scmp.ne.s32.totalorder %s63, %s65
      %p69 = scmp.eq.s32.totalorder %s29, 0
      %p70 = por %p68, %p69
      %p71 = scmp.ne.s32.totalorder %s63, %s65
      %p72 = scmp.eq.s32.totalorder %s34, 1
      %p73 = por %p71, %p72
      %p74 = scmp.ne.s32.totalorder %s65, %s66
      %p75 = scmp.eq.s32.totalorder %s34, 0
      %p76 = por %p74, %p75
      %p77 = scmp.ne.s32.totalorder %s65, %s66
      %p78 = scmp.eq.s32.totalorder %s35, 1
      %p79 = por %p77, %p78
      %p81 = scmp.ne.s32.totalorder %s66, %s80
      %p82 = scmp.eq.s32.totalorder %s35, 0
      %p83 = por %p81, %p82
      %s85 = sadd.s32 %s84, 1
      %p88 = scmp.eq.s32.totalorder %s29, 1
      %p89 = scmp.ne.s32.totalorder %s84, %s86
      %p90 = scmp.eq.s32.totalorder %s29, 0
      %p91 = por %p89, %p90
      %p92 = scmp.ne.s32.totalorder %s84, %s86
      %p93 = scmp.eq.s32.totalorder %s34, 1
      %p94 = por %p92, %p93
      %p95 = scmp.ne.s32.totalorder %s86, %s87
      %p96 = scmp.eq.s32.totalorder %s34, 0
      %p97 = por %p95, %p96
      %p98 = scmp.ne.s32.totalorder %s86, %s87
      %p99 = scmp.eq.s32.totalorder %s35, 1
      %p100 = por %p98, %p99
      %p102 = scmp.ne.s32.totalorder %s87, %s101
      %p103 = scmp.eq.s32.totalorder %s35, 0
      %p104 = por %p102, %p103
      %s106 = sadd.s32 %s105, 1
      %p109 = scmp.eq.s32.totalorder %s29, 1
      %p110 = scmp.ne.s32.totalorder %s105, %s107
      %p111 = scmp.eq.s32.totalorder %s29, 0
      %p112 = por %p110, %p111
      %p113 = scmp.ne.s32.totalorder %s105, %s107
      %p114 = scmp.eq.s32.totalorder %s34, 1
      %p115 = por %p113, %p114
      %p116 = scmp.ne.s32.totalorder %s107, %s108
      %p117 = scmp.eq.s32.totalorder %s34, 0
      %p118 = por %p116, %p117
      %p119 = scmp.ne.s32.totalorder %s107, %s108
      %p120 = scmp.eq.s32.totalorder %s35, 1
      %p121 = por %p119, %p120
      %p123 = scmp.ne.s32.totalorder %s108, %s122
      %p124 = scmp.eq.s32.totalorder %s35, 0
      %p125 = por %p123, %p124
      %s127 = sadd.s32 %s126, 1
      %p130 = scmp.eq.s32.totalorder %s29, 1
      %p131 = scmp.ne.s32.totalorder %s126, %s128
      %p132 = scmp.eq.s32.totalorder %s29, 0
      %p133 = por %p131, %p132
      %p134 = scmp.ne.s32.totalorder %s126, %s128
      %p135 = scmp.eq.s32.totalorder %s34, 1
      %p136 = por %p134, %p135
      %p137 = scmp.ne.s32.totalorder %s128, %s129
      %p138 = scmp.eq.s32.totalorder %s34, 0
      %p139 = por %p137, %p138
      %p140 = scmp.ne.s32.totalorder %s128, %s129
      %p141 = scmp.eq.s32.totalorder %s35, 1
      %p142 = por %p140, %p141
      %p144 = scmp.ne.s32.totalorder %s129, %s143
      %p145 = scmp.eq.s32.totalorder %s35, 0
      %p146 = por %p144, %p145
      %s148 = sadd.s32 %s147, 1
      %p151 = scmp.eq.s32.totalorder %s29, 1
      %p152 = scmp.ne.s32.totalorder %s147, %s149
      %p153 = scmp.eq.s32.totalorder %s29, 0
      %p154 = por %p152, %p153
      %p155 = scmp.ne.s32.totalorder %s147, %s149
      %p156 = scmp.eq.s32.totalorder %s34, 1
      %p157 = por %p155, %p156
      %p158 = scmp.ne.s32.totalorder %s149, %s150
      %p159 = scmp.eq.s32.totalorder %s34, 0
      %p160 = por %p158, %p159
      %p161 = scmp.ne.s32.totalorder %s149, %s150
      %p162 = scmp.eq.s32.totalorder %s35, 1
      %p163 = por %p161, %p162
      %p165 = scmp.ne.s32.totalorder %s150, %s164
      %p166 = scmp.eq.s32.totalorder %s35, 0
      %p167 = por %p165, %p166
      %s169 = sadd.s32 %s168, 1
      %p172 = scmp.eq.s32.totalorder %s29, 1
      %p173 = scmp.ne.s32.totalorder %s168, %s170
      %p174 = scmp.eq.s32.totalorder %s29, 0
      %p175 = por %p173, %p174
      %p176 = scmp.ne.s32.totalorder %s168, %s170
      %p177 = scmp.eq.s32.totalorder %s34, 1
      %p178 = por %p176, %p177
      %p179 = scmp.ne.s32.totalorder %s170, %s171
      %p180 = scmp.eq.s32.totalorder %s34, 0
      %p181 = por %p179, %p180
      %p182 = scmp.ne.s32.totalorder %s170, %s171
      %p183 = scmp.eq.s32.totalorder %s35, 1
      %p184 = por %p182, %p183
      %p186 = scmp.ne.s32.totalorder %s171, %s185
      %p187 = scmp.eq.s32.totalorder %s35, 0
      %p188 = por %p186, %p187
      %s190 = sadd.s32 %s189, 1
      %p193 = scmp.eq.s32.totalorder %s29, 1
      %p194 = scmp.ne.s32.totalorder %s189, %s191
      %p195 = scmp.eq.s32.totalorder %s29, 0
      %p196 = por %p194, %p195
      %p197 = scmp.ne.s32.totalorder %s189, %s191
      %p198 = scmp.eq.s32.totalorder %s34, 1
      %p199 = por %p197, %p198
      %p200 = scmp.ne.s32.totalorder %s191, %s192
      %p201 = scmp.eq.s32.totalorder %s34, 0
      %p202 = por %p200, %p201
      %p203 = scmp.ne.s32.totalorder %s191, %s192
      %p204 = scmp.eq.s32.totalorder %s35, 1
      %p205 = por %p203, %p204
      %p207 = scmp.ne.s32.totalorder %s192, %s206
      %p208 = scmp.eq.s32.totalorder %s35, 0
      %p209 = por %p207, %p208
      %s211 = sadd.s32 %s210, 1
      %p214 = scmp.eq.s32.totalorder %s29, 1
      %p215 = scmp.ne.s32.totalorder %s210, %s212
      %p216 = scmp.eq.s32.totalorder %s29, 0
      %p217 = por %p215, %p216
      %p218 = scmp.ne.s32.totalorder %s210, %s212
      %p219 = scmp.eq.s32.totalorder %s34, 1
      %p220 = por %p218, %p219
      %p221 = scmp.ne.s32.totalorder %s212, %s213
      %p222 = scmp.eq.s32.totalorder %s34, 0
      %p223 = por %p221, %p222
      %p224 = scmp.ne.s32.totalorder %s212, %s213
      %p225 = scmp.eq.s32.totalorder %s35, 1
      %p226 = por %p224, %p225
      %p228 = scmp.ne.s32.totalorder %s213, %s227
      %p229 = scmp.eq.s32.totalorder %s35, 0
      %p230 = por %p228, %p229
      %s232 = sadd.s32 %s231, 1
      %p235 = scmp.eq.s32.totalorder %s29, 1
      %p236 = scmp.ne.s32.totalorder %s231, %s233
      %p237 = scmp.eq.s32.totalorder %s29, 0
      %p238 = por %p236, %p237
      %p239 = scmp.ne.s32.totalorder %s231, %s233
      %p240 = scmp.eq.s32.totalorder %s34, 1
      %p241 = por %p239, %p240
      %p242 = scmp.ne.s32.totalorder %s233, %s234
      %p243 = scmp.eq.s32.totalorder %s34, 0
      %p244 = por %p242, %p243
      %p245 = scmp.ne.s32.totalorder %s233, %s234
      %p246 = scmp.eq.s32.totalorder %s35, 1
      %p247 = por %p245, %p246
      %p249 = scmp.ne.s32.totalorder %s234, %s248
      %p250 = scmp.eq.s32.totalorder %s35, 0
      %p251 = por %p249, %p250
      %s253 = sadd.s32 %s252, 1
      %p256 = scmp.eq.s32.totalorder %s29, 1
      %p257 = scmp.ne.s32.totalorder %s252, %s254
      %p258 = scmp.eq.s32.totalorder %s29, 0
      %p259 = por %p257, %p258
      %p260 = scmp.ne.s32.totalorder %s252, %s254
      %p261 = scmp.eq.s32.totalorder %s34, 1
      %p262 = por %p260, %p261
      %p263 = scmp.ne.s32.totalorder %s254, %s255
      %p264 = scmp.eq.s32.totalorder %s34, 0
      %p265 = por %p263, %p264
      %p266 = scmp.ne.s32.totalorder %s254, %s255
      %p267 = scmp.eq.s32.totalorder %s35, 1
      %p268 = por %p266, %p267
      %p270 = scmp.ne.s32.totalorder %s255, %s269
      %p271 = scmp.eq.s32.totalorder %s35, 0
      %p272 = por %p270, %p271
      %s274 = sadd.s32 %s273, 1
      %p277 = scmp.eq.s32.totalorder %s29, 1
      %p278 = scmp.ne.s32.totalorder %s273, %s275
      %p279 = scmp.eq.s32.totalorder %s29, 0
      %p280 = por %p278, %p279
      %p281 = scmp.ne.s32.totalorder %s273, %s275
      %p282 = scmp.eq.s32.totalorder %s34, 1
      %p283 = por %p281, %p282
      %p284 = scmp.ne.s32.totalorder %s275, %s276
      %p285 = scmp.eq.s32.totalorder %s34, 0
      %p286 = por %p284, %p285
      %p287 = scmp.ne.s32.totalorder %s275, %s276
      %p288 = scmp.eq.s32.totalorder %s35, 1
      %p289 = por %p287, %p288
      %p291 = scmp.ne.s32.totalorder %s276, %s290
      %p292 = scmp.eq.s32.totalorder %s35, 0
      %p293 = por %p291, %p292
      %s295 = sadd.s32 %s294, 1
      %p298 = scmp.eq.s32.totalorder %s29, 1
      %p299 = scmp.ne.s32.totalorder %s294, %s296
      %p300 = scmp.eq.s32.totalorder %s29, 0
      %p301 = por %p299, %p300
      %p302 = scmp.ne.s32.totalorder %s294, %s296
      %p303 = scmp.eq.s32.totalorder %s34, 1
      %p304 = por %p302, %p303
      %p305 = scmp.ne.s32.totalorder %s296, %s297
      %p306 = scmp.eq.s32.totalorder %s34, 0
      %p307 = por %p305, %p306
      %p308 = scmp.ne.s32.totalorder %s296, %s297
      %p309 = scmp.eq.s32.totalorder %s35, 1
      %p310 = por %p308, %p309
      %p312 = scmp.ne.s32.totalorder %s297, %s311
      %p313 = scmp.eq.s32.totalorder %s35, 0
      %p314 = por %p312, %p313
      %s316 = sadd.s32 %s315, 1
      %p319 = scmp.eq.s32.totalorder %s29, 1
      %p320 = scmp.ne.s32.totalorder %s315, %s317
      %p321 = scmp.eq.s32.totalorder %s29, 0
      %p322 = por %p320, %p321
      %p323 = scmp.ne.s32.totalorder %s315, %s317
      %p324 = scmp.eq.s32.totalorder %s34, 1
      %p325 = por %p323, %p324
      %p326 = scmp.ne.s32.totalorder %s317, %s318
      %p327 = scmp.eq.s32.totalorder %s34, 0
      %p328 = por %p326, %p327
      %p329 = scmp.ne.s32.totalorder %s317, %s318
      %p330 = scmp.eq.s32.totalorder %s35, 1
      %p331 = por %p329, %p330
      %p333 = scmp.ne.s32.totalorder %s318, %s332
      %p334 = scmp.eq.s32.totalorder %s35, 0
      %p335 = por %p333, %p334
      %s336 = ssub.s32 %s29, %s36
      %p337 = scmp.eq.s32.totalorder %s336, 0
      %s339 = sadd.s32 %s338, 1
      %s340 = scalar_select %p337, %s338, %s339
      %p343 = pneg %p337
      %p344 = scmp.eq.s32.totalorder %s29, 1
      %p345 = por %p343, %p344
      %p346 = scmp.ne.s32.totalorder %s338, %s341
      %p347 = scmp.eq.s32.totalorder %s29, 0
      %p348 = por %p346, %p347
      %p349 = scmp.ne.s32.totalorder %s338, %s341
      %p350 = scmp.eq.s32.totalorder %s34, 1
      %p351 = por %p349, %p350
      %p352 = scmp.ne.s32.totalorder %s341, %s342
      %p353 = scmp.eq.s32.totalorder %s34, 0
      %p354 = por %p352, %p353
      %p355 = scmp.ne.s32.totalorder %s341, %s342
      %p356 = scmp.eq.s32.totalorder %s35, 1
      %p357 = por %p355, %p356
      %p359 = scmp.ne.s32.totalorder %s342, %s358
      %p360 = scmp.eq.s32.totalorder %s35, 0
      %p361 = por %p359, %p360
      %p362 = scmp.le.s32.totalorder 1, %s29
      %p363 = scmp.lt.s32.totalorder %s29, 3
      %p364 = pnand %p362, %p363
      %p365 = pneg %p364
      // Predicated region
      $region9: #{tpu_custom_call.1} parent=5 // pred_check
        _
      $region10: #{tpu_custom_call.1} parent=5 // pred_check_branch
        %367 = sbr.rel (%p364) target = $region12
      $region11: #{tpu_custom_call.1} parent=5 // pred_region
        %s368 = ssub.s32 %s29, 1
        // Predicated region
        $region13: #{tpu_custom_call.1} parent=11 // pred_check
          %p369 = pneg %p76
        $region14: #{tpu_custom_call.1} parent=11 // pred_check_branch
          %371 = sbr.rel (%p369) target = $region16
        $region15: #{tpu_custom_call.1} parent=11 // pred_region
          _
        $region16: #{tpu_custom_call.1} parent=11 // pred_fallthru
          _
        // Predicated region
        $region17: #{tpu_custom_call.1} parent=11 // pred_check
          %p372 = pneg %p97
        $region18: #{tpu_custom_call.1} parent=11 // pred_check_branch
          %374 = sbr.rel (%p372) target = $region20
        $region19: #{tpu_custom_call.1} parent=11 // pred_region
          _
        $region20: #{tpu_custom_call.1} parent=11 // pred_fallthru
          _
        // Predicated region
        $region21: #{tpu_custom_call.1} parent=11 // pred_check
          %p375 = pneg %p118
        $region22: #{tpu_custom_call.1} parent=11 // pred_check_branch
          %377 = sbr.rel (%p375) target = $region24
        $region23: #{tpu_custom_call.1} parent=11 // pred_region
          %s379 = ssub.s32 64, 64
          %380 = vsyncadd [#allocation7], %s379
          %s382 = sshll.u32 [#allocation6], 4
          %s383 = int_to_ptr.vmem [resolvable:$true] %s382
          %385 = dma.hbm_to_vmem [thread:$0]  %s3, 64, %s383, [#allocation7]
        $region24: #{tpu_custom_call.1} parent=11 // pred_fallthru
          _
        // Predicated region
        $region25: #{tpu_custom_call.1} parent=11 // pred_check
          %p386 = pneg %p139
        $region26: #{tpu_custom_call.1} parent=11 // pred_check_branch
          %388 = sbr.rel (%p386) target = $region28
        $region27: #{tpu_custom_call.1} parent=11 // pred_region
          %s390 = ssub.s32 64, 64
          %391 = vsyncadd [#allocation7], %s390
          %s393 = sshll.u32 [#allocation8], 4
          %s394 = int_to_ptr.vmem [resolvable:$true] %s393
          %396 = dma.hbm_to_vmem [thread:$0]  %s4, 64, %s394, [#allocation7]
        $region28: #{tpu_custom_call.1} parent=11 // pred_fallthru
          _
        // Predicated region
        $region29: #{tpu_custom_call.1} parent=11 // pred_check
          %p397 = pneg %p160
        $region30: #{tpu_custom_call.1} parent=11 // pred_check_branch
          %399 = sbr.rel (%p397) target = $region32
        $region31: #{tpu_custom_call.1} parent=11 // pred_region
          %s401 = ssub.s32 12288, 12288
          %402 = vsyncadd [#allocation10], %s401
          %s403 = sshll.u32 [#allocation9], 4
          %s404 = int_to_ptr.vmem [resolvable:$true] %s403
          %409 = dma.hbm_to_vmem [thread:$0]  %s5, 12288, %s404, [#allocation10], 128, 128, 8
        $region32: #{tpu_custom_call.1} parent=11 // pred_fallthru
          _
        // Predicated region
        $region33: #{tpu_custom_call.1} parent=11 // pred_check
          %p410 = pneg %p181
        $region34: #{tpu_custom_call.1} parent=11 // pred_check_branch
          %412 = sbr.rel (%p410) target = $region36
        $region35: #{tpu_custom_call.1} parent=11 // pred_region
          _
        $region36: #{tpu_custom_call.1} parent=11 // pred_fallthru
          _
        // Predicated region
        $region37: #{tpu_custom_call.1} parent=11 // pred_check
          %p413 = pneg %p202
        $region38: #{tpu_custom_call.1} parent=11 // pred_check_branch
          %415 = sbr.rel (%p413) target = $region40
        $region39: #{tpu_custom_call.1} parent=11 // pred_region
          %s417 = ssub.s32 12288, 12288
          %418 = vsyncadd [#allocation10], %s417
          %s419 = sshll.u32 [#allocation11], 4
          %s420 = int_to_ptr.vmem [resolvable:$true] %s419
          %425 = dma.hbm_to_vmem [thread:$0]  %s7, 12288, %s420, [#allocation10], 128, 128, 8
        $region40: #{tpu_custom_call.1} parent=11 // pred_fallthru
          _
        // Predicated region
        $region41: #{tpu_custom_call.1} parent=11 // pred_check
          %p426 = pneg %p223
        $region42: #{tpu_custom_call.1} parent=11 // pred_check_branch
          %428 = sbr.rel (%p426) target = $region44
        $region43: #{tpu_custom_call.1} parent=11 // pred_region
          _
        $region44: #{tpu_custom_call.1} parent=11 // pred_fallthru
          _
        // Predicated region
        $region45: #{tpu_custom_call.1} parent=11 // pred_check
          %p429 = pneg %p244
        $region46: #{tpu_custom_call.1} parent=11 // pred_check_branch
          %431 = sbr.rel (%p429) target = $region48
        $region47: #{tpu_custom_call.1} parent=11 // pred_region
          %s433 = ssub.s32 32, 32
          %434 = vsyncadd [#allocation13], %s433
          %s436 = sshll.u32 [#allocation12], 4
          %s437 = int_to_ptr.vmem [resolvable:$true] %s436
          %439 = dma.hbm_to_vmem [thread:$0]  %s9, 32, %s437, [#allocation13]
        $region48: #{tpu_custom_call.1} parent=11 // pred_fallthru
          _
        // Predicated region
        $region49: #{tpu_custom_call.1} parent=11 // pred_check
          %p440 = pneg %p265
        $region50: #{tpu_custom_call.1} parent=11 // pred_check_branch
          %442 = sbr.rel (%p440) target = $region52
        $region51: #{tpu_custom_call.1} parent=11 // pred_region
          _
        $region52: #{tpu_custom_call.1} parent=11 // pred_fallthru
          _
        // Predicated region
        $region53: #{tpu_custom_call.1} parent=11 // pred_check
          %p443 = pneg %p286
        $region54: #{tpu_custom_call.1} parent=11 // pred_check_branch
          %445 = sbr.rel (%p443) target = $region56
        $region55: #{tpu_custom_call.1} parent=11 // pred_region
          _
        $region56: #{tpu_custom_call.1} parent=11 // pred_fallthru
          _
        // Predicated region
        $region57: #{tpu_custom_call.1} parent=11 // pred_check
          %p446 = pneg %p307
        $region58: #{tpu_custom_call.1} parent=11 // pred_check_branch
          %448 = sbr.rel (%p446) target = $region60
        $region59: #{tpu_custom_call.1} parent=11 // pred_region
          _
        $region60: #{tpu_custom_call.1} parent=11 // pred_fallthru
          _
        // Predicated region
        $region61: #{tpu_custom_call.1} parent=11 // pred_check
          %p449 = pneg %p328
        $region62: #{tpu_custom_call.1} parent=11 // pred_check_branch
          %451 = sbr.rel (%p449) target = $region64
        $region63: #{tpu_custom_call.1} parent=11 // pred_region
          _
        $region64: #{tpu_custom_call.1} parent=11 // pred_fallthru
          _
      $region12: #{tpu_custom_call.1} parent=5 // pred_fallthru
        _
      %p452 = scmp.lt.s32.totalorder %s29, 2
      // Predicated region
      $region65: #{tpu_custom_call.1} parent=5 // pred_check
        %p453 = pneg %p452
      $region66: #{tpu_custom_call.1} parent=5 // pred_check_branch
        %455 = sbr.rel (%p453) target = $region68
      $region67: #{tpu_custom_call.1} parent=5 // pred_region
        // Predicated region
        $region69: #{tpu_custom_call.1} parent=67 // pred_check
          %p456 = pneg %p49
        $region70: #{tpu_custom_call.1} parent=67 // pred_check_branch
          %458 = sbr.rel (%p456) target = $region72
        $region71: #{tpu_custom_call.1} parent=67 // pred_region
          %s459 = sand.u32 %s39, 1
          %s460 = scalar_lea.sflag [#allocation4], %s459
          %s461 = sand.u32 %s39, 1
          %s462 = smul.addr %s461, 256
          %s463 = scalar_lea.vmem [#allocation3], %s462
          %s464 = smul.u32 8, %s29
          %s466 = ssub.s32 4096, 4096
          %467 = vsyncadd %s460, %s466
          %s468 = smul.addr %s464, 4
          %s469 = smul.addr %s468, 128
          %s470 = scalar_lea.hbm %s0, %s469
          %s471 = sshll.u32 %s463, 4
          %s472 = int_to_ptr.vmem [resolvable:$true] %s471
          %477 = dma.hbm_to_vmem [thread:$0]  %s470, 4096, %s472, %s460, 256, 256, 16
        $region72: #{tpu_custom_call.1} parent=67 // pred_fallthru
          _
      $region68: #{tpu_custom_call.1} parent=5 // pred_fallthru
        _
      %p478 = scmp.le.s32.totalorder 1, %s29
      %p479 = scmp.lt.s32.totalorder %s29, 3
      %p480 = pnand %p478, %p479
      %p481 = pneg %p480
      // Predicated region
      $region73: #{tpu_custom_call.1} parent=5 // pred_check
        _
      $region74: #{tpu_custom_call.1} parent=5 // pred_check_branch
        %483 = sbr.rel (%p480) target = $region76
      $region75: #{tpu_custom_call.1} parent=5 // pred_region
        %s484 = ssub.s32 %s29, 1
        %s485 = sand.u32 %s42, 1
        %s486 = scalar_lea.sflag [#allocation4], %s485
        %s487 = sand.u32 %s42, 1
        %s488 = smul.addr %s487, 256
        %s489 = scalar_lea.vmem [#allocation3], %s488
        // Predicated region
        $region77: #{tpu_custom_call.1} parent=75 // pred_check
          %p490 = pneg %p55
        $region78: #{tpu_custom_call.1} parent=75 // pred_check_branch
          %492 = sbr.rel (%p490) target = $region80
        $region79: #{tpu_custom_call.1} parent=75 // pred_region
          %493 = dma.done %s486, 4096
        $region80: #{tpu_custom_call.1} parent=75 // pred_fallthru
          _
        // Predicated region
        $region81: #{tpu_custom_call.1} parent=75 // pred_check
          %p494 = pneg %p118
        $region82: #{tpu_custom_call.1} parent=75 // pred_check_branch
          %496 = sbr.rel (%p494) target = $region84
        $region83: #{tpu_custom_call.1} parent=75 // pred_region
          %497 = dma.done [#allocation7], 64
        $region84: #{tpu_custom_call.1} parent=75 // pred_fallthru
          _
        // Predicated region
        $region85: #{tpu_custom_call.1} parent=75 // pred_check
          %p498 = pneg %p139
        $region86: #{tpu_custom_call.1} parent=75 // pred_check_branch
          %500 = sbr.rel (%p498) target = $region88
        $region87: #{tpu_custom_call.1} parent=75 // pred_region
          %501 = dma.done [#allocation7], 64
        $region88: #{tpu_custom_call.1} parent=75 // pred_fallthru
          _
        // Predicated region
        $region89: #{tpu_custom_call.1} parent=75 // pred_check
          %p502 = pneg %p160
        $region90: #{tpu_custom_call.1} parent=75 // pred_check_branch
          %504 = sbr.rel (%p502) target = $region92
        $region91: #{tpu_custom_call.1} parent=75 // pred_region
          %505 = dma.done [#allocation10], 12288
        $region92: #{tpu_custom_call.1} parent=75 // pred_fallthru
          _
        // Predicated region
        $region93: #{tpu_custom_call.1} parent=75 // pred_check
          %p506 = pneg %p202
        $region94: #{tpu_custom_call.1} parent=75 // pred_check_branch
          %508 = sbr.rel (%p506) target = $region96
        $region95: #{tpu_custom_call.1} parent=75 // pred_region
          %509 = dma.done [#allocation10], 12288
        $region96: #{tpu_custom_call.1} parent=75 // pred_fallthru
          _
        // Predicated region
        $region97: #{tpu_custom_call.1} parent=75 // pred_check
          %p510 = pneg %p244
        $region98: #{tpu_custom_call.1} parent=75 // pred_check_branch
          %512 = sbr.rel (%p510) target = $region100
        $region99: #{tpu_custom_call.1} parent=75 // pred_region
          %513 = dma.done [#allocation13], 32
        $region100: #{tpu_custom_call.1} parent=75 // pred_fallthru
          _
        %s514 = sand.u32 %s42, 1
        %s515 = scalar_lea.sflag [#allocation4], %s514
        %s516 = sand.u32 %s42, 1
        %s517 = smul.addr %s516, 256
        %s518 = scalar_lea.vmem [#allocation3], %s517
        %p519 = pneg %p55
        %p520 = pneg %p52
        %p521 = pneg %p76
        %p522 = pneg %p73
        %p523 = pneg %p97
        %p524 = pneg %p94
        %p525 = pneg %p118
        %p526 = pneg %p115
        %p527 = pneg %p139
        %p528 = pneg %p136
        %p529 = pneg %p160
        %p530 = pneg %p157
        %p531 = pneg %p181
        %p532 = pneg %p178
        %p533 = pneg %p202
        %p534 = pneg %p199
        %p535 = pneg %p223
        %p536 = pneg %p220
        %p537 = pneg %p244
        %p538 = pneg %p241
        %p539 = pneg %p265
        %p540 = pneg %p262
        %p541 = pneg %p286
        %p542 = pneg %p283
        %p543 = pneg %p307
        %p544 = pneg %p304
        %p545 = pneg %p328
        %p546 = pneg %p325
        %p547 = pneg %p354
        %p548 = pneg %p351
        %s549 = sand.u32 %s341, 1
        %s550 = scalar_lea.sflag [#allocation5], %s549
        %s551 = sand.u32 %s341, 1
        %s552 = smul.addr %s551, 128
        %s553 = scalar_lea.vmem [#allocation14], %s552
        %s554 = smul.u32 8, %s34
        %s555 = smul.u32 8, %s34
        %v557 = vld [vmem:[%s489] sm:$0xff]
        %v558 = vld [vmem:[%s489 + $0x8] sm:$0xff]
        %v559 = vld [vmem:[%s489 + $0x10] sm:$0xff]
        %v560 = vld [vmem:[%s489 + $0x18] sm:$0xff]
        %v561 = vld [vmem:[%s489 + $0x20] sm:$0xff]
        %v562 = vld [vmem:[%s489 + $0x28] sm:$0xff]
        %v563 = vld [vmem:[%s489 + $0x30] sm:$0xff]
        %v564 = vld [vmem:[%s489 + $0x38] sm:$0xff]
        %v565 = vld [vmem:[%s489 + $0x40] sm:$0xff]
        %v566 = vld [vmem:[%s489 + $0x48] sm:$0xff]
        %v567 = vld [vmem:[%s489 + $0x50] sm:$0xff]
        %v568 = vld [vmem:[%s489 + $0x58] sm:$0xff]
        %v569 = vld [vmem:[%s489 + $0x60] sm:$0xff]
        %v570 = vld [vmem:[%s489 + $0x68] sm:$0xff]
        %v571 = vld [vmem:[%s489 + $0x70] sm:$0xff]
        %v572 = vld [vmem:[%s489 + $0x78] sm:$0xff]
        %v573 = vld [vmem:[%s489 + $0x80] sm:$0xff]
        %v574 = vld [vmem:[%s489 + $0x88] sm:$0xff]
        %v575 = vld [vmem:[%s489 + $0x90] sm:$0xff]
        %v576 = vld [vmem:[%s489 + $0x98] sm:$0xff]
        %v577 = vld [vmem:[%s489 + $0xa0] sm:$0xff]
        %v578 = vld [vmem:[%s489 + $0xa8] sm:$0xff]
        %v579 = vld [vmem:[%s489 + $0xb0] sm:$0xff]
        %v580 = vld [vmem:[%s489 + $0xb8] sm:$0xff]
        %v581 = vld [vmem:[%s489 + $0xc0] sm:$0xff]
        %v582 = vld [vmem:[%s489 + $0xc8] sm:$0xff]
        %v583 = vld [vmem:[%s489 + $0xd0] sm:$0xff]
        %v584 = vld [vmem:[%s489 + $0xd8] sm:$0xff]
        %v585 = vld [vmem:[%s489 + $0xe0] sm:$0xff]
        %v586 = vld [vmem:[%s489 + $0xe8] sm:$0xff]
        %v587 = vld [vmem:[%s489 + $0xf0] sm:$0xff]
        %v588 = vld [vmem:[%s489 + $0xf8] sm:$0xff]
        %v589 = vadd.f32 %v557, %v559
        %v590 = vrot.slane %v589, 4
        %v591 = vadd.f32 %v589, %v590
        %v592 = vrot.slane %v591, 2
        %v593 = vadd.f32 %v591, %v592
        %v594 = vrot.slane %v593, 1
        %v595 = vadd.f32 %v593, %v594
        %v596 = vadd.f32 %v558, %v560
        %v597 = vrot.slane %v596, 4
        %v598 = vadd.f32 %v596, %v597
        %v599 = vrot.slane %v598, 2
        %v600 = vadd.f32 %v598, %v599
        %v601 = vrot.slane %v600, 1
        %v602 = vadd.f32 %v600, %v601
        %v603 = vadd.f32 %v561, %v563
        %v604 = vrot.slane %v603, 4
        %v605 = vadd.f32 %v603, %v604
        %v606 = vrot.slane %v605, 2
        %v607 = vadd.f32 %v605, %v606
        %v608 = vrot.slane %v607, 1
        %v609 = vadd.f32 %v607, %v608
        %v610 = vadd.f32 %v562, %v564
        %v611 = vrot.slane %v610, 4
        %v612 = vadd.f32 %v610, %v611
        %v613 = vrot.slane %v612, 2
        %v614 = vadd.f32 %v612, %v613
        %v615 = vrot.slane %v614, 1
        %v616 = vadd.f32 %v614, %v615
        %v617 = vadd.f32 %v565, %v567
        %v618 = vrot.slane %v617, 4
        %v619 = vadd.f32 %v617, %v618
        %v620 = vrot.slane %v619, 2
        %v621 = vadd.f32 %v619, %v620
        %v622 = vrot.slane %v621, 1
        %v623 = vadd.f32 %v621, %v622
        %v624 = vadd.f32 %v566, %v568
        %v625 = vrot.slane %v624, 4
        %v626 = vadd.f32 %v624, %v625
        %v627 = vrot.slane %v626, 2
        %v628 = vadd.f32 %v626, %v627
        %v629 = vrot.slane %v628, 1
        %v630 = vadd.f32 %v628, %v629
        %v631 = vadd.f32 %v569, %v571
        %v632 = vrot.slane %v631, 4
        %v633 = vadd.f32 %v631, %v632
        %v634 = vrot.slane %v633, 2
        %v635 = vadd.f32 %v633, %v634
        %v636 = vrot.slane %v635, 1
        %v637 = vadd.f32 %v635, %v636
        %v638 = vadd.f32 %v570, %v572
        %v639 = vrot.slane %v638, 4
        %v640 = vadd.f32 %v638, %v639
        %v641 = vrot.slane %v640, 2
        %v642 = vadd.f32 %v640, %v641
        %v643 = vrot.slane %v642, 1
        %v644 = vadd.f32 %v642, %v643
        %v645 = vadd.f32 %v573, %v575
        %v646 = vrot.slane %v645, 4
        %v647 = vadd.f32 %v645, %v646
        %v648 = vrot.slane %v647, 2
        %v649 = vadd.f32 %v647, %v648
        %v650 = vrot.slane %v649, 1
        %v651 = vadd.f32 %v649, %v650
        %v652 = vadd.f32 %v574, %v576
        %v653 = vrot.slane %v652, 4
        %v654 = vadd.f32 %v652, %v653
        %v655 = vrot.slane %v654, 2
        %v656 = vadd.f32 %v654, %v655
        %v657 = vrot.slane %v656, 1
        %v658 = vadd.f32 %v656, %v657
        %v659 = vadd.f32 %v577, %v579
        %v660 = vrot.slane %v659, 4
        %v661 = vadd.f32 %v659, %v660
        %v662 = vrot.slane %v661, 2
        %v663 = vadd.f32 %v661, %v662
        %v664 = vrot.slane %v663, 1
        %v665 = vadd.f32 %v663, %v664
        %v666 = vadd.f32 %v578, %v580
        %v667 = vrot.slane %v666, 4
        %v668 = vadd.f32 %v666, %v667
        %v669 = vrot.slane %v668, 2
        %v670 = vadd.f32 %v668, %v669
        %v671 = vrot.slane %v670, 1
        %v672 = vadd.f32 %v670, %v671
        %v673 = vadd.f32 %v581, %v583
        %v674 = vrot.slane %v673, 4
        %v675 = vadd.f32 %v673, %v674
        %v676 = vrot.slane %v675, 2
        %v677 = vadd.f32 %v675, %v676
        %v678 = vrot.slane %v677, 1
        %v679 = vadd.f32 %v677, %v678
        %v680 = vadd.f32 %v582, %v584
        %v681 = vrot.slane %v680, 4
        %v682 = vadd.f32 %v680, %v681
        %v683 = vrot.slane %v682, 2
        %v684 = vadd.f32 %v682, %v683
        %v685 = vrot.slane %v684, 1
        %v686 = vadd.f32 %v684, %v685
        %v687 = vadd.f32 %v585, %v587
        %v688 = vrot.slane %v687, 4
        %v689 = vadd.f32 %v687, %v688
        %v690 = vrot.slane %v689, 2
        %v691 = vadd.f32 %v689, %v690
        %v692 = vrot.slane %v691, 1
        %v693 = vadd.f32 %v691, %v692
        %v694 = vadd.f32 %v586, %v588
        %v695 = vrot.slane %v694, 4
        %v696 = vadd.f32 %v694, %v695
        %v697 = vrot.slane %v696, 2
        %v698 = vadd.f32 %v696, %v697
        %v699 = vrot.slane %v698, 1
        %v700 = vadd.f32 %v698, %v699
        %v701 = vmul.f32 %v557, %v557
        %v702 = vmul.f32 %v558, %v558
        %v703 = vmul.f32 %v559, %v559
        %v704 = vmul.f32 %v560, %v560
        %v705 = vmul.f32 %v561, %v561
        %v706 = vmul.f32 %v562, %v562
        %v707 = vmul.f32 %v563, %v563
        %v708 = vmul.f32 %v564, %v564
        %v709 = vmul.f32 %v565, %v565
        %v710 = vmul.f32 %v566, %v566
        %v711 = vmul.f32 %v567, %v567
        %v712 = vmul.f32 %v568, %v568
        %v713 = vmul.f32 %v569, %v569
        %v714 = vmul.f32 %v570, %v570
        %v715 = vmul.f32 %v571, %v571
        %v716 = vmul.f32 %v572, %v572
        %v717 = vmul.f32 %v573, %v573
        %v718 = vmul.f32 %v574, %v574
        %v719 = vmul.f32 %v575, %v575
        %v720 = vmul.f32 %v576, %v576
        %v721 = vmul.f32 %v577, %v577
        %v722 = vmul.f32 %v578, %v578
        %v723 = vmul.f32 %v579, %v579
        %v724 = vmul.f32 %v580, %v580
        %v725 = vmul.f32 %v581, %v581
        %v726 = vmul.f32 %v582, %v582
        %v727 = vmul.f32 %v583, %v583
        %v728 = vmul.f32 %v584, %v584
        %v729 = vmul.f32 %v585, %v585
        %v730 = vmul.f32 %v586, %v586
        %v731 = vmul.f32 %v587, %v587
        %v732 = vmul.f32 %v588, %v588
        %v733 = vadd.f32 %v701, %v703
        %v734 = vrot.slane %v733, 4
        %v735 = vadd.f32 %v733, %v734
        %v736 = vrot.slane %v735, 2
        %v737 = vadd.f32 %v735, %v736
        %v738 = vrot.slane %v737, 1
        %v739 = vadd.f32 %v737, %v738
        %v740 = vadd.f32 %v702, %v704
        %v741 = vrot.slane %v740, 4
        %v742 = vadd.f32 %v740, %v741
        %v743 = vrot.slane %v742, 2
        %v744 = vadd.f32 %v742, %v743
        %v745 = vrot.slane %v744, 1
        %v746 = vadd.f32 %v744, %v745
        %v747 = vadd.f32 %v705, %v707
        %v748 = vrot.slane %v747, 4
        %v749 = vadd.f32 %v747, %v748
        %v750 = vrot.slane %v749, 2
        %v751 = vadd.f32 %v749, %v750
        %v752 = vrot.slane %v751, 1
        %v753 = vadd.f32 %v751, %v752
        %v754 = vadd.f32 %v706, %v708
        %v755 = vrot.slane %v754, 4
        %v756 = vadd.f32 %v754, %v755
        %v757 = vrot.slane %v756, 2
        %v758 = vadd.f32 %v756, %v757
        %v759 = vrot.slane %v758, 1
        %v760 = vadd.f32 %v758, %v759
        %v761 = vadd.f32 %v709, %v711
        %v762 = vrot.slane %v761, 4
        %v763 = vadd.f32 %v761, %v762
        %v764 = vrot.slane %v763, 2
        %v765 = vadd.f32 %v763, %v764
        %v766 = vrot.slane %v765, 1
        %v767 = vadd.f32 %v765, %v766
        %v768 = vadd.f32 %v710, %v712
        %v769 = vrot.slane %v768, 4
        %v770 = vadd.f32 %v768, %v769
        %v771 = vrot.slane %v770, 2
        %v772 = vadd.f32 %v770, %v771
        %v773 = vrot.slane %v772, 1
        %v774 = vadd.f32 %v772, %v773
        %v775 = vadd.f32 %v713, %v715
        %v776 = vrot.slane %v775, 4
        %v777 = vadd.f32 %v775, %v776
        %v778 = vrot.slane %v777, 2
        %v779 = vadd.f32 %v777, %v778
        %v780 = vrot.slane %v779, 1
        %v781 = vadd.f32 %v779, %v780
        %v782 = vadd.f32 %v714, %v716
        %v783 = vrot.slane %v782, 4
        %v784 = vadd.f32 %v782, %v783
        %v785 = vrot.slane %v784, 2
        %v786 = vadd.f32 %v784, %v785
        %v787 = vrot.slane %v786, 1
        %v788 = vadd.f32 %v786, %v787
        %v789 = vadd.f32 %v717, %v719
        %v790 = vrot.slane %v789, 4
        %v791 = vadd.f32 %v789, %v790
        %v792 = vrot.slane %v791, 2
        %v793 = vadd.f32 %v791, %v792
        %v794 = vrot.slane %v793, 1
        %v795 = vadd.f32 %v793, %v794
        %v796 = vadd.f32 %v718, %v720
        %v797 = vrot.slane %v796, 4
        %v798 = vadd.f32 %v796, %v797
        %v799 = vrot.slane %v798, 2
        %v800 = vadd.f32 %v798, %v799
        %v801 = vrot.slane %v800, 1
        %v802 = vadd.f32 %v800, %v801
        %v803 = vadd.f32 %v721, %v723
        %v804 = vrot.slane %v803, 4
        %v805 = vadd.f32 %v803, %v804
        %v806 = vrot.slane %v805, 2
        %v807 = vadd.f32 %v805, %v806
        %v808 = vrot.slane %v807, 1
        %v809 = vadd.f32 %v807, %v808
        %v810 = vadd.f32 %v722, %v724
        %v811 = vrot.slane %v810, 4
        %v812 = vadd.f32 %v810, %v811
        %v813 = vrot.slane %v812, 2
        %v814 = vadd.f32 %v812, %v813
        %v815 = vrot.slane %v814, 1
        %v816 = vadd.f32 %v814, %v815
        %v817 = vadd.f32 %v725, %v727
        %v818 = vrot.slane %v817, 4
        %v819 = vadd.f32 %v817, %v818
        %v820 = vrot.slane %v819, 2
        %v821 = vadd.f32 %v819, %v820
        %v822 = vrot.slane %v821, 1
        %v823 = vadd.f32 %v821, %v822
        %v824 = vadd.f32 %v726, %v728
        %v825 = vrot.slane %v824, 4
        %v826 = vadd.f32 %v824, %v825
        %v827 = vrot.slane %v826, 2
        %v828 = vadd.f32 %v826, %v827
        %v829 = vrot.slane %v828, 1
        %v830 = vadd.f32 %v828, %v829
        %v831 = vadd.f32 %v729, %v731
        %v832 = vrot.slane %v831, 4
        %v833 = vadd.f32 %v831, %v832
        %v834 = vrot.slane %v833, 2
        %v835 = vadd.f32 %v833, %v834
        %v836 = vrot.slane %v835, 1
        %v837 = vadd.f32 %v835, %v836
        %v838 = vadd.f32 %v730, %v732
        %v839 = vrot.slane %v838, 4
        %v840 = vadd.f32 %v838, %v839
        %v841 = vrot.slane %v840, 2
        %v842 = vadd.f32 %v840, %v841
        %v843 = vrot.slane %v842, 1
        %v844 = vadd.f32 %v842, %v843
        %vm861 = vcmask 1041409
        %v862 = vsel %vm861, %v609, %v595
        %vm863 = vcmask 1042434
        %v864 = vsel %vm863, %v623, %v862
        %vm865 = vcmask 1043459
        %v866 = vsel %vm865, %v637, %v864
        %vm867 = vcmask 1044484
        %v868 = vsel %vm867, %v651, %v866
        %vm869 = vcmask 1045509
        %v870 = vsel %vm869, %v665, %v868
        %vm871 = vcmask 1046534
        %v872 = vsel %vm871, %v679, %v870
        %vm873 = vcmask 1047559
        %v874 = vsel %vm873, %v693, %v872
        %v875 = vsel %vm861, %v616, %v602
        %v876 = vsel %vm863, %v630, %v875
        %v877 = vsel %vm865, %v644, %v876
        %v878 = vsel %vm867, %v658, %v877
        %v879 = vsel %vm869, %v672, %v878
        %v880 = vsel %vm871, %v686, %v879
        %v881 = vsel %vm873, %v700, %v880
        %v900 = vsel %vm861, %v753, %v739
        %v901 = vsel %vm863, %v767, %v900
        %v902 = vsel %vm865, %v781, %v901
        %v903 = vsel %vm867, %v795, %v902
        %v904 = vsel %vm869, %v809, %v903
        %v905 = vsel %vm871, %v823, %v904
        %v906 = vsel %vm873, %v837, %v905
        %v907 = vsel %vm861, %v760, %v746
        %v908 = vsel %vm863, %v774, %v907
        %v909 = vsel %vm865, %v788, %v908
        %v910 = vsel %vm867, %v802, %v909
        %v911 = vsel %vm869, %v816, %v910
        %v912 = vsel %vm871, %v830, %v911
        %v913 = vsel %vm873, %v844, %v912
        %v916 = vld [vmem:[%s1] sm:$0xff]
        %v917 = vld [vmem:[%s1 + $0x8] sm:$0xff]
        %v918 = vld [vmem:[%s1 + $0x10] sm:$0xff]
        %v919 = vld [vmem:[%s1 + $0x18] sm:$0xff]
        %v920 = vld [vmem:[%s1 + $0x20] sm:$0xff]
        %v921 = vld [vmem:[%s1 + $0x28] sm:$0xff]
        %v922 = vld [vmem:[%s1 + $0x30] sm:$0xff]
        %v923 = vld [vmem:[%s1 + $0x38] sm:$0xff]
        %v924 = vld [vmem:[%s1 + $0x40] sm:$0xff]
        %v925 = vld [vmem:[%s1 + $0x48] sm:$0xff]
        %v926 = vld [vmem:[%s1 + $0x50] sm:$0xff]
        %v927 = vld [vmem:[%s1 + $0x58] sm:$0xff]
        %v928 = vld [vmem:[%s1 + $0x60] sm:$0xff]
        %v929 = vld [vmem:[%s1 + $0x68] sm:$0xff]
        %v930 = vld [vmem:[%s1 + $0x70] sm:$0xff]
        %v931 = vld [vmem:[%s1 + $0x78] sm:$0xff]
        %v932 = vld [vmem:[%s1 + $0x80] sm:$0xff]
        %v933 = vld [vmem:[%s1 + $0x88] sm:$0xff]
        %v934 = vld [vmem:[%s1 + $0x90] sm:$0xff]
        %v935 = vld [vmem:[%s1 + $0x98] sm:$0xff]
        %v936 = vld [vmem:[%s1 + $0xa0] sm:$0xff]
        %v937 = vld [vmem:[%s1 + $0xa8] sm:$0xff]
        %v938 = vld [vmem:[%s1 + $0xb0] sm:$0xff]
        %v939 = vld [vmem:[%s1 + $0xb8] sm:$0xff]
        %v940 = vld [vmem:[%s1 + $0xc0] sm:$0xff]
        %v941 = vld [vmem:[%s1 + $0xc8] sm:$0xff]
        %v942 = vld [vmem:[%s1 + $0xd0] sm:$0xff]
        %v943 = vld [vmem:[%s1 + $0xd8] sm:$0xff]
        %v944 = vld [vmem:[%s1 + $0xe0] sm:$0xff]
        %v945 = vld [vmem:[%s1 + $0xe8] sm:$0xff]
        %v946 = vld [vmem:[%s1 + $0xf0] sm:$0xff]
        %v947 = vld [vmem:[%s1 + $0xf8] sm:$0xff]
        %948 = vmatprep.subr.mxu0 0.0
        %949 = vmatpush1.msra.mxu0 %v916
        %950 = vmatprep.subr.mxu0 0.0
        %951 = vmatpush1.msra.mxu0 %v917
        %952 = vmatprep.subr.mxu0 0.0
        %953 = vmatpush1.msra.mxu0 %v918
        %954 = vmatprep.subr.mxu0 0.0
        %955 = vmatpush1.msra.mxu0 %v919
        %956 = vmatprep.subr.mxu0 0.0
        %957 = vmatpush1.msra.mxu0 %v920
        %958 = vmatprep.subr.mxu0 0.0
        %959 = vmatpush1.msra.mxu0 %v921
        %960 = vmatprep.subr.mxu0 0.0
        %961 = vmatpush1.msra.mxu0 %v922
        %962 = vmatprep.subr.mxu0 0.0
        %963 = vmatpush1.msra.mxu0 %v923
        %964 = vmatprep.subr.mxu0 0.0
        %965 = vmatpush1.msra.mxu0 %v924
        %966 = vmatprep.subr.mxu0 0.0
        %967 = vmatpush1.msra.mxu0 %v925
        %968 = vmatprep.subr.mxu0 0.0
        %969 = vmatpush1.msra.mxu0 %v926
        %970 = vmatprep.subr.mxu0 0.0
        %971 = vmatpush1.msra.mxu0 %v927
        %972 = vmatprep.subr.mxu0 0.0
        %973 = vmatpush1.msra.mxu0 %v928
        %974 = vmatprep.subr.mxu0 0.0
        %975 = vmatpush1.msra.mxu0 %v929
        %976 = vmatprep.subr.mxu0 0.0
        %977 = vmatpush1.msra.mxu0 %v930
        %978 = vmatprep.subr.mxu0 0.0
        %979 = vmatpush1.msra.mxu0 %v931
        %980 = vmatprep.subr.mxu0 0.0
        %981 = vmatpush1.msra.mxu0 %v932
        %982 = vmatprep.subr.mxu0 0.0
        %983 = vmatpush1.msra.mxu0 %v933
        %984 = vmatprep.subr.mxu0 0.0
        %985 = vmatpush1.msra.mxu0 %v934
        %986 = vmatprep.subr.mxu0 0.0
        %987 = vmatpush1.msra.mxu0 %v935
        %988 = vmatprep.subr.mxu0 0.0
        %989 = vmatpush1.msra.mxu0 %v936
        %990 = vmatprep.subr.mxu0 0.0
        %991 = vmatpush1.msra.mxu0 %v937
        %992 = vmatprep.subr.mxu0 0.0
        %993 = vmatpush1.msra.mxu0 %v938
        %994 = vmatprep.subr.mxu0 0.0
        %995 = vmatpush1.msra.mxu0 %v939
        %996 = vmatprep.subr.mxu0 0.0
        %997 = vmatpush1.msra.mxu0 %v940
        %998 = vmatprep.subr.mxu0 0.0
        %999 = vmatpush1.msra.mxu0 %v941
        %1000 = vmatprep.subr.mxu0 0.0
        %1001 = vmatpush1.msra.mxu0 %v942
        %1002 = vmatprep.subr.mxu0 0.0
        %1003 = vmatpush1.msra.mxu0 %v943
        %1004 = vmatprep.subr.mxu0 0.0
        %1005 = vmatpush1.msra.mxu0 %v944
        %1006 = vmatprep.subr.mxu0 0.0
        %1007 = vmatpush1.msra.mxu0 %v945
        %1008 = vmatprep.subr.mxu0 0.0
        %1009 = vmatpush1.msra.mxu0 %v946
        %1010 = vmatprep.subr.mxu0 0.0
        %1011 = vmatpush1.msra.mxu0 %v947
        %1012 = vmatprep.mubr.f32.mxu0 %v881
        %1013 = vmatmul.mubr.f32.gmra.mrb[0].mxu0 %v874
        %v1014 = vpop.f32.mrb[0].mxu0
        %v1015 = vadd.f32 0.0, %v1014
        %v1016 = vpop.f32.mrb[0].mxu0
        %1017 = vmatprep.mubr.f32.mxu0 %v913
        %1018 = vmatmul.mubr.f32.gmra.mrb[0].mxu0 %v906
        %v1019 = vpop.f32.mrb[0].mxu0
        %v1020 = vadd.f32 0.0, %v1019
        %v1021 = vpop.f32.mrb[0].mxu0
        %1022 = vdwg.mxu0
        %v1023 = vmul.f32 %v1015, 0.00390625
        %v1024 = vmul.f32 %v1020, 0.00390625
        %v1025 = vmul.f32 %v1023, %v1023
        %v1026 = vsub.f32 %v1024, %v1025
        %v1027 = vmax.f32 %v1026, 0.0
        %v1028 = vld [vmem:[#allocation6] sm:$0x1]
        %v1029 = vld [vmem:[#allocation6 + $0x1] sm:$0x1]
        %v1030 = vld [vmem:[#allocation6 + $0x2] sm:$0x1]
        %vm1031 = vcmask 130048
        %v1032 = vsel %vm1031, %v1023, 0.0
        %1033 = vadd.xlane.f32.xlu0 %v1032
        %v1034 = vpop.xlane.xlu0 %1033
        %v1035 = vrcp.pop 16.0
        %v1036 = vmul.f32 %v1034, %v1035
        %v1037 = vsub.f32 %v1023, %v1036
        %v1038 = vmul.f32 %v1037, %v1037
        %v1039 = vsel %vm1031, %v1038, 0.0
        %1040 = vadd.xlane.f32.xlu0 %v1039
        %v1041 = vpop.xlane.xlu0 %1040
        %v1042 = vmul.f32 %v1041, 0.06666667
        %v1043 = vadd.f32 %v1042, 1e-05
        %v1044 = vrsqrt.pop %v1043
        %v1045 = vmul.f32 %v1037, %v1044
        %v1046 = vadd.f32 %v1027, 1e-05
        %v1047 = vrsqrt.pop %v1046
        %v1048 = vlaneseq
        %v1049 = vshrl.u32 %v1048, 7
        %v1050 = vsub.s32 0, %v1049
        %v1051 = vrot.slane %v1029, %v1050
        %v1052 = vmul.f32 %v1051, %v1047
        %v1053 = vmul.f32 %v1029, %v1028
        %v1054 = vlaneseq
        %v1055 = vshrl.u32 %v1054, 7
        %v1056 = vsub.s32 0, %v1055
        %v1057 = vrot.slane %v1053, %v1056
        %v1058 = vmul.f32 %v1057, %v1045
        %v1059 = vlaneseq
        %v1060 = vshrl.u32 %v1059, 7
        %v1061 = vsub.s32 0, %v1060
        %v1062 = vrot.slane %v1030, %v1061
        %v1063 = vadd.f32 %v1058, %v1062
        %v1064 = vmul.f32 %v1023, %v1052
        %v1065 = vsub.f32 %v1063, %v1064
        %v1066 = vld [vmem:[%s2] sm:$0xff]
        %v1067 = vld [vmem:[%s2 + $0x8] sm:$0xff]
        %v1068 = vld [vmem:[%s2 + $0x10] sm:$0xff]
        %v1069 = vld [vmem:[%s2 + $0x18] sm:$0xff]
        %v1071 = vsel %vm1031, %v1052, 0
        %v1074 = vsel %vm1031, %v1065, 0
        %1076 = vmatprep.subr.mxu0 %v1067
        %1077 = vmatpush1.msra.mxu0 %v1066
        %1078 = vmatprep.subr.mxu0 %v1069
        %1079 = vmatpush1.msra.mxu0 %v1068
        %1080 = vmatprep.subr.mxu0 0.0
        %1081 = vmatpush1.msra.mxu0 0.0
        %1082 = vmatprep.subr.mxu0 0.0
        %1083 = vmatpush1.msra.mxu0 0.0
        %1084 = vmatprep.subr.mxu0 0.0
        %1085 = vmatpush1.msra.mxu0 0.0
        %1086 = vmatprep.subr.mxu0 0.0
        %1087 = vmatpush1.msra.mxu0 0.0
        %1088 = vmatprep.subr.mxu0 0.0
        %1089 = vmatpush1.msra.mxu0 0.0
        %1090 = vmatprep.subr.mxu0 0.0
        %1091 = vmatpush1.msra.mxu0 0.0
        %1092 = vmatprep.subr.mxu0 0.0
        %1093 = vmatpush1.msra.mxu0 0.0
        %1094 = vmatprep.subr.mxu0 0.0
        %1095 = vmatpush1.msra.mxu0 0.0
        %1096 = vmatprep.subr.mxu0 0.0
        %1097 = vmatpush1.msra.mxu0 0.0
        %1098 = vmatprep.subr.mxu0 0.0
        %1099 = vmatpush1.msra.mxu0 0.0
        %1100 = vmatprep.subr.mxu0 0.0
        %1101 = vmatpush1.msra.mxu0 0.0
        %1102 = vmatprep.subr.mxu0 0.0
        %1103 = vmatpush1.msra.mxu0 0.0
        %1104 = vmatprep.subr.mxu0 0.0
        %1105 = vmatpush1.msra.mxu0 0.0
        %1106 = vmatprep.subr.mxu0 0.0
        %1107 = vmatpush1.msra.mxu0 0.0
        %1108 = vmatprep.subr.mxu0 0.0
        %1109 = vmatpush1.msra.mxu0 0.0
        %1110 = vmatprep.subr.mxu0 0.0
        %1111 = vmatpush1.msra.mxu0 0.0
        %1112 = vmatprep.subr.mxu0 0.0
        %1113 = vmatpush1.msra.mxu0 0.0
        %1114 = vmatprep.subr.mxu0 0.0
        %1115 = vmatpush1.msra.mxu0 0.0
        %1116 = vmatprep.subr.mxu0 0.0
        %1117 = vmatpush1.msra.mxu0 0.0
        %1118 = vmatprep.subr.mxu0 0.0
        %1119 = vmatpush1.msra.mxu0 0.0
        %1120 = vmatprep.subr.mxu0 0.0
        %1121 = vmatpush1.msra.mxu0 0.0
        %1122 = vmatprep.subr.mxu0 0.0
        %1123 = vmatpush1.msra.mxu0 0.0
        %1124 = vmatprep.subr.mxu0 0.0
        %1125 = vmatpush1.msra.mxu0 0.0
        %1126 = vmatprep.subr.mxu0 0.0
        %1127 = vmatpush1.msra.mxu0 0.0
        %1128 = vmatprep.subr.mxu0 0.0
        %1129 = vmatpush1.msra.mxu0 0.0
        %1130 = vmatprep.subr.mxu0 0.0
        %1131 = vmatpush1.msra.mxu0 0.0
        %1132 = vmatprep.subr.mxu0 0.0
        %1133 = vmatpush1.msra.mxu0 0.0
        %1134 = vmatprep.subr.mxu0 0.0
        %1135 = vmatpush1.msra.mxu0 0.0
        %1136 = vmatprep.subr.mxu0 0.0
        %1137 = vmatpush1.msra.mxu0 0.0
        %1138 = vmatprep.subr.mxu0 0.0
        %1139 = vmatpush1.msra.mxu0 0.0
        %1140 = vmatprep.mubr.f32.mxu0 0.0
        %1141 = vmatmul.mubr.f32.gmra.mrb[0].mxu0 %v1071
        %v1142 = vpop.f32.mrb[0].mxu0
        %v1143 = vadd.f32 0.0, %v1142
        %v1144 = vpop.f32.mrb[0].mxu0
        %v1145 = vadd.f32 0.0, %v1144
        %1146 = vmatprep.mubr.f32.mxu0 0.0
        %1147 = vmatmul.mubr.f32.gmra.mrb[0].mxu0 %v1074
        %v1148 = vpop.f32.mrb[0].mxu0
        %v1149 = vadd.f32 0.0, %v1148
        %v1150 = vpop.f32.mrb[0].mxu0
        %v1151 = vadd.f32 0.0, %v1150
        %1152 = vdwg.mxu0
        %v1155 = vcombine.low %v1143, %v1145
        %v1156 = vcombine.high %v1143, %v1145
        %v1158 = vunpack.c.l.s4 1966171168
        %v1159 = vunpack.c.0.s8 %v1158
        %v1160 = vlaneseq
        %v1161 = vshrl.u32 %v1160, 7
        %v1162 = vsub.s32 %v1159, %v1161
        %v1163 = vrot.slane %v1155, %v1162
        %v1165 = vunpack.c.l.s4 1966171168
        %v1166 = vunpack.c.0.s8 %v1165
        %v1167 = vlaneseq
        %v1168 = vshrl.u32 %v1167, 7
        %v1169 = vsub.s32 %v1166, %v1168
        %v1170 = vrot.slane %v1156, %v1169
        %v1171 = vcombine.high %v1163, %v1163
        %v1172 = vcombine.high %v1170, %v1170
        %v1174 = vunpack.c.l.s4 1966171168
        %v1175 = vunpack.c.0.s8 %v1174
        %v1176 = vlaneseq
        %v1177 = vshrl.u32 %v1176, 7
        %v1178 = vsub.s32 %v1175, %v1177
        %v1179 = vrot.slane %v1163, %v1178
        %v1181 = vunpack.c.l.s4 1966171168
        %v1182 = vunpack.c.0.s8 %v1181
        %v1183 = vlaneseq
        %v1184 = vshrl.u32 %v1183, 7
        %v1185 = vsub.s32 %v1182, %v1184
        %v1186 = vrot.slane %v1170, %v1185
        %v1188 = vunpack.c.l.s4 1966171168
        %v1189 = vunpack.c.0.s8 %v1188
        %v1190 = vlaneseq
        %v1191 = vshrl.u32 %v1190, 7
        %v1192 = vsub.s32 %v1189, %v1191
        %v1193 = vrot.slane %v1171, %v1192
        %v1195 = vunpack.c.l.s4 1966171168
        %v1196 = vunpack.c.0.s8 %v1195
        %v1197 = vlaneseq
        %v1198 = vshrl.u32 %v1197, 7
        %v1199 = vsub.s32 %v1196, %v1198
        %v1200 = vrot.slane %v1172, %v1199
        %v1201 = vcombine.high %v1179, %v1179
        %v1202 = vcombine.high %v1186, %v1186
        %v1203 = vcombine.high %v1193, %v1193
        %v1204 = vcombine.high %v1200, %v1200
        %v1205 = vlaneseq
        %v1206 = vshrl.u32 %v1205, 7
        %v1207 = vsub.s32 0, %v1206
        %v1208 = vrot.slane %v1179, %v1207
        %v1209 = vlaneseq
        %v1210 = vshrl.u32 %v1209, 7
        %v1211 = vsub.s32 1, %v1210
        %v1212 = vrot.slane %v1179, %v1211
        %v1213 = vlaneseq
        %v1214 = vshrl.u32 %v1213, 7
        %v1215 = vsub.s32 0, %v1214
        %v1216 = vrot.slane %v1193, %v1215
        %v1217 = vlaneseq
        %v1218 = vshrl.u32 %v1217, 7
        %v1219 = vsub.s32 1, %v1218
        %v1220 = vrot.slane %v1193, %v1219
        %v1221 = vlaneseq
        %v1222 = vshrl.u32 %v1221, 7
        %v1223 = vsub.s32 0, %v1222
        %v1224 = vrot.slane %v1201, %v1223
        %v1225 = vlaneseq
        %v1226 = vshrl.u32 %v1225, 7
        %v1227 = vsub.s32 1, %v1226
        %v1228 = vrot.slane %v1201, %v1227
        %v1229 = vlaneseq
        %v1230 = vshrl.u32 %v1229, 7
        %v1231 = vsub.s32 0, %v1230
        %v1232 = vrot.slane %v1203, %v1231
        %v1233 = vlaneseq
        %v1234 = vshrl.u32 %v1233, 7
        %v1235 = vsub.s32 1, %v1234
        %v1236 = vrot.slane %v1203, %v1235
        %v1237 = vlaneseq
        %v1238 = vshrl.u32 %v1237, 7
        %v1239 = vsub.s32 0, %v1238
        %v1240 = vrot.slane %v1186, %v1239
        %v1241 = vlaneseq
        %v1242 = vshrl.u32 %v1241, 7
        %v1243 = vsub.s32 1, %v1242
        %v1244 = vrot.slane %v1186, %v1243
        %v1245 = vlaneseq
        %v1246 = vshrl.u32 %v1245, 7
        %v1247 = vsub.s32 0, %v1246
        %v1248 = vrot.slane %v1200, %v1247
        %v1249 = vlaneseq
        %v1250 = vshrl.u32 %v1249, 7
        %v1251 = vsub.s32 1, %v1250
        %v1252 = vrot.slane %v1200, %v1251
        %v1253 = vlaneseq
        %v1254 = vshrl.u32 %v1253, 7
        %v1255 = vsub.s32 0, %v1254
        %v1256 = vrot.slane %v1202, %v1255
        %v1257 = vlaneseq
        %v1258 = vshrl.u32 %v1257, 7
        %v1259 = vsub.s32 1, %v1258
        %v1260 = vrot.slane %v1202, %v1259
        %v1261 = vlaneseq
        %v1262 = vshrl.u32 %v1261, 7
        %v1263 = vsub.s32 0, %v1262
        %v1264 = vrot.slane %v1204, %v1263
        %v1265 = vlaneseq
        %v1266 = vshrl.u32 %v1265, 7
        %v1267 = vsub.s32 1, %v1266
        %v1268 = vrot.slane %v1204, %v1267
        %v1285 = vmul.f32 %v557, %v1208
        %v1286 = vmul.f32 %v558, %v1212
        %v1287 = vmul.f32 %v559, %v1208
        %v1288 = vmul.f32 %v560, %v1212
        %v1289 = vmul.f32 %v561, %v1216
        %v1290 = vmul.f32 %v562, %v1220
        %v1291 = vmul.f32 %v563, %v1216
        %v1292 = vmul.f32 %v564, %v1220
        %v1293 = vmul.f32 %v565, %v1224
        %v1294 = vmul.f32 %v566, %v1228
        %v1295 = vmul.f32 %v567, %v1224
        %v1296 = vmul.f32 %v568, %v1228
        %v1297 = vmul.f32 %v569, %v1232
        %v1298 = vmul.f32 %v570, %v1236
        %v1299 = vmul.f32 %v571, %v1232
        %v1300 = vmul.f32 %v572, %v1236
        %v1301 = vmul.f32 %v573, %v1240
        %v1302 = vmul.f32 %v574, %v1244
        %v1303 = vmul.f32 %v575, %v1240
        %v1304 = vmul.f32 %v576, %v1244
        %v1305 = vmul.f32 %v577, %v1248
        %v1306 = vmul.f32 %v578, %v1252
        %v1307 = vmul.f32 %v579, %v1248
        %v1308 = vmul.f32 %v580, %v1252
        %v1309 = vmul.f32 %v581, %v1256
        %v1310 = vmul.f32 %v582, %v1260
        %v1311 = vmul.f32 %v583, %v1256
        %v1312 = vmul.f32 %v584, %v1260
        %v1313 = vmul.f32 %v585, %v1264
        %v1314 = vmul.f32 %v586, %v1268
        %v1315 = vmul.f32 %v587, %v1264
        %v1316 = vmul.f32 %v588, %v1268
        %v1319 = vcombine.low %v1149, %v1151
        %v1320 = vcombine.high %v1149, %v1151
        %v1322 = vunpack.c.l.s4 1966171168
        %v1323 = vunpack.c.0.s8 %v1322
        %v1324 = vlaneseq
        %v1325 = vshrl.u32 %v1324, 7
        %v1326 = vsub.s32 %v1323, %v1325
        %v1327 = vrot.slane %v1319, %v1326
        %v1329 = vunpack.c.l.s4 1966171168
        %v1330 = vunpack.c.0.s8 %v1329
        %v1331 = vlaneseq
        %v1332 = vshrl.u32 %v1331, 7
        %v1333 = vsub.s32 %v1330, %v1332
        %v1334 = vrot.slane %v1320, %v1333
        %v1335 = vcombine.high %v1327, %v1327
        %v1336 = vcombine.high %v1334, %v1334
        %v1338 = vunpack.c.l.s4 1966171168
        %v1339 = vunpack.c.0.s8 %v1338
        %v1340 = vlaneseq
        %v1341 = vshrl.u32 %v1340, 7
        %v1342 = vsub.s32 %v1339, %v1341
        %v1343 = vrot.slane %v1327, %v1342
        %v1345 = vunpack.c.l.s4 1966171168
        %v1346 = vunpack.c.0.s8 %v1345
        %v1347 = vlaneseq
        %v1348 = vshrl.u32 %v1347, 7
        %v1349 = vsub.s32 %v1346, %v1348
        %v1350 = vrot.slane %v1334, %v1349
        %v1352 = vunpack.c.l.s4 1966171168
        %v1353 = vunpack.c.0.s8 %v1352
        %v1354 = vlaneseq
        %v1355 = vshrl.u32 %v1354, 7
        %v1356 = vsub.s32 %v1353, %v1355
        %v1357 = vrot.slane %v1335, %v1356
        %v1359 = vunpack.c.l.s4 1966171168
        %v1360 = vunpack.c.0.s8 %v1359
        %v1361 = vlaneseq
        %v1362 = vshrl.u32 %v1361, 7
        %v1363 = vsub.s32 %v1360, %v1362
        %v1364 = vrot.slane %v1336, %v1363
        %v1365 = vcombine.high %v1343, %v1343
        %v1366 = vcombine.high %v1350, %v1350
        %v1367 = vcombine.high %v1357, %v1357
        %v1368 = vcombine.high %v1364, %v1364
        %v1369 = vlaneseq
        %v1370 = vshrl.u32 %v1369, 7
        %v1371 = vsub.s32 0, %v1370
        %v1372 = vrot.slane %v1343, %v1371
        %v1373 = vlaneseq
        %v1374 = vshrl.u32 %v1373, 7
        %v1375 = vsub.s32 1, %v1374
        %v1376 = vrot.slane %v1343, %v1375
        %v1377 = vlaneseq
        %v1378 = vshrl.u32 %v1377, 7
        %v1379 = vsub.s32 0, %v1378
        %v1380 = vrot.slane %v1357, %v1379
        %v1381 = vlaneseq
        %v1382 = vshrl.u32 %v1381, 7
        %v1383 = vsub.s32 1, %v1382
        %v1384 = vrot.slane %v1357, %v1383
        %v1385 = vlaneseq
        %v1386 = vshrl.u32 %v1385, 7
        %v1387 = vsub.s32 0, %v1386
        %v1388 = vrot.slane %v1365, %v1387
        %v1389 = vlaneseq
        %v1390 = vshrl.u32 %v1389, 7
        %v1391 = vsub.s32 1, %v1390
        %v1392 = vrot.slane %v1365, %v1391
        %v1393 = vlaneseq
        %v1394 = vshrl.u32 %v1393, 7
        %v1395 = vsub.s32 0, %v1394
        %v1396 = vrot.slane %v1367, %v1395
        %v1397 = vlaneseq
        %v1398 = vshrl.u32 %v1397, 7
        %v1399 = vsub.s32 1, %v1398
        %v1400 = vrot.slane %v1367, %v1399
        %v1401 = vlaneseq
        %v1402 = vshrl.u32 %v1401, 7
        %v1403 = vsub.s32 0, %v1402
        %v1404 = vrot.slane %v1350, %v1403
        %v1405 = vlaneseq
        %v1406 = vshrl.u32 %v1405, 7
        %v1407 = vsub.s32 1, %v1406
        %v1408 = vrot.slane %v1350, %v1407
        %v1409 = vlaneseq
        %v1410 = vshrl.u32 %v1409, 7
        %v1411 = vsub.s32 0, %v1410
        %v1412 = vrot.slane %v1364, %v1411
        %v1413 = vlaneseq
        %v1414 = vshrl.u32 %v1413, 7
        %v1415 = vsub.s32 1, %v1414
        %v1416 = vrot.slane %v1364, %v1415
        %v1417 = vlaneseq
        %v1418 = vshrl.u32 %v1417, 7
        %v1419 = vsub.s32 0, %v1418
        %v1420 = vrot.slane %v1366, %v1419
        %v1421 = vlaneseq
        %v1422 = vshrl.u32 %v1421, 7
        %v1423 = vsub.s32 1, %v1422
        %v1424 = vrot.slane %v1366, %v1423
        %v1425 = vlaneseq
        %v1426 = vshrl.u32 %v1425, 7
        %v1427 = vsub.s32 0, %v1426
        %v1428 = vrot.slane %v1368, %v1427
        %v1429 = vlaneseq
        %v1430 = vshrl.u32 %v1429, 7
        %v1431 = vsub.s32 1, %v1430
        %v1432 = vrot.slane %v1368, %v1431
        %v1449 = vadd.f32 %v1285, %v1372
        %v1450 = vadd.f32 %v1286, %v1376
        %v1451 = vadd.f32 %v1287, %v1372
        %v1452 = vadd.f32 %v1288, %v1376
        %v1453 = vadd.f32 %v1289, %v1380
        %v1454 = vadd.f32 %v1290, %v1384
        %v1455 = vadd.f32 %v1291, %v1380
        %v1456 = vadd.f32 %v1292, %v1384
        %v1457 = vadd.f32 %v1293, %v1388
        %v1458 = vadd.f32 %v1294, %v1392
        %v1459 = vadd.f32 %v1295, %v1388
        %v1460 = vadd.f32 %v1296, %v1392
        %v1461 = vadd.f32 %v1297, %v1396
        %v1462 = vadd.f32 %v1298, %v1400
        %v1463 = vadd.f32 %v1299, %v1396
        %v1464 = vadd.f32 %v1300, %v1400
        %v1465 = vadd.f32 %v1301, %v1404
        %v1466 = vadd.f32 %v1302, %v1408
        %v1467 = vadd.f32 %v1303, %v1404
        %v1468 = vadd.f32 %v1304, %v1408
        %v1469 = vadd.f32 %v1305, %v1412
        %v1470 = vadd.f32 %v1306, %v1416
        %v1471 = vadd.f32 %v1307, %v1412
        %v1472 = vadd.f32 %v1308, %v1416
        %v1473 = vadd.f32 %v1309, %v1420
        %v1474 = vadd.f32 %v1310, %v1424
        %v1475 = vadd.f32 %v1311, %v1420
        %v1476 = vadd.f32 %v1312, %v1424
        %v1477 = vadd.f32 %v1313, %v1428
        %v1478 = vadd.f32 %v1314, %v1432
        %v1479 = vadd.f32 %v1315, %v1428
        %v1480 = vadd.f32 %v1316, %v1432
        %v1481 = vmax.f32 %v1449, 0.0
        %v1482 = vmax.f32 %v1450, 0.0
        %v1483 = vmax.f32 %v1451, 0.0
        %v1484 = vmax.f32 %v1452, 0.0
        %v1485 = vmax.f32 %v1453, 0.0
        %v1486 = vmax.f32 %v1454, 0.0
        %v1487 = vmax.f32 %v1455, 0.0
        %v1488 = vmax.f32 %v1456, 0.0
        %v1489 = vmax.f32 %v1457, 0.0
        %v1490 = vmax.f32 %v1458, 0.0
        %v1491 = vmax.f32 %v1459, 0.0
        %v1492 = vmax.f32 %v1460, 0.0
        %v1493 = vmax.f32 %v1461, 0.0
        %v1494 = vmax.f32 %v1462, 0.0
        %v1495 = vmax.f32 %v1463, 0.0
        %v1496 = vmax.f32 %v1464, 0.0
        %v1497 = vmax.f32 %v1465, 0.0
        %v1498 = vmax.f32 %v1466, 0.0
        %v1499 = vmax.f32 %v1467, 0.0
        %v1500 = vmax.f32 %v1468, 0.0
        %v1501 = vmax.f32 %v1469, 0.0
        %v1502 = vmax.f32 %v1470, 0.0
        %v1503 = vmax.f32 %v1471, 0.0
        %v1504 = vmax.f32 %v1472, 0.0
        %v1505 = vmax.f32 %v1473, 0.0
        %v1506 = vmax.f32 %v1474, 0.0
        %v1507 = vmax.f32 %v1475, 0.0
        %v1508 = vmax.f32 %v1476, 0.0
        %v1509 = vmax.f32 %v1477, 0.0
        %v1510 = vmax.f32 %v1478, 0.0
        %v1511 = vmax.f32 %v1479, 0.0
        %v1512 = vmax.f32 %v1480, 0.0
        %v1513 = vpack.c.bf16 %v1483, %v1481
        %v1514 = vpack.c.bf16 %v1484, %v1482
        %v1515 = vpack.c.bf16 %v1487, %v1485
        %v1516 = vpack.c.bf16 %v1488, %v1486
        %v1517 = vpack.c.bf16 %v1491, %v1489
        %v1518 = vpack.c.bf16 %v1492, %v1490
        %v1519 = vpack.c.bf16 %v1495, %v1493
        %v1520 = vpack.c.bf16 %v1496, %v1494
        %v1521 = vpack.c.bf16 %v1499, %v1497
        %v1522 = vpack.c.bf16 %v1500, %v1498
        %v1523 = vpack.c.bf16 %v1503, %v1501
        %v1524 = vpack.c.bf16 %v1504, %v1502
        %v1525 = vpack.c.bf16 %v1507, %v1505
        %v1526 = vpack.c.bf16 %v1508, %v1506
        %v1527 = vpack.c.bf16 %v1511, %v1509
        %v1528 = vpack.c.bf16 %v1512, %v1510
        %vm1529 = vcmask 1040384
        %vm1530 = vsmask.f32 256
        %vm1531 = vmand %vm1529, %vm1530
        %v1532 = vld [vmem:[#allocation2] sm:$0x1]
        %v1533 = vsel %vm1531, 0, %v1532
        %1534 = vst [vmem:[#allocation2] sm:$0x1] %v1533
        %v1535 = vld [vmem:[#allocation2 + $0x8] sm:$0x1]
        %v1536 = vsel %vm1531, 0, %v1535
        %1537 = vst [vmem:[#allocation2 + $0x8] sm:$0x1] %v1536
        %v1539 = vshrl.u32 %v1513, 16
        %v1541 = vrot.slane %v1539, 7
        %v1542 = vshll.u32 %v1513, 16
        %v1544 = vor.u32 %v1541, %v1542
        %v1546 = vshrl.u32 %v1514, 16
        %v1548 = vrot.slane %v1546, 7
        %v1549 = vshll.u32 %v1514, 16
        %v1551 = vor.u32 %v1548, %v1549
        %vm1556 = vcmask 1047552
        %vm1557 = vsmask.f32 7938
        %vm1558 = vmand %vm1556, %vm1557
        %v1559 = vld [vmem:[#allocation2] sm:$0xff]
        %v1560 = vsel %vm1558, %v1544, %v1559
        %1561 = vst [vmem:[#allocation2] sm:$0xff] %v1560
        %v1562 = vld [vmem:[#allocation2 + $0x8] sm:$0xff]
        %v1563 = vsel %vm1558, %v1551, %v1562
        %1564 = vst [vmem:[#allocation2 + $0x8] sm:$0xff] %v1563
        %v1565 = vld [vmem:[#allocation2 + $0x10] sm:$0x1]
        %v1566 = vsel %vm1531, %v1541, %v1565
        %1567 = vst [vmem:[#allocation2 + $0x10] sm:$0x1] %v1566
        %v1568 = vld [vmem:[#allocation2 + $0x18] sm:$0x1]
        %v1569 = vsel %vm1531, %v1548, %v1568
        %1570 = vst [vmem:[#allocation2 + $0x18] sm:$0x1] %v1569
        %vm1571 = vmand %vm1529, %vm1557
        %v1572 = vld [vmem:[#allocation2 + $0x10] sm:$0x1]
        %v1573 = vsel %vm1571, 0, %v1572
        %1574 = vst [vmem:[#allocation2 + $0x10] sm:$0x1] %v1573
        %v1575 = vld [vmem:[#allocation2 + $0x18] sm:$0x1]
        %v1576 = vsel %vm1571, 0, %v1575
        %1577 = vst [vmem:[#allocation2 + $0x18] sm:$0x1] %v1576
        %vm1578 = vcmask 1041409
        %vm1579 = vsmask.f32 1280
        %vm1580 = vmand %vm1578, %vm1579
        %v1581 = vld [vmem:[#allocation2 + $0x10] sm:$0x2]
        %v1582 = vsel %vm1580, 0, %v1581
        %1583 = vst [vmem:[#allocation2 + $0x10] sm:$0x2] %v1582
        %v1584 = vld [vmem:[#allocation2 + $0x18] sm:$0x2]
        %v1585 = vsel %vm1580, 0, %v1584
        %1586 = vst [vmem:[#allocation2 + $0x18] sm:$0x2] %v1585
        %v1588 = vshrl.u32 %v1515, 16
        %v1590 = vrot.slane %v1588, 6
        %v1591 = vshll.u32 %v1515, 16
        %v1593 = vrot.slane %v1591, 7
        %v1594 = vor.u32 %v1590, %v1593
        %v1596 = vshrl.u32 %v1516, 16
        %v1598 = vrot.slane %v1596, 6
        %v1599 = vshll.u32 %v1516, 16
        %v1601 = vrot.slane %v1599, 7
        %v1602 = vor.u32 %v1598, %v1601
        %vm1605 = vcmask 1047553
        %vm1606 = vsmask.f32 7942
        %vm1607 = vmand %vm1605, %vm1606
        %v1608 = vld [vmem:[#allocation2 + $0x10] sm:$0xfe]
        %v1609 = vsel %vm1607, %v1594, %v1608
        %1610 = vst [vmem:[#allocation2 + $0x10] sm:$0xfe] %v1609
        %v1611 = vld [vmem:[#allocation2 + $0x18] sm:$0xfe]
        %v1612 = vsel %vm1607, %v1602, %v1611
        %1613 = vst [vmem:[#allocation2 + $0x18] sm:$0xfe] %v1612
        %vm1614 = vcmask 1041408
        %vm1615 = vmand %vm1614, %vm1579
        %v1616 = vld [vmem:[#allocation2 + $0x20] sm:$0x3]
        %v1617 = vsel %vm1615, %v1594, %v1616
        %1618 = vst [vmem:[#allocation2 + $0x20] sm:$0x3] %v1617
        %v1619 = vld [vmem:[#allocation2 + $0x28] sm:$0x3]
        %v1620 = vsel %vm1615, %v1602, %v1619
        %1621 = vst [vmem:[#allocation2 + $0x28] sm:$0x3] %v1620
        %vm1622 = vmand %vm1578, %vm1606
        %v1623 = vld [vmem:[#allocation2 + $0x20] sm:$0x2]
        %v1624 = vsel %vm1622, 0, %v1623
        %1625 = vst [vmem:[#allocation2 + $0x20] sm:$0x2] %v1624
        %v1626 = vld [vmem:[#allocation2 + $0x28] sm:$0x2]
        %v1627 = vsel %vm1622, 0, %v1626
        %1628 = vst [vmem:[#allocation2 + $0x28] sm:$0x2] %v1627
        %vm1629 = vcmask 1042434
        %vm1630 = vsmask.f32 2304
        %vm1631 = vmand %vm1629, %vm1630
        %v1632 = vld [vmem:[#allocation2 + $0x20] sm:$0x4]
        %v1633 = vsel %vm1631, 0, %v1632
        %1634 = vst [vmem:[#allocation2 + $0x20] sm:$0x4] %v1633
        %v1635 = vld [vmem:[#allocation2 + $0x28] sm:$0x4]
        %v1636 = vsel %vm1631, 0, %v1635
        %1637 = vst [vmem:[#allocation2 + $0x28] sm:$0x4] %v1636
        %v1639 = vshrl.u32 %v1517, 16
        %v1641 = vrot.slane %v1639, 5
        %v1642 = vshll.u32 %v1517, 16
        %v1644 = vrot.slane %v1642, 6
        %v1645 = vor.u32 %v1641, %v1644
        %v1647 = vshrl.u32 %v1518, 16
        %v1649 = vrot.slane %v1647, 5
        %v1650 = vshll.u32 %v1518, 16
        %v1652 = vrot.slane %v1650, 6
        %v1653 = vor.u32 %v1649, %v1652
        %vm1656 = vcmask 1047554
        %vm1657 = vsmask.f32 7946
        %vm1658 = vmand %vm1656, %vm1657
        %v1659 = vld [vmem:[#allocation2 + $0x20] sm:$0xfc]
        %v1660 = vsel %vm1658, %v1645, %v1659
        %1661 = vst [vmem:[#allocation2 + $0x20] sm:$0xfc] %v1660
        %v1662 = vld [vmem:[#allocation2 + $0x28] sm:$0xfc]
        %v1663 = vsel %vm1658, %v1653, %v1662
        %1664 = vst [vmem:[#allocation2 + $0x28] sm:$0xfc] %v1663
        %vm1665 = vcmask 1042432
        %vm1666 = vmand %vm1665, %vm1630
        %v1667 = vld [vmem:[#allocation2 + $0x30] sm:$0x7]
        %v1668 = vsel %vm1666, %v1645, %v1667
        %1669 = vst [vmem:[#allocation2 + $0x30] sm:$0x7] %v1668
        %v1670 = vld [vmem:[#allocation2 + $0x38] sm:$0x7]
        %v1671 = vsel %vm1666, %v1653, %v1670
        %1672 = vst [vmem:[#allocation2 + $0x38] sm:$0x7] %v1671
        %vm1673 = vmand %vm1629, %vm1657
        %v1674 = vld [vmem:[#allocation2 + $0x30] sm:$0x4]
        %v1675 = vsel %vm1673, 0, %v1674
        %1676 = vst [vmem:[#allocation2 + $0x30] sm:$0x4] %v1675
        %v1677 = vld [vmem:[#allocation2 + $0x38] sm:$0x4]
        %v1678 = vsel %vm1673, 0, %v1677
        %1679 = vst [vmem:[#allocation2 + $0x38] sm:$0x4] %v1678
        %vm1680 = vcmask 1043459
        %vm1681 = vsmask.f32 3328
        %vm1682 = vmand %vm1680, %vm1681
        %v1683 = vld [vmem:[#allocation2 + $0x30] sm:$0x8]
        %v1684 = vsel %vm1682, 0, %v1683
        %1685 = vst [vmem:[#allocation2 + $0x30] sm:$0x8] %v1684
        %v1686 = vld [vmem:[#allocation2 + $0x38] sm:$0x8]
        %v1687 = vsel %vm1682, 0, %v1686
        %1688 = vst [vmem:[#allocation2 + $0x38] sm:$0x8] %v1687
        %v1690 = vshrl.u32 %v1519, 16
        %v1692 = vrot.slane %v1690, 4
        %v1693 = vshll.u32 %v1519, 16
        %v1695 = vrot.slane %v1693, 5
        %v1696 = vor.u32 %v1692, %v1695
        %v1698 = vshrl.u32 %v1520, 16
        %v1700 = vrot.slane %v1698, 4
        %v1701 = vshll.u32 %v1520, 16
        %v1703 = vrot.slane %v1701, 5
        %v1704 = vor.u32 %v1700, %v1703
        %vm1707 = vcmask 1047555
        %vm1708 = vsmask.f32 7950
        %vm1709 = vmand %vm1707, %vm1708
        %v1710 = vld [vmem:[#allocation2 + $0x30] sm:$0xf8]
        %v1711 = vsel %vm1709, %v1696, %v1710
        %1712 = vst [vmem:[#allocation2 + $0x30] sm:$0xf8] %v1711
        %v1713 = vld [vmem:[#allocation2 + $0x38] sm:$0xf8]
        %v1714 = vsel %vm1709, %v1704, %v1713
        %1715 = vst [vmem:[#allocation2 + $0x38] sm:$0xf8] %v1714
        %vm1716 = vcmask 1043456
        %vm1717 = vmand %vm1716, %vm1681
        %v1718 = vld [vmem:[#allocation2 + $0x40] sm:$0xf]
        %v1719 = vsel %vm1717, %v1696, %v1718
        %1720 = vst [vmem:[#allocation2 + $0x40] sm:$0xf] %v1719
        %v1721 = vld [vmem:[#allocation2 + $0x48] sm:$0xf]
        %v1722 = vsel %vm1717, %v1704, %v1721
        %1723 = vst [vmem:[#allocation2 + $0x48] sm:$0xf] %v1722
        %vm1724 = vmand %vm1680, %vm1708
        %v1725 = vld [vmem:[#allocation2 + $0x40] sm:$0x8]
        %v1726 = vsel %vm1724, 0, %v1725
        %1727 = vst [vmem:[#allocation2 + $0x40] sm:$0x8] %v1726
        %v1728 = vld [vmem:[#allocation2 + $0x48] sm:$0x8]
        %v1729 = vsel %vm1724, 0, %v1728
        %1730 = vst [vmem:[#allocation2 + $0x48] sm:$0x8] %v1729
        %vm1731 = vcmask 1044484
        %vm1732 = vsmask.f32 4352
        %vm1733 = vmand %vm1731, %vm1732
        %v1734 = vld [vmem:[#allocation2 + $0x40] sm:$0x10]
        %v1735 = vsel %vm1733, 0, %v1734
        %1736 = vst [vmem:[#allocation2 + $0x40] sm:$0x10] %v1735
        %v1737 = vld [vmem:[#allocation2 + $0x48] sm:$0x10]
        %v1738 = vsel %vm1733, 0, %v1737
        %1739 = vst [vmem:[#allocation2 + $0x48] sm:$0x10] %v1738
        %v1741 = vshrl.u32 %v1521, 16
        %v1743 = vrot.slane %v1741, 3
        %v1744 = vshll.u32 %v1521, 16
        %v1746 = vrot.slane %v1744, 4
        %v1747 = vor.u32 %v1743, %v1746
        %v1749 = vshrl.u32 %v1522, 16
        %v1751 = vrot.slane %v1749, 3
        %v1752 = vshll.u32 %v1522, 16
        %v1754 = vrot.slane %v1752, 4
        %v1755 = vor.u32 %v1751, %v1754
        %vm1758 = vcmask 1047556
        %vm1759 = vsmask.f32 7954
        %vm1760 = vmand %vm1758, %vm1759
        %v1761 = vld [vmem:[#allocation2 + $0x40] sm:$0xf0]
        %v1762 = vsel %vm1760, %v1747, %v1761
        %1763 = vst [vmem:[#allocation2 + $0x40] sm:$0xf0] %v1762
        %v1764 = vld [vmem:[#allocation2 + $0x48] sm:$0xf0]
        %v1765 = vsel %vm1760, %v1755, %v1764
        %1766 = vst [vmem:[#allocation2 + $0x48] sm:$0xf0] %v1765
        %vm1767 = vcmask 1044480
        %vm1768 = vmand %vm1767, %vm1732
        %v1769 = vld [vmem:[#allocation2 + $0x50] sm:$0x1f]
        %v1770 = vsel %vm1768, %v1747, %v1769
        %1771 = vst [vmem:[#allocation2 + $0x50] sm:$0x1f] %v1770
        %v1772 = vld [vmem:[#allocation2 + $0x58] sm:$0x1f]
        %v1773 = vsel %vm1768, %v1755, %v1772
        %1774 = vst [vmem:[#allocation2 + $0x58] sm:$0x1f] %v1773
        %vm1775 = vmand %vm1731, %vm1759
        %v1776 = vld [vmem:[#allocation2 + $0x50] sm:$0x10]
        %v1777 = vsel %vm1775, 0, %v1776
        %1778 = vst [vmem:[#allocation2 + $0x50] sm:$0x10] %v1777
        %v1779 = vld [vmem:[#allocation2 + $0x58] sm:$0x10]
        %v1780 = vsel %vm1775, 0, %v1779
        %1781 = vst [vmem:[#allocation2 + $0x58] sm:$0x10] %v1780
        %vm1782 = vcmask 1045509
        %vm1783 = vsmask.f32 5376
        %vm1784 = vmand %vm1782, %vm1783
        %v1785 = vld [vmem:[#allocation2 + $0x50] sm:$0x20]
        %v1786 = vsel %vm1784, 0, %v1785
        %1787 = vst [vmem:[#allocation2 + $0x50] sm:$0x20] %v1786
        %v1788 = vld [vmem:[#allocation2 + $0x58] sm:$0x20]
        %v1789 = vsel %vm1784, 0, %v1788
        %1790 = vst [vmem:[#allocation2 + $0x58] sm:$0x20] %v1789
        %v1792 = vshrl.u32 %v1523, 16
        %v1794 = vrot.slane %v1792, 2
        %v1795 = vshll.u32 %v1523, 16
        %v1797 = vrot.slane %v1795, 3
        %v1798 = vor.u32 %v1794, %v1797
        %v1800 = vshrl.u32 %v1524, 16
        %v1802 = vrot.slane %v1800, 2
        %v1803 = vshll.u32 %v1524, 16
        %v1805 = vrot.slane %v1803, 3
        %v1806 = vor.u32 %v1802, %v1805
        %vm1809 = vcmask 1047557
        %vm1810 = vsmask.f32 7958
        %vm1811 = vmand %vm1809, %vm1810
        %v1812 = vld [vmem:[#allocation2 + $0x50] sm:$0xe0]
        %v1813 = vsel %vm1811, %v1798, %v1812
        %1814 = vst [vmem:[#allocation2 + $0x50] sm:$0xe0] %v1813
        %v1815 = vld [vmem:[#allocation2 + $0x58] sm:$0xe0]
        %v1816 = vsel %vm1811, %v1806, %v1815
        %1817 = vst [vmem:[#allocation2 + $0x58] sm:$0xe0] %v1816
        %vm1818 = vcmask 1045504
        %vm1819 = vmand %vm1818, %vm1783
        %v1820 = vld [vmem:[#allocation2 + $0x60] sm:$0x3f]
        %v1821 = vsel %vm1819, %v1798, %v1820
        %1822 = vst [vmem:[#allocation2 + $0x60] sm:$0x3f] %v1821
        %v1823 = vld [vmem:[#allocation2 + $0x68] sm:$0x3f]
        %v1824 = vsel %vm1819, %v1806, %v1823
        %1825 = vst [vmem:[#allocation2 + $0x68] sm:$0x3f] %v1824
        %vm1826 = vmand %vm1782, %vm1810
        %v1827 = vld [vmem:[#allocation2 + $0x60] sm:$0x20]
        %v1828 = vsel %vm1826, 0, %v1827
        %1829 = vst [vmem:[#allocation2 + $0x60] sm:$0x20] %v1828
        %v1830 = vld [vmem:[#allocation2 + $0x68] sm:$0x20]
        %v1831 = vsel %vm1826, 0, %v1830
        %1832 = vst [vmem:[#allocation2 + $0x68] sm:$0x20] %v1831
        %vm1833 = vcmask 1046534
        %vm1834 = vsmask.f32 6400
        %vm1835 = vmand %vm1833, %vm1834
        %v1836 = vld [vmem:[#allocation2 + $0x60] sm:$0x40]
        %v1837 = vsel %vm1835, 0, %v1836
        %1838 = vst [vmem:[#allocation2 + $0x60] sm:$0x40] %v1837
        %v1839 = vld [vmem:[#allocation2 + $0x68] sm:$0x40]
        %v1840 = vsel %vm1835, 0, %v1839
        %1841 = vst [vmem:[#allocation2 + $0x68] sm:$0x40] %v1840
        %v1843 = vshrl.u32 %v1525, 16
        %v1845 = vrot.slane %v1843, 1
        %v1846 = vshll.u32 %v1525, 16
        %v1848 = vrot.slane %v1846, 2
        %v1849 = vor.u32 %v1845, %v1848
        %v1851 = vshrl.u32 %v1526, 16
        %v1853 = vrot.slane %v1851, 1
        %v1854 = vshll.u32 %v1526, 16
        %v1856 = vrot.slane %v1854, 2
        %v1857 = vor.u32 %v1853, %v1856
        %vm1860 = vcmask 1047558
        %vm1861 = vsmask.f32 7962
        %vm1862 = vmand %vm1860, %vm1861
        %v1863 = vld [vmem:[#allocation2 + $0x60] sm:$0xc0]
        %v1864 = vsel %vm1862, %v1849, %v1863
        %1865 = vst [vmem:[#allocation2 + $0x60] sm:$0xc0] %v1864
        %v1866 = vld [vmem:[#allocation2 + $0x68] sm:$0xc0]
        %v1867 = vsel %vm1862, %v1857, %v1866
        %1868 = vst [vmem:[#allocation2 + $0x68] sm:$0xc0] %v1867
        %vm1869 = vcmask 1046528
        %vm1870 = vmand %vm1869, %vm1834
        %v1871 = vld [vmem:[#allocation2 + $0x70] sm:$0x7f]
        %v1872 = vsel %vm1870, %v1849, %v1871
        %1873 = vst [vmem:[#allocation2 + $0x70] sm:$0x7f] %v1872
        %v1874 = vld [vmem:[#allocation2 + $0x78] sm:$0x7f]
        %v1875 = vsel %vm1870, %v1857, %v1874
        %1876 = vst [vmem:[#allocation2 + $0x78] sm:$0x7f] %v1875
        %vm1877 = vmand %vm1833, %vm1861
        %v1878 = vld [vmem:[#allocation2 + $0x70] sm:$0x40]
        %v1879 = vsel %vm1877, 0, %v1878
        %1880 = vst [vmem:[#allocation2 + $0x70] sm:$0x40] %v1879
        %v1881 = vld [vmem:[#allocation2 + $0x78] sm:$0x40]
        %v1882 = vsel %vm1877, 0, %v1881
        %1883 = vst [vmem:[#allocation2 + $0x78] sm:$0x40] %v1882
        %vm1884 = vcmask 1047559
        %vm1885 = vsmask.f32 7424
        %vm1886 = vmand %vm1884, %vm1885
        %v1887 = vld [vmem:[#allocation2 + $0x70] sm:$0x80]
        %v1888 = vsel %vm1886, 0, %v1887
        %1889 = vst [vmem:[#allocation2 + $0x70] sm:$0x80] %v1888
        %v1890 = vld [vmem:[#allocation2 + $0x78] sm:$0x80]
        %v1891 = vsel %vm1886, 0, %v1890
        %1892 = vst [vmem:[#allocation2 + $0x78] sm:$0x80] %v1891
        %v1894 = vshll.u32 %v1527, 16
        %v1896 = vrot.slane %v1894, 1
        %v1898 = vshll.u32 %v1528, 16
        %v1900 = vrot.slane %v1898, 1
        %v1901 = vshrl.u32 %v1527, 16
        %v1903 = vor.u32 %v1901, %v1896
        %v1904 = vshrl.u32 %v1528, 16
        %v1906 = vor.u32 %v1904, %v1900
        %vm1911 = vsmask.f32 7966
        %vm1912 = vmand %vm1884, %vm1911
        %v1913 = vld [vmem:[#allocation2 + $0x70] sm:$0x80]
        %v1914 = vsel %vm1912, %v1896, %v1913
        %1915 = vst [vmem:[#allocation2 + $0x70] sm:$0x80] %v1914
        %v1916 = vld [vmem:[#allocation2 + $0x78] sm:$0x80]
        %v1917 = vsel %vm1912, %v1900, %v1916
        %1918 = vst [vmem:[#allocation2 + $0x78] sm:$0x80] %v1917
        %vm1919 = vmand %vm1556, %vm1885
        %v1920 = vld [vmem:[#allocation2 + $0x80] sm:$0xff]
        %v1921 = vsel %vm1919, %v1903, %v1920
        %1922 = vst [vmem:[#allocation2 + $0x80] sm:$0xff] %v1921
        %v1923 = vld [vmem:[#allocation2 + $0x88] sm:$0xff]
        %v1924 = vsel %vm1919, %v1906, %v1923
        %1925 = vst [vmem:[#allocation2 + $0x88] sm:$0xff] %v1924
        %v1926 = vld [vmem:[#allocation2 + $0x80] sm:$0x80]
        %v1927 = vsel %vm1912, 0, %v1926
        %1928 = vst [vmem:[#allocation2 + $0x80] sm:$0x80] %v1927
        %v1929 = vld [vmem:[#allocation2 + $0x88] sm:$0x80]
        %v1930 = vsel %vm1912, 0, %v1929
        %1931 = vst [vmem:[#allocation2 + $0x88] sm:$0x80] %v1930
        %v1932 = vld [vmem:[#allocation2] sm:$0xff]
        %v1933 = vld [vmem:[#allocation2 + $0x8] sm:$0xff]
        %v1934 = vld [vmem:[#allocation2 + $0x10] sm:$0xff]
        %v1935 = vld [vmem:[#allocation2 + $0x18] sm:$0xff]
        %v1936 = vld [vmem:[#allocation2 + $0x20] sm:$0xff]
        %v1937 = vld [vmem:[#allocation2 + $0x28] sm:$0xff]
        %v1938 = vld [vmem:[#allocation2 + $0x30] sm:$0xff]
        %v1939 = vld [vmem:[#allocation2 + $0x38] sm:$0xff]
        %v1940 = vld [vmem:[#allocation2 + $0x40] sm:$0xff]
        %v1941 = vld [vmem:[#allocation2 + $0x48] sm:$0xff]
        %v1942 = vld [vmem:[#allocation2 + $0x50] sm:$0xff]
        %v1943 = vld [vmem:[#allocation2 + $0x58] sm:$0xff]
        %v1944 = vld [vmem:[#allocation2 + $0x60] sm:$0xff]
        %v1945 = vld [vmem:[#allocation2 + $0x68] sm:$0xff]
        %v1946 = vld [vmem:[#allocation2 + $0x70] sm:$0xff]
        %v1947 = vld [vmem:[#allocation2 + $0x78] sm:$0xff]
        %v1948 = vld [vmem:[#allocation2 + $0x80] sm:$0x7f]
        %v1949 = vld [vmem:[#allocation2 + $0x88] sm:$0x7f]
        %v1950 = vld [vmem:[#allocation9] sm:$0xff]
        %v1951 = vld [vmem:[#allocation9 + $0x8] sm:$0xff]
        %v1952 = vld [vmem:[#allocation9 + $0x10] sm:$0xff]
        %v1953 = vld [vmem:[#allocation9 + $0x18] sm:$0xff]
        %v1954 = vld [vmem:[#allocation9 + $0x20] sm:$0xff]
        %v1955 = vld [vmem:[#allocation9 + $0x28] sm:$0xff]
        %v1956 = vld [vmem:[#allocation9 + $0x30] sm:$0xff]
        %v1957 = vld [vmem:[#allocation9 + $0x38] sm:$0xff]
        %v1958 = vld [vmem:[#allocation9 + $0x40] sm:$0xff]
        %v1959 = vld [vmem:[#allocation9 + $0x48] sm:$0xff]
        %v1960 = vld [vmem:[#allocation9 + $0x50] sm:$0xff]
        %v1961 = vld [vmem:[#allocation9 + $0x58] sm:$0xff]
        %v1962 = vld [vmem:[#allocation9 + $0x60] sm:$0xff]
        %v1963 = vld [vmem:[#allocation9 + $0x68] sm:$0xff]
        %v1964 = vld [vmem:[#allocation9 + $0x70] sm:$0xff]
        %v1965 = vld [vmem:[#allocation9 + $0x78] sm:$0xff]
        %v1966 = vld [vmem:[#allocation9 + $0x80] sm:$0xff]
        %v1967 = vld [vmem:[#allocation9 + $0x88] sm:$0xff]
        %v1968 = vld [vmem:[#allocation9 + $0x90] sm:$0xff]
        %v1969 = vld [vmem:[#allocation9 + $0x98] sm:$0xff]
        %v1970 = vld [vmem:[#allocation9 + $0xa0] sm:$0xff]
        %v1971 = vld [vmem:[#allocation9 + $0xa8] sm:$0xff]
        %v1972 = vld [vmem:[#allocation9 + $0xb0] sm:$0xff]
        %v1973 = vld [vmem:[#allocation9 + $0xb8] sm:$0xff]
        %v1974 = vld [vmem:[#allocation9 + $0xc0] sm:$0xff]
        %v1975 = vld [vmem:[#allocation9 + $0xc8] sm:$0xff]
        %v1976 = vld [vmem:[#allocation9 + $0xd0] sm:$0xff]
        %v1977 = vld [vmem:[#allocation9 + $0xd8] sm:$0xff]
        %v1978 = vld [vmem:[#allocation9 + $0xe0] sm:$0xff]
        %v1979 = vld [vmem:[#allocation9 + $0xe8] sm:$0xff]
        %v1980 = vld [vmem:[#allocation9 + $0xf0] sm:$0xff]
        %v1981 = vld [vmem:[#allocation9 + $0xf8] sm:$0xff]
        %v1982 = vld [vmem:[#allocation2 + $0x80] sm:$0xff]
        %v1983 = vld [vmem:[#allocation2 + $0x88] sm:$0xff]
        %s1984 = scalar_lea.vmem [#allocation9], 256
        %v1985 = vld [vmem:[%s1984] sm:$0xff]
        %v1986 = vld [vmem:[%s1984 + $0x8] sm:$0xff]
        %v1987 = vld [vmem:[%s1984 + $0x10] sm:$0xff]
        %v1988 = vld [vmem:[%s1984 + $0x18] sm:$0xff]
        %v1989 = vld [vmem:[%s1984 + $0x20] sm:$0xff]
        %v1990 = vld [vmem:[%s1984 + $0x28] sm:$0xff]
        %v1991 = vld [vmem:[%s1984 + $0x30] sm:$0xff]
        %v1992 = vld [vmem:[%s1984 + $0x38] sm:$0xff]
        %v1993 = vld [vmem:[%s1984 + $0x40] sm:$0xff]
        %v1994 = vld [vmem:[%s1984 + $0x48] sm:$0xff]
        %v1995 = vld [vmem:[%s1984 + $0x50] sm:$0xff]
        %v1996 = vld [vmem:[%s1984 + $0x58] sm:$0xff]
        %v1997 = vld [vmem:[%s1984 + $0x60] sm:$0xff]
        %v1998 = vld [vmem:[%s1984 + $0x68] sm:$0xff]
        %v1999 = vld [vmem:[%s1984 + $0x70] sm:$0xff]
        %v2000 = vld [vmem:[%s1984 + $0x78] sm:$0xff]
        %v2001 = vld [vmem:[%s1984 + $0x80] sm:$0xff]
        %v2002 = vld [vmem:[%s1984 + $0x88] sm:$0xff]
        %v2003 = vld [vmem:[%s1984 + $0x90] sm:$0xff]
        %v2004 = vld [vmem:[%s1984 + $0x98] sm:$0xff]
        %v2005 = vld [vmem:[%s1984 + $0xa0] sm:$0xff]
        %v2006 = vld [vmem:[%s1984 + $0xa8] sm:$0xff]
        %v2007 = vld [vmem:[%s1984 + $0xb0] sm:$0xff]
        %v2008 = vld [vmem:[%s1984 + $0xb8] sm:$0xff]
        %v2009 = vld [vmem:[%s1984 + $0xc0] sm:$0xff]
        %v2010 = vld [vmem:[%s1984 + $0xc8] sm:$0xff]
        %v2011 = vld [vmem:[%s1984 + $0xd0] sm:$0xff]
        %v2012 = vld [vmem:[%s1984 + $0xd8] sm:$0xff]
        %v2013 = vld [vmem:[%s1984 + $0xe0] sm:$0xff]
        %v2014 = vld [vmem:[%s1984 + $0xe8] sm:$0xff]
        %v2015 = vld [vmem:[%s1984 + $0xf0] sm:$0xff]
        %v2016 = vld [vmem:[%s1984 + $0xf8] sm:$0xff]
        %v2018 = vshrl.u32 %v1932, 16
        %v2020 = vshll.u32 %v1932, 16
        %v2022 = vrot.slane %v2020, 1
        %v2023 = vor.u32 %v2018, %v2022
        %v2025 = vshll.u32 %v1934, 16
        %v2027 = vrot.slane %v2025, 1
        %v2028 = vsel %vm1885, %v2023, %v2027
        %v2030 = vshrl.u32 %v1933, 16
        %v2032 = vshll.u32 %v1933, 16
        %v2034 = vrot.slane %v2032, 1
        %v2035 = vor.u32 %v2030, %v2034
        %v2037 = vshll.u32 %v1935, 16
        %v2039 = vrot.slane %v2037, 1
        %v2040 = vsel %vm1885, %v2035, %v2039
        %v2041 = vshrl.u32 %v1934, 16
        %v2043 = vor.u32 %v2041, %v2027
        %v2045 = vshll.u32 %v1936, 16
        %v2047 = vrot.slane %v2045, 1
        %v2048 = vsel %vm1885, %v2043, %v2047
        %v2049 = vshrl.u32 %v1935, 16
        %v2051 = vor.u32 %v2049, %v2039
        %v2053 = vshll.u32 %v1937, 16
        %v2055 = vrot.slane %v2053, 1
        %v2056 = vsel %vm1885, %v2051, %v2055
        %v2057 = vshrl.u32 %v1936, 16
        %v2059 = vor.u32 %v2057, %v2047
        %v2061 = vshll.u32 %v1938, 16
        %v2063 = vrot.slane %v2061, 1
        %v2064 = vsel %vm1885, %v2059, %v2063
        %v2065 = vshrl.u32 %v1937, 16
        %v2067 = vor.u32 %v2065, %v2055
        %v2069 = vshll.u32 %v1939, 16
        %v2071 = vrot.slane %v2069, 1
        %v2072 = vsel %vm1885, %v2067, %v2071
        %v2073 = vshrl.u32 %v1938, 16
        %v2075 = vor.u32 %v2073, %v2063
        %v2077 = vshll.u32 %v1940, 16
        %v2079 = vrot.slane %v2077, 1
        %v2080 = vsel %vm1885, %v2075, %v2079
        %v2081 = vshrl.u32 %v1939, 16
        %v2083 = vor.u32 %v2081, %v2071
        %v2085 = vshll.u32 %v1941, 16
        %v2087 = vrot.slane %v2085, 1
        %v2088 = vsel %vm1885, %v2083, %v2087
        %v2089 = vshrl.u32 %v1940, 16
        %v2091 = vor.u32 %v2089, %v2079
        %v2093 = vshll.u32 %v1942, 16
        %v2095 = vrot.slane %v2093, 1
        %v2096 = vsel %vm1885, %v2091, %v2095
        %v2097 = vshrl.u32 %v1941, 16
        %v2099 = vor.u32 %v2097, %v2087
        %v2101 = vshll.u32 %v1943, 16
        %v2103 = vrot.slane %v2101, 1
        %v2104 = vsel %vm1885, %v2099, %v2103
        %v2105 = vshrl.u32 %v1942, 16
        %v2107 = vor.u32 %v2105, %v2095
        %v2109 = vshll.u32 %v1944, 16
        %v2111 = vrot.slane %v2109, 1
        %v2112 = vsel %vm1885, %v2107, %v2111
        %v2113 = vshrl.u32 %v1943, 16
        %v2115 = vor.u32 %v2113, %v2103
        %v2117 = vshll.u32 %v1945, 16
        %v2119 = vrot.slane %v2117, 1
        %v2120 = vsel %vm1885, %v2115, %v2119
        %v2121 = vshrl.u32 %v1944, 16
        %v2123 = vor.u32 %v2121, %v2111
        %v2125 = vshll.u32 %v1946, 16
        %v2127 = vrot.slane %v2125, 1
        %v2128 = vsel %vm1885, %v2123, %v2127
        %v2129 = vshrl.u32 %v1945, 16
        %v2131 = vor.u32 %v2129, %v2119
        %v2133 = vshll.u32 %v1947, 16
        %v2135 = vrot.slane %v2133, 1
        %v2136 = vsel %vm1885, %v2131, %v2135
        %v2137 = vshrl.u32 %v1946, 16
        %v2139 = vor.u32 %v2137, %v2127
        %v2141 = vshll.u32 %v1982, 16
        %v2143 = vrot.slane %v2141, 1
        %v2144 = vsel %vm1885, %v2139, %v2143
        %v2145 = vshrl.u32 %v1947, 16
        %v2147 = vor.u32 %v2145, %v2135
        %v2149 = vshll.u32 %v1983, 16
        %v2151 = vrot.slane %v2149, 1
        %v2152 = vsel %vm1885, %v2147, %v2151
        %v2153 = vshrl.u32 %v1982, 16
        %v2155 = vor.u32 %v2153, %v2143
        %v2156 = vshrl.u32 %v1983, 16
        %v2158 = vor.u32 %v2156, %v2151
        %v2209 = vunpack.c.l.b16 %v1985
        %v2210 = vunpack.c.h.b16 %v1985
        %v2211 = vunpack.c.l.b16 %v1986
        %v2212 = vunpack.c.h.b16 %v1986
        %v2213 = vunpack.c.l.b16 %v1987
        %v2214 = vunpack.c.h.b16 %v1987
        %v2215 = vunpack.c.l.b16 %v1988
        %v2216 = vunpack.c.h.b16 %v1988
        %v2217 = vunpack.c.l.b16 %v1989
        %v2218 = vunpack.c.h.b16 %v1989
        %v2219 = vunpack.c.l.b16 %v1990
        %v2220 = vunpack.c.h.b16 %v1990
        %v2221 = vunpack.c.l.b16 %v1991
        %v2222 = vunpack.c.h.b16 %v1991
        %v2223 = vunpack.c.l.b16 %v1992
        %v2224 = vunpack.c.h.b16 %v1992
        %v2225 = vunpack.c.l.b16 %v1993
        %v2226 = vunpack.c.h.b16 %v1993
        %v2227 = vunpack.c.l.b16 %v1994
        %v2228 = vunpack.c.h.b16 %v1994
        %v2229 = vunpack.c.l.b16 %v1995
        %v2230 = vunpack.c.h.b16 %v1995
        %v2231 = vunpack.c.l.b16 %v1996
        %v2232 = vunpack.c.h.b16 %v1996
        %v2233 = vunpack.c.l.b16 %v1997
        %v2234 = vunpack.c.h.b16 %v1997
        %v2235 = vunpack.c.l.b16 %v1998
        %v2236 = vunpack.c.h.b16 %v1998
        %v2237 = vunpack.c.l.b16 %v1999
        %v2238 = vunpack.c.h.b16 %v1999
        %v2239 = vunpack.c.l.b16 %v2000
        %v2240 = vunpack.c.h.b16 %v2000
        %v2241 = vunpack.c.l.b16 %v2001
        %v2242 = vunpack.c.h.b16 %v2001
        %v2243 = vunpack.c.l.b16 %v2002
        %v2244 = vunpack.c.h.b16 %v2002
        %v2245 = vunpack.c.l.b16 %v2003
        %v2246 = vunpack.c.h.b16 %v2003
        %v2247 = vunpack.c.l.b16 %v2004
        %v2248 = vunpack.c.h.b16 %v2004
        %v2249 = vunpack.c.l.b16 %v2005
        %v2250 = vunpack.c.h.b16 %v2005
        %v2251 = vunpack.c.l.b16 %v2006
        %v2252 = vunpack.c.h.b16 %v2006
        %v2253 = vunpack.c.l.b16 %v2007
        %v2254 = vunpack.c.h.b16 %v2007
        %v2255 = vunpack.c.l.b16 %v2008
        %v2256 = vunpack.c.h.b16 %v2008
        %v2257 = vunpack.c.l.b16 %v2009
        %v2258 = vunpack.c.h.b16 %v2009
        %v2259 = vunpack.c.l.b16 %v2010
        %v2260 = vunpack.c.h.b16 %v2010
        %v2261 = vunpack.c.l.b16 %v2011
        %v2262 = vunpack.c.h.b16 %v2011
        %v2263 = vunpack.c.l.b16 %v2012
        %v2264 = vunpack.c.h.b16 %v2012
        %v2265 = vunpack.c.l.b16 %v2013
        %v2266 = vunpack.c.h.b16 %v2013
        %v2267 = vunpack.c.l.b16 %v2014
        %v2268 = vunpack.c.h.b16 %v2014
        %v2269 = vunpack.c.l.b16 %v2015
        %v2270 = vunpack.c.h.b16 %v2015
        %v2271 = vunpack.c.l.b16 %v2016
        %v2272 = vunpack.c.h.b16 %v2016
        %v2273 = vpack.c.b16 %v2211, %v2209
        %v2274 = vpack.c.b16 %v2212, %v2210
        %v2275 = vpack.c.b16 %v2215, %v2213
        %v2276 = vpack.c.b16 %v2216, %v2214
        %v2277 = vpack.c.b16 %v2219, %v2217
        %v2278 = vpack.c.b16 %v2220, %v2218
        %v2279 = vpack.c.b16 %v2223, %v2221
        %v2280 = vpack.c.b16 %v2224, %v2222
        %v2281 = vpack.c.b16 %v2227, %v2225
        %v2282 = vpack.c.b16 %v2228, %v2226
        %v2283 = vpack.c.b16 %v2231, %v2229
        %v2284 = vpack.c.b16 %v2232, %v2230
        %v2285 = vpack.c.b16 %v2235, %v2233
        %v2286 = vpack.c.b16 %v2236, %v2234
        %v2287 = vpack.c.b16 %v2239, %v2237
        %v2288 = vpack.c.b16 %v2240, %v2238
        %v2289 = vpack.c.b16 %v2243, %v2241
        %v2290 = vpack.c.b16 %v2244, %v2242
        %v2291 = vpack.c.b16 %v2247, %v2245
        %v2292 = vpack.c.b16 %v2248, %v2246
        %v2293 = vpack.c.b16 %v2251, %v2249
        %v2294 = vpack.c.b16 %v2252, %v2250
        %v2295 = vpack.c.b16 %v2255, %v2253
        %v2296 = vpack.c.b16 %v2256, %v2254
        %v2297 = vpack.c.b16 %v2259, %v2257
        %v2298 = vpack.c.b16 %v2260, %v2258
        %v2299 = vpack.c.b16 %v2263, %v2261
        %v2300 = vpack.c.b16 %v2264, %v2262
        %v2301 = vpack.c.b16 %v2267, %v2265
        %v2302 = vpack.c.b16 %v2268, %v2266
        %v2303 = vpack.c.b16 %v2271, %v2269
        %v2304 = vpack.c.b16 %v2272, %v2270
        %2337 = vmatprep.subr.bf16.mxu0 %v2274
        %2338 = vmatpush1.bf16.msra.mxu0 %v2273
        %2339 = vmatprep.subr.bf16.mxu0 %v2276
        %2340 = vmatpush1.bf16.msra.mxu0 %v2275
        %2341 = vmatprep.subr.bf16.mxu0 %v2278
        %2342 = vmatpush1.bf16.msra.mxu0 %v2277
        %2343 = vmatprep.subr.bf16.mxu0 %v2280
        %2344 = vmatpush1.bf16.msra.mxu0 %v2279
        %2345 = vmatprep.subr.bf16.mxu0 %v2282
        %2346 = vmatpush1.bf16.msra.mxu0 %v2281
        %2347 = vmatprep.subr.bf16.mxu0 %v2284
        %2348 = vmatpush1.bf16.msra.mxu0 %v2283
        %2349 = vmatprep.subr.bf16.mxu0 %v2286
        %2350 = vmatpush1.bf16.msra.mxu0 %v2285
        %2351 = vmatprep.subr.bf16.mxu0 %v2288
        %2352 = vmatpush1.bf16.msra.mxu0 %v2287
        %2353 = vmatprep.subr.bf16.mxu0 %v2290
        %2354 = vmatpush1.bf16.msra.mxu0 %v2289
        %2355 = vmatprep.subr.bf16.mxu0 %v2292
        %2356 = vmatpush1.bf16.msra.mxu0 %v2291
        %2357 = vmatprep.subr.bf16.mxu0 %v2294
        %2358 = vmatpush1.bf16.msra.mxu0 %v2293
        %2359 = vmatprep.subr.bf16.mxu0 %v2296
        %2360 = vmatpush1.bf16.msra.mxu0 %v2295
        %2361 = vmatprep.subr.bf16.mxu0 %v2298
        %2362 = vmatpush1.bf16.msra.mxu0 %v2297
        %2363 = vmatprep.subr.bf16.mxu0 %v2300
        %2364 = vmatpush1.bf16.msra.mxu0 %v2299
        %2365 = vmatprep.subr.bf16.mxu0 %v2302
        %2366 = vmatpush1.bf16.msra.mxu0 %v2301
        %2367 = vmatprep.subr.bf16.mxu0 %v2304
        %2368 = vmatpush1.bf16.msra.mxu0 %v2303
        %2369 = vmatprep.mubr.bf16.mxu0 %v2040
        %2370 = vmatmul.mubr.bf16.gmra.mrb[0].mxu0 %v2028
        %v2371 = vpop.f32.mrb[0].mxu0
        %v2372 = vadd.f32 0.0, %v2371
        %v2373 = vpop.f32.mrb[0].mxu0
        %v2374 = vadd.f32 0.0, %v2373
        %v2375 = vpop.f32.mrb[0].mxu0
        %v2376 = vadd.f32 0.0, %v2375
        %v2377 = vpop.f32.mrb[0].mxu0
        %v2378 = vadd.f32 0.0, %v2377
        %2379 = vmatprep.mubr.bf16.mxu0 %v2056
        %2380 = vmatmul.mubr.bf16.gmra.mrb[0].mxu0 %v2048
        %v2381 = vpop.f32.mrb[0].mxu0
        %v2382 = vadd.f32 0.0, %v2381
        %v2383 = vpop.f32.mrb[0].mxu0
        %v2384 = vadd.f32 0.0, %v2383
        %v2385 = vpop.f32.mrb[0].mxu0
        %v2386 = vadd.f32 0.0, %v2385
        %v2387 = vpop.f32.mrb[0].mxu0
        %v2388 = vadd.f32 0.0, %v2387
        %2389 = vmatprep.mubr.bf16.mxu0 %v2072
        %2390 = vmatmul.mubr.bf16.gmra.mrb[0].mxu0 %v2064
        %v2391 = vpop.f32.mrb[0].mxu0
        %v2392 = vadd.f32 0.0, %v2391
        %v2393 = vpop.f32.mrb[0].mxu0
        %v2394 = vadd.f32 0.0, %v2393
        %v2395 = vpop.f32.mrb[0].mxu0
        %v2396 = vadd.f32 0.0, %v2395
        %v2397 = vpop.f32.mrb[0].mxu0
        %v2398 = vadd.f32 0.0, %v2397
        %2399 = vmatprep.mubr.bf16.mxu0 %v2088
        %2400 = vmatmul.mubr.bf16.gmra.mrb[0].mxu0 %v2080
        %v2401 = vpop.f32.mrb[0].mxu0
        %v2402 = vadd.f32 0.0, %v2401
        %v2403 = vpop.f32.mrb[0].mxu0
        %v2404 = vadd.f32 0.0, %v2403
        %v2405 = vpop.f32.mrb[0].mxu0
        %v2406 = vadd.f32 0.0, %v2405
        %v2407 = vpop.f32.mrb[0].mxu0
        %v2408 = vadd.f32 0.0, %v2407
        %2409 = vmatprep.mubr.bf16.mxu0 %v2104
        %2410 = vmatmul.mubr.bf16.gmra.mrb[0].mxu0 %v2096
        %v2411 = vpop.f32.mrb[0].mxu0
        %v2412 = vadd.f32 0.0, %v2411
        %v2413 = vpop.f32.mrb[0].mxu0
        %v2414 = vadd.f32 0.0, %v2413
        %v2415 = vpop.f32.mrb[0].mxu0
        %v2416 = vadd.f32 0.0, %v2415
        %v2417 = vpop.f32.mrb[0].mxu0
        %v2418 = vadd.f32 0.0, %v2417
        %2419 = vmatprep.mubr.bf16.mxu0 %v2120
        %2420 = vmatmul.mubr.bf16.gmra.mrb[0].mxu0 %v2112
        %v2421 = vpop.f32.mrb[0].mxu0
        %v2422 = vadd.f32 0.0, %v2421
        %v2423 = vpop.f32.mrb[0].mxu0
        %v2424 = vadd.f32 0.0, %v2423
        %v2425 = vpop.f32.mrb[0].mxu0
        %v2426 = vadd.f32 0.0, %v2425
        %v2427 = vpop.f32.mrb[0].mxu0
        %v2428 = vadd.f32 0.0, %v2427
        %2429 = vmatprep.mubr.bf16.mxu0 %v2136
        %2430 = vmatmul.mubr.bf16.gmra.mrb[0].mxu0 %v2128
        %v2431 = vpop.f32.mrb[0].mxu0
        %v2432 = vadd.f32 0.0, %v2431
        %v2433 = vpop.f32.mrb[0].mxu0
        %v2434 = vadd.f32 0.0, %v2433
        %v2435 = vpop.f32.mrb[0].mxu0
        %v2436 = vadd.f32 0.0, %v2435
        %v2437 = vpop.f32.mrb[0].mxu0
        %v2438 = vadd.f32 0.0, %v2437
        %2439 = vmatprep.mubr.bf16.mxu0 %v2152
        %2440 = vmatmul.mubr.bf16.gmra.mrb[0].mxu0 %v2144
        %v2441 = vpop.f32.mrb[0].mxu0
        %v2442 = vadd.f32 0.0, %v2441
        %v2443 = vpop.f32.mrb[0].mxu0
        %v2444 = vadd.f32 0.0, %v2443
        %v2445 = vpop.f32.mrb[0].mxu0
        %v2446 = vadd.f32 0.0, %v2445
        %v2447 = vpop.f32.mrb[0].mxu0
        %v2448 = vadd.f32 0.0, %v2447
        %2449 = vmatprep.mubr.bf16.mxu0 %v2158
        %2450 = vmatmul.mubr.bf16.gmra.mrb[0].mxu0 %v2155
        %v2451 = vpop.f32.mrb[0].mxu0
        %v2452 = vadd.f32 0.0, %v2451
        %v2453 = vpop.f32.mrb[0].mxu0
        %v2454 = vadd.f32 0.0, %v2453
        %v2455 = vpop.f32.mrb[0].mxu0
        %v2456 = vadd.f32 0.0, %v2455
        %v2457 = vpop.f32.mrb[0].mxu0
        %v2458 = vadd.f32 0.0, %v2457
        %2459 = vdwg.mxu0
        %v2492 = vunpack.c.l.b16 %v1950
        %v2493 = vunpack.c.h.b16 %v1950
        %v2494 = vunpack.c.l.b16 %v1951
        %v2495 = vunpack.c.h.b16 %v1951
        %v2496 = vunpack.c.l.b16 %v1952
        %v2497 = vunpack.c.h.b16 %v1952
        %v2498 = vunpack.c.l.b16 %v1953
        %v2499 = vunpack.c.h.b16 %v1953
        %v2500 = vunpack.c.l.b16 %v1954
        %v2501 = vunpack.c.h.b16 %v1954
        %v2502 = vunpack.c.l.b16 %v1955
        %v2503 = vunpack.c.h.b16 %v1955
        %v2504 = vunpack.c.l.b16 %v1956
        %v2505 = vunpack.c.h.b16 %v1956
        %v2506 = vunpack.c.l.b16 %v1957
        %v2507 = vunpack.c.h.b16 %v1957
        %v2508 = vunpack.c.l.b16 %v1958
        %v2509 = vunpack.c.h.b16 %v1958
        %v2510 = vunpack.c.l.b16 %v1959
        %v2511 = vunpack.c.h.b16 %v1959
        %v2512 = vunpack.c.l.b16 %v1960
        %v2513 = vunpack.c.h.b16 %v1960
        %v2514 = vunpack.c.l.b16 %v1961
        %v2515 = vunpack.c.h.b16 %v1961
        %v2516 = vunpack.c.l.b16 %v1962
        %v2517 = vunpack.c.h.b16 %v1962
        %v2518 = vunpack.c.l.b16 %v1963
        %v2519 = vunpack.c.h.b16 %v1963
        %v2520 = vunpack.c.l.b16 %v1964
        %v2521 = vunpack.c.h.b16 %v1964
        %v2522 = vunpack.c.l.b16 %v1965
        %v2523 = vunpack.c.h.b16 %v1965
        %v2524 = vunpack.c.l.b16 %v1966
        %v2525 = vunpack.c.h.b16 %v1966
        %v2526 = vunpack.c.l.b16 %v1967
        %v2527 = vunpack.c.h.b16 %v1967
        %v2528 = vunpack.c.l.b16 %v1968
        %v2529 = vunpack.c.h.b16 %v1968
        %v2530 = vunpack.c.l.b16 %v1969
        %v2531 = vunpack.c.h.b16 %v1969
        %v2532 = vunpack.c.l.b16 %v1970
        %v2533 = vunpack.c.h.b16 %v1970
        %v2534 = vunpack.c.l.b16 %v1971
        %v2535 = vunpack.c.h.b16 %v1971
        %v2536 = vunpack.c.l.b16 %v1972
        %v2537 = vunpack.c.h.b16 %v1972
        %v2538 = vunpack.c.l.b16 %v1973
        %v2539 = vunpack.c.h.b16 %v1973
        %v2540 = vunpack.c.l.b16 %v1974
        %v2541 = vunpack.c.h.b16 %v1974
        %v2542 = vunpack.c.l.b16 %v1975
        %v2543 = vunpack.c.h.b16 %v1975
        %v2544 = vunpack.c.l.b16 %v1976
        %v2545 = vunpack.c.h.b16 %v1976
        %v2546 = vunpack.c.l.b16 %v1977
        %v2547 = vunpack.c.h.b16 %v1977
        %v2548 = vunpack.c.l.b16 %v1978
        %v2549 = vunpack.c.h.b16 %v1978
        %v2550 = vunpack.c.l.b16 %v1979
        %v2551 = vunpack.c.h.b16 %v1979
        %v2552 = vunpack.c.l.b16 %v1980
        %v2553 = vunpack.c.h.b16 %v1980
        %v2554 = vunpack.c.l.b16 %v1981
        %v2555 = vunpack.c.h.b16 %v1981
        %v2556 = vpack.c.b16 %v2494, %v2492
        %v2557 = vpack.c.b16 %v2495, %v2493
        %v2558 = vpack.c.b16 %v2498, %v2496
        %v2559 = vpack.c.b16 %v2499, %v2497
        %v2560 = vpack.c.b16 %v2502, %v2500
        %v2561 = vpack.c.b16 %v2503, %v2501
        %v2562 = vpack.c.b16 %v2506, %v2504
        %v2563 = vpack.c.b16 %v2507, %v2505
        %v2564 = vpack.c.b16 %v2510, %v2508
        %v2565 = vpack.c.b16 %v2511, %v2509
        %v2566 = vpack.c.b16 %v2514, %v2512
        %v2567 = vpack.c.b16 %v2515, %v2513
        %v2568 = vpack.c.b16 %v2518, %v2516
        %v2569 = vpack.c.b16 %v2519, %v2517
        %v2570 = vpack.c.b16 %v2522, %v2520
        %v2571 = vpack.c.b16 %v2523, %v2521
        %v2572 = vpack.c.b16 %v2526, %v2524
        %v2573 = vpack.c.b16 %v2527, %v2525
        %v2574 = vpack.c.b16 %v2530, %v2528
        %v2575 = vpack.c.b16 %v2531, %v2529
        %v2576 = vpack.c.b16 %v2534, %v2532
        %v2577 = vpack.c.b16 %v2535, %v2533
        %v2578 = vpack.c.b16 %v2538, %v2536
        %v2579 = vpack.c.b16 %v2539, %v2537
        %v2580 = vpack.c.b16 %v2542, %v2540
        %v2581 = vpack.c.b16 %v2543, %v2541
        %v2582 = vpack.c.b16 %v2546, %v2544
        %v2583 = vpack.c.b16 %v2547, %v2545
        %v2584 = vpack.c.b16 %v2550, %v2548
        %v2585 = vpack.c.b16 %v2551, %v2549
        %v2586 = vpack.c.b16 %v2554, %v2552
        %v2587 = vpack.c.b16 %v2555, %v2553
        %2620 = vmatprep.subr.bf16.mxu0 %v2557
        %2621 = vmatpush1.bf16.msra.mxu0 %v2556
        %2622 = vmatprep.subr.bf16.mxu0 %v2559
        %2623 = vmatpush1.bf16.msra.mxu0 %v2558
        %2624 = vmatprep.subr.bf16.mxu0 %v2561
        %2625 = vmatpush1.bf16.msra.mxu0 %v2560
        %2626 = vmatprep.subr.bf16.mxu0 %v2563
        %2627 = vmatpush1.bf16.msra.mxu0 %v2562
        %2628 = vmatprep.subr.bf16.mxu0 %v2565
        %2629 = vmatpush1.bf16.msra.mxu0 %v2564
        %2630 = vmatprep.subr.bf16.mxu0 %v2567
        %2631 = vmatpush1.bf16.msra.mxu0 %v2566
        %2632 = vmatprep.subr.bf16.mxu0 %v2569
        %2633 = vmatpush1.bf16.msra.mxu0 %v2568
        %2634 = vmatprep.subr.bf16.mxu0 %v2571
        %2635 = vmatpush1.bf16.msra.mxu0 %v2570
        %2636 = vmatprep.subr.bf16.mxu0 %v2573
        %2637 = vmatpush1.bf16.msra.mxu0 %v2572
        %2638 = vmatprep.subr.bf16.mxu0 %v2575
        %2639 = vmatpush1.bf16.msra.mxu0 %v2574
        %2640 = vmatprep.subr.bf16.mxu0 %v2577
        %2641 = vmatpush1.bf16.msra.mxu0 %v2576
        %2642 = vmatprep.subr.bf16.mxu0 %v2579
        %2643 = vmatpush1.bf16.msra.mxu0 %v2578
        %2644 = vmatprep.subr.bf16.mxu0 %v2581
        %2645 = vmatpush1.bf16.msra.mxu0 %v2580
        %2646 = vmatprep.subr.bf16.mxu0 %v2583
        %2647 = vmatpush1.bf16.msra.mxu0 %v2582
        %2648 = vmatprep.subr.bf16.mxu0 %v2585
        %2649 = vmatpush1.bf16.msra.mxu0 %v2584
        %2650 = vmatprep.subr.bf16.mxu0 %v2587
        %2651 = vmatpush1.bf16.msra.mxu0 %v2586
        %2652 = vmatprep.mubr.bf16.mxu0 %v1933
        %2653 = vmatmul.mubr.bf16.gmra.mrb[0].mxu0 %v1932
        %v2654 = vpop.f32.mrb[0].mxu0
        %v2655 = vadd.f32 %v2372, %v2654
        %v2656 = vpop.f32.mrb[0].mxu0
        %v2657 = vadd.f32 %v2374, %v2656
        %v2658 = vpop.f32.mrb[0].mxu0
        %v2659 = vadd.f32 %v2376, %v2658
        %v2660 = vpop.f32.mrb[0].mxu0
        %v2661 = vadd.f32 %v2378, %v2660
        %2662 = vmatprep.mubr.bf16.mxu0 %v1935
        %2663 = vmatmul.mubr.bf16.gmra.mrb[0].mxu0 %v1934
        %v2664 = vpop.f32.mrb[0].mxu0
        %v2665 = vadd.f32 %v2382, %v2664
        %v2666 = vpop.f32.mrb[0].mxu0
        %v2667 = vadd.f32 %v2384, %v2666
        %v2668 = vpop.f32.mrb[0].mxu0
        %v2669 = vadd.f32 %v2386, %v2668
        %v2670 = vpop.f32.mrb[0].mxu0
        %v2671 = vadd.f32 %v2388, %v2670
        %2672 = vmatprep.mubr.bf16.mxu0 %v1937
        %2673 = vmatmul.mubr.bf16.gmra.mrb[0].mxu0 %v1936
        %v2674 = vpop.f32.mrb[0].mxu0
        %v2675 = vadd.f32 %v2392, %v2674
        %v2676 = vpop.f32.mrb[0].mxu0
        %v2677 = vadd.f32 %v2394, %v2676
        %v2678 = vpop.f32.mrb[0].mxu0
        %v2679 = vadd.f32 %v2396, %v2678
        %v2680 = vpop.f32.mrb[0].mxu0
        %v2681 = vadd.f32 %v2398, %v2680
        %2682 = vmatprep.mubr.bf16.mxu0 %v1939
        %2683 = vmatmul.mubr.bf16.gmra.mrb[0].mxu0 %v1938
        %v2684 = vpop.f32.mrb[0].mxu0
        %v2685 = vadd.f32 %v2402, %v2684
        %v2686 = vpop.f32.mrb[0].mxu0
        %v2687 = vadd.f32 %v2404, %v2686
        %v2688 = vpop.f32.mrb[0].mxu0
        %v2689 = vadd.f32 %v2406, %v2688
        %v2690 = vpop.f32.mrb[0].mxu0
        %v2691 = vadd.f32 %v2408, %v2690
        %2692 = vmatprep.mubr.bf16.mxu0 %v1941
        %2693 = vmatmul.mubr.bf16.gmra.mrb[0].mxu0 %v1940
        %v2694 = vpop.f32.mrb[0].mxu0
        %v2695 = vadd.f32 %v2412, %v2694
        %v2696 = vpop.f32.mrb[0].mxu0
        %v2697 = vadd.f32 %v2414, %v2696
        %v2698 = vpop.f32.mrb[0].mxu0
        %v2699 = vadd.f32 %v2416, %v2698
        %v2700 = vpop.f32.mrb[0].mxu0
        %v2701 = vadd.f32 %v2418, %v2700
        %2702 = vmatprep.mubr.bf16.mxu0 %v1943
        %2703 = vmatmul.mubr.bf16.gmra.mrb[0].mxu0 %v1942
        %v2704 = vpop.f32.mrb[0].mxu0
        %v2705 = vadd.f32 %v2422, %v2704
        %v2706 = vpop.f32.mrb[0].mxu0
        %v2707 = vadd.f32 %v2424, %v2706
        %v2708 = vpop.f32.mrb[0].mxu0
        %v2709 = vadd.f32 %v2426, %v2708
        %v2710 = vpop.f32.mrb[0].mxu0
        %v2711 = vadd.f32 %v2428, %v2710
        %2712 = vmatprep.mubr.bf16.mxu0 %v1945
        %2713 = vmatmul.mubr.bf16.gmra.mrb[0].mxu0 %v1944
        %v2714 = vpop.f32.mrb[0].mxu0
        %v2715 = vadd.f32 %v2432, %v2714
        %v2716 = vpop.f32.mrb[0].mxu0
        %v2717 = vadd.f32 %v2434, %v2716
        %v2718 = vpop.f32.mrb[0].mxu0
        %v2719 = vadd.f32 %v2436, %v2718
        %v2720 = vpop.f32.mrb[0].mxu0
        %v2721 = vadd.f32 %v2438, %v2720
        %2722 = vmatprep.mubr.bf16.mxu0 %v1947
        %2723 = vmatmul.mubr.bf16.gmra.mrb[0].mxu0 %v1946
        %v2724 = vpop.f32.mrb[0].mxu0
        %v2725 = vadd.f32 %v2442, %v2724
        %v2726 = vpop.f32.mrb[0].mxu0
        %v2727 = vadd.f32 %v2444, %v2726
        %v2728 = vpop.f32.mrb[0].mxu0
        %v2729 = vadd.f32 %v2446, %v2728
        %v2730 = vpop.f32.mrb[0].mxu0
        %v2731 = vadd.f32 %v2448, %v2730
        %2732 = vmatprep.mubr.bf16.mxu0 %v1949
        %2733 = vmatmul.mubr.bf16.gmra.mrb[0].mxu0 %v1948
        %v2734 = vpop.f32.mrb[0].mxu0
        %v2735 = vadd.f32 %v2452, %v2734
        %v2736 = vpop.f32.mrb[0].mxu0
        %v2737 = vadd.f32 %v2454, %v2736
        %v2738 = vpop.f32.mrb[0].mxu0
        %v2739 = vadd.f32 %v2456, %v2738
        %v2740 = vpop.f32.mrb[0].mxu0
        %v2741 = vadd.f32 %v2458, %v2740
        %2742 = vdwg.mxu0
        %v2743 = vld [vmem:[#allocation2] sm:$0xfe]
        %v2744 = vld [vmem:[#allocation2 + $0x8] sm:$0xfe]
        %s2745 = scalar_lea.vmem [#allocation9], 512
        %v2746 = vld [vmem:[%s2745] sm:$0xff]
        %v2747 = vld [vmem:[%s2745 + $0x8] sm:$0xff]
        %v2748 = vld [vmem:[%s2745 + $0x10] sm:$0xff]
        %v2749 = vld [vmem:[%s2745 + $0x18] sm:$0xff]
        %v2750 = vld [vmem:[%s2745 + $0x20] sm:$0xff]
        %v2751 = vld [vmem:[%s2745 + $0x28] sm:$0xff]
        %v2752 = vld [vmem:[%s2745 + $0x30] sm:$0xff]
        %v2753 = vld [vmem:[%s2745 + $0x38] sm:$0xff]
        %v2754 = vld [vmem:[%s2745 + $0x40] sm:$0xff]
        %v2755 = vld [vmem:[%s2745 + $0x48] sm:$0xff]
        %v2756 = vld [vmem:[%s2745 + $0x50] sm:$0xff]
        %v2757 = vld [vmem:[%s2745 + $0x58] sm:$0xff]
        %v2758 = vld [vmem:[%s2745 + $0x60] sm:$0xff]
        %v2759 = vld [vmem:[%s2745 + $0x68] sm:$0xff]
        %v2760 = vld [vmem:[%s2745 + $0x70] sm:$0xff]
        %v2761 = vld [vmem:[%s2745 + $0x78] sm:$0xff]
        %v2762 = vld [vmem:[%s2745 + $0x80] sm:$0xff]
        %v2763 = vld [vmem:[%s2745 + $0x88] sm:$0xff]
        %v2764 = vld [vmem:[%s2745 + $0x90] sm:$0xff]
        %v2765 = vld [vmem:[%s2745 + $0x98] sm:$0xff]
        %v2766 = vld [vmem:[%s2745 + $0xa0] sm:$0xff]
        %v2767 = vld [vmem:[%s2745 + $0xa8] sm:$0xff]
        %v2768 = vld [vmem:[%s2745 + $0xb0] sm:$0xff]
        %v2769 = vld [vmem:[%s2745 + $0xb8] sm:$0xff]
        %v2770 = vld [vmem:[%s2745 + $0xc0] sm:$0xff]
        %v2771 = vld [vmem:[%s2745 + $0xc8] sm:$0xff]
        %v2772 = vld [vmem:[%s2745 + $0xd0] sm:$0xff]
        %v2773 = vld [vmem:[%s2745 + $0xd8] sm:$0xff]
        %v2774 = vld [vmem:[%s2745 + $0xe0] sm:$0xff]
        %v2775 = vld [vmem:[%s2745 + $0xe8] sm:$0xff]
        %v2776 = vld [vmem:[%s2745 + $0xf0] sm:$0xff]
        %v2777 = vld [vmem:[%s2745 + $0xf8] sm:$0xff]
        %v2796 = vrot.slane %v2743, 1
        %v2797 = vrot.slane %v1934, 1
        %v2798 = vsel %vm1869, %v2796, %v2797
        %v2799 = vrot.slane %v2744, 1
        %v2800 = vrot.slane %v1935, 1
        %v2801 = vsel %vm1869, %v2799, %v2800
        %v2802 = vrot.slane %v1936, 1
        %v2803 = vsel %vm1869, %v2797, %v2802
        %v2804 = vrot.slane %v1937, 1
        %v2805 = vsel %vm1869, %v2800, %v2804
        %v2806 = vrot.slane %v1938, 1
        %v2807 = vsel %vm1869, %v2802, %v2806
        %v2808 = vrot.slane %v1939, 1
        %v2809 = vsel %vm1869, %v2804, %v2808
        %v2810 = vrot.slane %v1940, 1
        %v2811 = vsel %vm1869, %v2806, %v2810
        %v2812 = vrot.slane %v1941, 1
        %v2813 = vsel %vm1869, %v2808, %v2812
        %v2814 = vrot.slane %v1942, 1
        %v2815 = vsel %vm1869, %v2810, %v2814
        %v2816 = vrot.slane %v1943, 1
        %v2817 = vsel %vm1869, %v2812, %v2816
        %v2818 = vrot.slane %v1944, 1
        %v2819 = vsel %vm1869, %v2814, %v2818
        %v2820 = vrot.slane %v1945, 1
        %v2821 = vsel %vm1869, %v2816, %v2820
        %v2822 = vrot.slane %v1946, 1
        %v2823 = vsel %vm1869, %v2818, %v2822
        %v2824 = vrot.slane %v1947, 1
        %v2825 = vsel %vm1869, %v2820, %v2824
        %v2826 = vrot.slane %v1982, 1
        %v2827 = vsel %vm1869, %v2822, %v2826
        %v2828 = vrot.slane %v1983, 1
        %v2829 = vsel %vm1869, %v2824, %v2828
        %v2880 = vunpack.c.l.b16 %v2746
        %v2881 = vunpack.c.h.b16 %v2746
        %v2882 = vunpack.c.l.b16 %v2747
        %v2883 = vunpack.c.h.b16 %v2747
        %v2884 = vunpack.c.l.b16 %v2748
        %v2885 = vunpack.c.h.b16 %v2748
        %v2886 = vunpack.c.l.b16 %v2749
        %v2887 = vunpack.c.h.b16 %v2749
        %v2888 = vunpack.c.l.b16 %v2750
        %v2889 = vunpack.c.h.b16 %v2750
        %v2890 = vunpack.c.l.b16 %v2751
        %v2891 = vunpack.c.h.b16 %v2751
        %v2892 = vunpack.c.l.b16 %v2752
        %v2893 = vunpack.c.h.b16 %v2752
        %v2894 = vunpack.c.l.b16 %v2753
        %v2895 = vunpack.c.h.b16 %v2753
        %v2896 = vunpack.c.l.b16 %v2754
        %v2897 = vunpack.c.h.b16 %v2754
        %v2898 = vunpack.c.l.b16 %v2755
        %v2899 = vunpack.c.h.b16 %v2755
        %v2900 = vunpack.c.l.b16 %v2756
        %v2901 = vunpack.c.h.b16 %v2756
        %v2902 = vunpack.c.l.b16 %v2757
        %v2903 = vunpack.c.h.b16 %v2757
        %v2904 = vunpack.c.l.b16 %v2758
        %v2905 = vunpack.c.h.b16 %v2758
        %v2906 = vunpack.c.l.b16 %v2759
        %v2907 = vunpack.c.h.b16 %v2759
        %v2908 = vunpack.c.l.b16 %v2760
        %v2909 = vunpack.c.h.b16 %v2760
        %v2910 = vunpack.c.l.b16 %v2761
        %v2911 = vunpack.c.h.b16 %v2761
        %v2912 = vunpack.c.l.b16 %v2762
        %v2913 = vunpack.c.h.b16 %v2762
        %v2914 = vunpack.c.l.b16 %v2763
        %v2915 = vunpack.c.h.b16 %v2763
        %v2916 = vunpack.c.l.b16 %v2764
        %v2917 = vunpack.c.h.b16 %v2764
        %v2918 = vunpack.c.l.b16 %v2765
        %v2919 = vunpack.c.h.b16 %v2765
        %v2920 = vunpack.c.l.b16 %v2766
        %v2921 = vunpack.c.h.b16 %v2766
        %v2922 = vunpack.c.l.b16 %v2767
        %v2923 = vunpack.c.h.b16 %v2767
        %v2924 = vunpack.c.l.b16 %v2768
        %v2925 = vunpack.c.h.b16 %v2768
        %v2926 = vunpack.c.l.b16 %v2769
        %v2927 = vunpack.c.h.b16 %v2769
        %v2928 = vunpack.c.l.b16 %v2770
        %v2929 = vunpack.c.h.b16 %v2770
        %v2930 = vunpack.c.l.b16 %v2771
        %v2931 = vunpack.c.h.b16 %v2771
        %v2932 = vunpack.c.l.b16 %v2772
        %v2933 = vunpack.c.h.b16 %v2772
        %v2934 = vunpack.c.l.b16 %v2773
        %v2935 = vunpack.c.h.b16 %v2773
        %v2936 = vunpack.c.l.b16 %v2774
        %v2937 = vunpack.c.h.b16 %v2774
        %v2938 = vunpack.c.l.b16 %v2775
        %v2939 = vunpack.c.h.b16 %v2775
        %v2940 = vunpack.c.l.b16 %v2776
        %v2941 = vunpack.c.h.b16 %v2776
        %v2942 = vunpack.c.l.b16 %v2777
        %v2943 = vunpack.c.h.b16 %v2777
        %v2944 = vpack.c.b16 %v2882, %v2880
        %v2945 = vpack.c.b16 %v2883, %v2881
        %v2946 = vpack.c.b16 %v2886, %v2884
        %v2947 = vpack.c.b16 %v2887, %v2885
        %v2948 = vpack.c.b16 %v2890, %v2888
        %v2949 = vpack.c.b16 %v2891, %v2889
        %v2950 = vpack.c.b16 %v2894, %v2892
        %v2951 = vpack.c.b16 %v2895, %v2893
        %v2952 = vpack.c.b16 %v2898, %v2896
        %v2953 = vpack.c.b16 %v2899, %v2897
        %v2954 = vpack.c.b16 %v2902, %v2900
        %v2955 = vpack.c.b16 %v2903, %v2901
        %v2956 = vpack.c.b16 %v2906, %v2904
        %v2957 = vpack.c.b16 %v2907, %v2905
        %v2958 = vpack.c.b16 %v2910, %v2908
        %v2959 = vpack.c.b16 %v2911, %v2909
        %v2960 = vpack.c.b16 %v2914, %v2912
        %v2961 = vpack.c.b16 %v2915, %v2913
        %v2962 = vpack.c.b16 %v2918, %v2916
        %v2963 = vpack.c.b16 %v2919, %v2917
        %v2964 = vpack.c.b16 %v2922, %v2920
        %v2965 = vpack.c.b16 %v2923, %v2921
        %v2966 = vpack.c.b16 %v2926, %v2924
        %v2967 = vpack.c.b16 %v2927, %v2925
        %v2968 = vpack.c.b16 %v2930, %v2928
        %v2969 = vpack.c.b16 %v2931, %v2929
        %v2970 = vpack.c.b16 %v2934, %v2932
        %v2971 = vpack.c.b16 %v2935, %v2933
        %v2972 = vpack.c.b16 %v2938, %v2936
        %v2973 = vpack.c.b16 %v2939, %v2937
        %v2974 = vpack.c.b16 %v2942, %v2940
        %v2975 = vpack.c.b16 %v2943, %v2941
        %3008 = vmatprep.subr.bf16.mxu0 %v2945
        %3009 = vmatpush1.bf16.msra.mxu0 %v2944
        %3010 = vmatprep.subr.bf16.mxu0 %v2947
        %3011 = vmatpush1.bf16.msra.mxu0 %v2946
        %3012 = vmatprep.subr.bf16.mxu0 %v2949
        %3013 = vmatpush1.bf16.msra.mxu0 %v2948
        %3014 = vmatprep.subr.bf16.mxu0 %v2951
        %3015 = vmatpush1.bf16.msra.mxu0 %v2950
        %3016 = vmatprep.subr.bf16.mxu0 %v2953
        %3017 = vmatpush1.bf16.msra.mxu0 %v2952
        %3018 = vmatprep.subr.bf16.mxu0 %v2955
        %3019 = vmatpush1.bf16.msra.mxu0 %v2954
        %3020 = vmatprep.subr.bf16.mxu0 %v2957
        %3021 = vmatpush1.bf16.msra.mxu0 %v2956
        %3022 = vmatprep.subr.bf16.mxu0 %v2959
        %3023 = vmatpush1.bf16.msra.mxu0 %v2958
        %3024 = vmatprep.subr.bf16.mxu0 %v2961
        %3025 = vmatpush1.bf16.msra.mxu0 %v2960
        %3026 = vmatprep.subr.bf16.mxu0 %v2963
        %3027 = vmatpush1.bf16.msra.mxu0 %v2962
        %3028 = vmatprep.subr.bf16.mxu0 %v2965
        %3029 = vmatpush1.bf16.msra.mxu0 %v2964
        %3030 = vmatprep.subr.bf16.mxu0 %v2967
        %3031 = vmatpush1.bf16.msra.mxu0 %v2966
        %3032 = vmatprep.subr.bf16.mxu0 %v2969
        %3033 = vmatpush1.bf16.msra.mxu0 %v2968
        %3034 = vmatprep.subr.bf16.mxu0 %v2971
        %3035 = vmatpush1.bf16.msra.mxu0 %v2970
        %3036 = vmatprep.subr.bf16.mxu0 %v2973
        %3037 = vmatpush1.bf16.msra.mxu0 %v2972
        %3038 = vmatprep.subr.bf16.mxu0 %v2975
        %3039 = vmatpush1.bf16.msra.mxu0 %v2974
        %3040 = vmatprep.mubr.bf16.mxu0 %v2801
        %3041 = vmatmul.mubr.bf16.gmra.mrb[0].mxu0 %v2798
        %v3042 = vpop.f32.mrb[0].mxu0
        %v3043 = vadd.f32 0.0, %v3042
        %v3044 = vpop.f32.mrb[0].mxu0
        %v3045 = vadd.f32 0.0, %v3044
        %v3046 = vpop.f32.mrb[0].mxu0
        %v3047 = vadd.f32 0.0, %v3046
        %v3048 = vpop.f32.mrb[0].mxu0
        %v3049 = vadd.f32 0.0, %v3048
        %3050 = vmatprep.mubr.bf16.mxu0 %v2805
        %3051 = vmatmul.mubr.bf16.gmra.mrb[0].mxu0 %v2803
        %v3052 = vpop.f32.mrb[0].mxu0
        %v3053 = vadd.f32 0.0, %v3052
        %v3054 = vpop.f32.mrb[0].mxu0
        %v3055 = vadd.f32 0.0, %v3054
        %v3056 = vpop.f32.mrb[0].mxu0
        %v3057 = vadd.f32 0.0, %v3056
        %v3058 = vpop.f32.mrb[0].mxu0
        %v3059 = vadd.f32 0.0, %v3058
        %3060 = vmatprep.mubr.bf16.mxu0 %v2809
        %3061 = vmatmul.mubr.bf16.gmra.mrb[0].mxu0 %v2807
        %v3062 = vpop.f32.mrb[0].mxu0
        %v3063 = vadd.f32 0.0, %v3062
        %v3064 = vpop.f32.mrb[0].mxu0
        %v3065 = vadd.f32 0.0, %v3064
        %v3066 = vpop.f32.mrb[0].mxu0
        %v3067 = vadd.f32 0.0, %v3066
        %v3068 = vpop.f32.mrb[0].mxu0
        %v3069 = vadd.f32 0.0, %v3068
        %3070 = vmatprep.mubr.bf16.mxu0 %v2813
        %3071 = vmatmul.mubr.bf16.gmra.mrb[0].mxu0 %v2811
        %v3072 = vpop.f32.mrb[0].mxu0
        %v3073 = vadd.f32 0.0, %v3072
        %v3074 = vpop.f32.mrb[0].mxu0
        %v3075 = vadd.f32 0.0, %v3074
        %v3076 = vpop.f32.mrb[0].mxu0
        %v3077 = vadd.f32 0.0, %v3076
        %v3078 = vpop.f32.mrb[0].mxu0
        %v3079 = vadd.f32 0.0, %v3078
        %3080 = vmatprep.mubr.bf16.mxu0 %v2817
        %3081 = vmatmul.mubr.bf16.gmra.mrb[0].mxu0 %v2815
        %v3082 = vpop.f32.mrb[0].mxu0
        %v3083 = vadd.f32 0.0, %v3082
        %v3084 = vpop.f32.mrb[0].mxu0
        %v3085 = vadd.f32 0.0, %v3084
        %v3086 = vpop.f32.mrb[0].mxu0
        %v3087 = vadd.f32 0.0, %v3086
        %v3088 = vpop.f32.mrb[0].mxu0
        %v3089 = vadd.f32 0.0, %v3088
        %3090 = vmatprep.mubr.bf16.mxu0 %v2821
        %3091 = vmatmul.mubr.bf16.gmra.mrb[0].mxu0 %v2819
        %v3092 = vpop.f32.mrb[0].mxu0
        %v3093 = vadd.f32 0.0, %v3092
        %v3094 = vpop.f32.mrb[0].mxu0
        %v3095 = vadd.f32 0.0, %v3094
        %v3096 = vpop.f32.mrb[0].mxu0
        %v3097 = vadd.f32 0.0, %v3096
        %v3098 = vpop.f32.mrb[0].mxu0
        %v3099 = vadd.f32 0.0, %v3098
        %3100 = vmatprep.mubr.bf16.mxu0 %v2825
        %3101 = vmatmul.mubr.bf16.gmra.mrb[0].mxu0 %v2823
        %v3102 = vpop.f32.mrb[0].mxu0
        %v3103 = vadd.f32 0.0, %v3102
        %v3104 = vpop.f32.mrb[0].mxu0
        %v3105 = vadd.f32 0.0, %v3104
        %v3106 = vpop.f32.mrb[0].mxu0
        %v3107 = vadd.f32 0.0, %v3106
        %v3108 = vpop.f32.mrb[0].mxu0
        %v3109 = vadd.f32 0.0, %v3108
        %3110 = vmatprep.mubr.bf16.mxu0 %v2829
        %3111 = vmatmul.mubr.bf16.gmra.mrb[0].mxu0 %v2827
        %v3112 = vpop.f32.mrb[0].mxu0
        %v3113 = vadd.f32 0.0, %v3112
        %v3114 = vpop.f32.mrb[0].mxu0
        %v3115 = vadd.f32 0.0, %v3114
        %v3116 = vpop.f32.mrb[0].mxu0
        %v3117 = vadd.f32 0.0, %v3116
        %v3118 = vpop.f32.mrb[0].mxu0
        %v3119 = vadd.f32 0.0, %v3118
        %3120 = vmatprep.mubr.bf16.mxu0 %v2828
        %3121 = vmatmul.mubr.bf16.gmra.mrb[0].mxu0 %v2826
        %v3122 = vpop.f32.mrb[0].mxu0
        %v3123 = vadd.f32 0.0, %v3122
        %v3124 = vpop.f32.mrb[0].mxu0
        %v3125 = vadd.f32 0.0, %v3124
        %v3126 = vpop.f32.mrb[0].mxu0
        %v3127 = vadd.f32 0.0, %v3126
        %v3128 = vpop.f32.mrb[0].mxu0
        %v3129 = vadd.f32 0.0, %v3128
        %3130 = vdwg.mxu0
        %v3131 = vadd.f32 %v2655, %v3043
        %v3132 = vadd.f32 %v2657, %v3045
        %v3133 = vadd.f32 %v2659, %v3047
        %v3134 = vadd.f32 %v2661, %v3049
        %v3135 = vadd.f32 %v2665, %v3053
        %v3136 = vadd.f32 %v2667, %v3055
        %v3137 = vadd.f32 %v2669, %v3057
        %v3138 = vadd.f32 %v2671, %v3059
        %v3139 = vadd.f32 %v2675, %v3063
        %v3140 = vadd.f32 %v2677, %v3065
        %v3141 = vadd.f32 %v2679, %v3067
        %v3142 = vadd.f32 %v2681, %v3069
        %v3143 = vadd.f32 %v2685, %v3073
        %v3144 = vadd.f32 %v2687, %v3075
        %v3145 = vadd.f32 %v2689, %v3077
        %v3146 = vadd.f32 %v2691, %v3079
        %v3147 = vadd.f32 %v2695, %v3083
        %v3148 = vadd.f32 %v2697, %v3085
        %v3149 = vadd.f32 %v2699, %v3087
        %v3150 = vadd.f32 %v2701, %v3089
        %v3151 = vadd.f32 %v2705, %v3093
        %v3152 = vadd.f32 %v2707, %v3095
        %v3153 = vadd.f32 %v2709, %v3097
        %v3154 = vadd.f32 %v2711, %v3099
        %v3155 = vadd.f32 %v2715, %v3103
        %v3156 = vadd.f32 %v2717, %v3105
        %v3157 = vadd.f32 %v2719, %v3107
        %v3158 = vadd.f32 %v2721, %v3109
        %v3159 = vadd.f32 %v2725, %v3113
        %v3160 = vadd.f32 %v2727, %v3115
        %v3161 = vadd.f32 %v2729, %v3117
        %v3162 = vadd.f32 %v2731, %v3119
        %v3163 = vadd.f32 %v2735, %v3123
        %v3164 = vadd.f32 %v2737, %v3125
        %v3165 = vadd.f32 %v2739, %v3127
        %v3166 = vadd.f32 %v2741, %v3129
        %v3167 = vld [vmem:[%s6] sm:$0x3]
        %v3169 = vlaneseq
        %v3170 = vshrl.u32 %v3169, 7
        %v3171 = vsub.s32 0, %v3170
        %v3172 = vrot.slane %v3167, %v3171
        %v3173 = vlaneseq
        %v3174 = vshrl.u32 %v3173, 7
        %v3175 = vsub.s32 1, %v3174
        %v3176 = vrot.slane %v3167, %v3175
        %v3179 = vadd.f32 %v3131, %v3172
        %v3180 = vadd.f32 %v3132, %v3176
        %v3181 = vadd.f32 %v3133, %v3172
        %v3182 = vadd.f32 %v3134, %v3176
        %v3183 = vadd.f32 %v3135, %v3172
        %v3184 = vadd.f32 %v3136, %v3176
        %v3185 = vadd.f32 %v3137, %v3172
        %v3186 = vadd.f32 %v3138, %v3176
        %v3187 = vadd.f32 %v3139, %v3172
        %v3188 = vadd.f32 %v3140, %v3176
        %v3189 = vadd.f32 %v3141, %v3172
        %v3190 = vadd.f32 %v3142, %v3176
        %v3191 = vadd.f32 %v3143, %v3172
        %v3192 = vadd.f32 %v3144, %v3176
        %v3193 = vadd.f32 %v3145, %v3172
        %v3194 = vadd.f32 %v3146, %v3176
        %v3195 = vadd.f32 %v3147, %v3172
        %v3196 = vadd.f32 %v3148, %v3176
        %v3197 = vadd.f32 %v3149, %v3172
        %v3198 = vadd.f32 %v3150, %v3176
        %v3199 = vadd.f32 %v3151, %v3172
        %v3200 = vadd.f32 %v3152, %v3176
        %v3201 = vadd.f32 %v3153, %v3172
        %v3202 = vadd.f32 %v3154, %v3176
        %v3203 = vadd.f32 %v3155, %v3172
        %v3204 = vadd.f32 %v3156, %v3176
        %v3205 = vadd.f32 %v3157, %v3172
        %v3206 = vadd.f32 %v3158, %v3176
        %v3207 = vadd.f32 %v3159, %v3172
        %v3208 = vadd.f32 %v3160, %v3176
        %v3209 = vadd.f32 %v3161, %v3172
        %v3210 = vadd.f32 %v3162, %v3176
        %v3211 = vadd.f32 %v3163, %v3172
        %v3212 = vadd.f32 %v3164, %v3176
        %v3213 = vadd.f32 %v3165, %v3172
        %v3214 = vadd.f32 %v3166, %v3176
        %v3215 = vld [vmem:[%s10] sm:$0xff]
        %v3216 = vld [vmem:[%s10 + $0x8] sm:$0xff]
        %vm3217 = vcmask 113664
        %v3219 = vsel %vm3217, %v3216, 0
        %vm3221 = vcmask 1045504
        %v3223 = vsel %vm3221, %v3213, 0
        %v3226 = vsel %vm3221, %v3214, 0
        %3228 = vmatprep.subr.mxu0 %v3180
        %3229 = vmatpush1.msra.mxu0 %v3179
        %3230 = vmatprep.subr.mxu0 %v3182
        %3231 = vmatpush1.msra.mxu0 %v3181
        %3232 = vmatprep.subr.mxu0 %v3184
        %3233 = vmatpush1.msra.mxu0 %v3183
        %3234 = vmatprep.subr.mxu0 %v3186
        %3235 = vmatpush1.msra.mxu0 %v3185
        %3236 = vmatprep.subr.mxu0 %v3188
        %3237 = vmatpush1.msra.mxu0 %v3187
        %3238 = vmatprep.subr.mxu0 %v3190
        %3239 = vmatpush1.msra.mxu0 %v3189
        %3240 = vmatprep.subr.mxu0 %v3192
        %3241 = vmatpush1.msra.mxu0 %v3191
        %3242 = vmatprep.subr.mxu0 %v3194
        %3243 = vmatpush1.msra.mxu0 %v3193
        %3244 = vmatprep.subr.mxu0 %v3196
        %3245 = vmatpush1.msra.mxu0 %v3195
        %3246 = vmatprep.subr.mxu0 %v3198
        %3247 = vmatpush1.msra.mxu0 %v3197
        %3248 = vmatprep.subr.mxu0 %v3200
        %3249 = vmatpush1.msra.mxu0 %v3199
        %3250 = vmatprep.subr.mxu0 %v3202
        %3251 = vmatpush1.msra.mxu0 %v3201
        %3252 = vmatprep.subr.mxu0 %v3204
        %3253 = vmatpush1.msra.mxu0 %v3203
        %3254 = vmatprep.subr.mxu0 %v3206
        %3255 = vmatpush1.msra.mxu0 %v3205
        %3256 = vmatprep.subr.mxu0 %v3208
        %3257 = vmatpush1.msra.mxu0 %v3207
        %3258 = vmatprep.subr.mxu0 %v3210
        %3259 = vmatpush1.msra.mxu0 %v3209
        %3260 = vmatprep.subr.mxu0 %v3212
        %3261 = vmatpush1.msra.mxu0 %v3211
        %3262 = vmatprep.subr.mxu0 %v3226
        %3263 = vmatpush1.msra.mxu0 %v3223
        %3264 = vmatprep.subr.mxu0 0.0
        %3265 = vmatpush1.msra.mxu0 0.0
        %3266 = vmatprep.subr.mxu0 0.0
        %3267 = vmatpush1.msra.mxu0 0.0
        %3268 = vmatprep.subr.mxu0 0.0
        %3269 = vmatpush1.msra.mxu0 0.0
        %3270 = vmatprep.subr.mxu0 0.0
        %3271 = vmatpush1.msra.mxu0 0.0
        %3272 = vmatprep.subr.mxu0 0.0
        %3273 = vmatpush1.msra.mxu0 0.0
        %3274 = vmatprep.subr.mxu0 0.0
        %3275 = vmatpush1.msra.mxu0 0.0
        %3276 = vmatprep.subr.mxu0 0.0
        %3277 = vmatpush1.msra.mxu0 0.0
        %3278 = vmatprep.subr.mxu0 0.0
        %3279 = vmatpush1.msra.mxu0 0.0
        %3280 = vmatprep.subr.mxu0 0.0
        %3281 = vmatpush1.msra.mxu0 0.0
        %3282 = vmatprep.subr.mxu0 0.0
        %3283 = vmatpush1.msra.mxu0 0.0
        %3284 = vmatprep.subr.mxu0 0.0
        %3285 = vmatpush1.msra.mxu0 0.0
        %3286 = vmatprep.subr.mxu0 0.0
        %3287 = vmatpush1.msra.mxu0 0.0
        %3288 = vmatprep.subr.mxu0 0.0
        %3289 = vmatpush1.msra.mxu0 0.0
        %3290 = vmatprep.subr.mxu0 0.0
        %3291 = vmatpush1.msra.mxu0 0.0
        %3292 = vmatprep.mubr.f32.mxu0 %v3219
        %3293 = vmatmul.mubr.f32.gmra.mrb[0].mxu0 %v3215
        %v3294 = vpop.f32.mrb[0].mxu0
        %v3295 = vadd.f32 0.0, %v3294
        %v3296 = vpop.f32.mrb[0].mxu0
        %v3297 = vadd.f32 0.0, %v3296
        %3298 = vdwg.mxu0
        %v3299 = vmul.f32 %v3179, %v3179
        %v3300 = vmul.f32 %v3180, %v3180
        %v3301 = vmul.f32 %v3181, %v3181
        %v3302 = vmul.f32 %v3182, %v3182
        %v3303 = vmul.f32 %v3183, %v3183
        %v3304 = vmul.f32 %v3184, %v3184
        %v3305 = vmul.f32 %v3185, %v3185
        %v3306 = vmul.f32 %v3186, %v3186
        %v3307 = vmul.f32 %v3187, %v3187
        %v3308 = vmul.f32 %v3188, %v3188
        %v3309 = vmul.f32 %v3189, %v3189
        %v3310 = vmul.f32 %v3190, %v3190
        %v3311 = vmul.f32 %v3191, %v3191
        %v3312 = vmul.f32 %v3192, %v3192
        %v3313 = vmul.f32 %v3193, %v3193
        %v3314 = vmul.f32 %v3194, %v3194
        %v3315 = vmul.f32 %v3195, %v3195
        %v3316 = vmul.f32 %v3196, %v3196
        %v3317 = vmul.f32 %v3197, %v3197
        %v3318 = vmul.f32 %v3198, %v3198
        %v3319 = vmul.f32 %v3199, %v3199
        %v3320 = vmul.f32 %v3200, %v3200
        %v3321 = vmul.f32 %v3201, %v3201
        %v3322 = vmul.f32 %v3202, %v3202
        %v3323 = vmul.f32 %v3203, %v3203
        %v3324 = vmul.f32 %v3204, %v3204
        %v3325 = vmul.f32 %v3205, %v3205
        %v3326 = vmul.f32 %v3206, %v3206
        %v3327 = vmul.f32 %v3207, %v3207
        %v3328 = vmul.f32 %v3208, %v3208
        %v3329 = vmul.f32 %v3209, %v3209
        %v3330 = vmul.f32 %v3210, %v3210
        %v3331 = vmul.f32 %v3211, %v3211
        %v3332 = vmul.f32 %v3212, %v3212
        %v3333 = vmul.f32 %v3213, %v3213
        %v3334 = vmul.f32 %v3214, %v3214
        %v3336 = vsel %vm3221, %v3333, 0
        %v3339 = vsel %vm3221, %v3334, 0
        %3341 = vmatprep.subr.mxu0 %v3300
        %3342 = vmatpush1.msra.mxu0 %v3299
        %3343 = vmatprep.subr.mxu0 %v3302
        %3344 = vmatpush1.msra.mxu0 %v3301
        %3345 = vmatprep.subr.mxu0 %v3304
        %3346 = vmatpush1.msra.mxu0 %v3303
        %3347 = vmatprep.subr.mxu0 %v3306
        %3348 = vmatpush1.msra.mxu0 %v3305
        %3349 = vmatprep.subr.mxu0 %v3308
        %3350 = vmatpush1.msra.mxu0 %v3307
        %3351 = vmatprep.subr.mxu0 %v3310
        %3352 = vmatpush1.msra.mxu0 %v3309
        %3353 = vmatprep.subr.mxu0 %v3312
        %3354 = vmatpush1.msra.mxu0 %v3311
        %3355 = vmatprep.subr.mxu0 %v3314
        %3356 = vmatpush1.msra.mxu0 %v3313
        %3357 = vmatprep.subr.mxu0 %v3316
        %3358 = vmatpush1.msra.mxu0 %v3315
        %3359 = vmatprep.subr.mxu0 %v3318
        %3360 = vmatpush1.msra.mxu0 %v3317
        %3361 = vmatprep.subr.mxu0 %v3320
        %3362 = vmatpush1.msra.mxu0 %v3319
        %3363 = vmatprep.subr.mxu0 %v3322
        %3364 = vmatpush1.msra.mxu0 %v3321
        %3365 = vmatprep.subr.mxu0 %v3324
        %3366 = vmatpush1.msra.mxu0 %v3323
        %3367 = vmatprep.subr.mxu0 %v3326
        %3368 = vmatpush1.msra.mxu0 %v3325
        %3369 = vmatprep.subr.mxu0 %v3328
        %3370 = vmatpush1.msra.mxu0 %v3327
        %3371 = vmatprep.subr.mxu0 %v3330
        %3372 = vmatpush1.msra.mxu0 %v3329
        %3373 = vmatprep.subr.mxu0 %v3332
        %3374 = vmatpush1.msra.mxu0 %v3331
        %3375 = vmatprep.subr.mxu0 %v3339
        %3376 = vmatpush1.msra.mxu0 %v3336
        %3377 = vmatprep.subr.mxu0 0.0
        %3378 = vmatpush1.msra.mxu0 0.0
        %3379 = vmatprep.subr.mxu0 0.0
        %3380 = vmatpush1.msra.mxu0 0.0
        %3381 = vmatprep.subr.mxu0 0.0
        %3382 = vmatpush1.msra.mxu0 0.0
        %3383 = vmatprep.subr.mxu0 0.0
        %3384 = vmatpush1.msra.mxu0 0.0
        %3385 = vmatprep.subr.mxu0 0.0
        %3386 = vmatpush1.msra.mxu0 0.0
        %3387 = vmatprep.subr.mxu0 0.0
        %3388 = vmatpush1.msra.mxu0 0.0
        %3389 = vmatprep.subr.mxu0 0.0
        %3390 = vmatpush1.msra.mxu0 0.0
        %3391 = vmatprep.subr.mxu0 0.0
        %3392 = vmatpush1.msra.mxu0 0.0
        %3393 = vmatprep.subr.mxu0 0.0
        %3394 = vmatpush1.msra.mxu0 0.0
        %3395 = vmatprep.subr.mxu0 0.0
        %3396 = vmatpush1.msra.mxu0 0.0
        %3397 = vmatprep.subr.mxu0 0.0
        %3398 = vmatpush1.msra.mxu0 0.0
        %3399 = vmatprep.subr.mxu0 0.0
        %3400 = vmatpush1.msra.mxu0 0.0
        %3401 = vmatprep.subr.mxu0 0.0
        %3402 = vmatpush1.msra.mxu0 0.0
        %3403 = vmatprep.subr.mxu0 0.0
        %3404 = vmatpush1.msra.mxu0 0.0
        %3405 = vmatprep.mubr.f32.mxu0 %v3219
        %3406 = vmatmul.mubr.f32.gmra.mrb[0].mxu0 %v3215
        %v3407 = vpop.f32.mrb[0].mxu0
        %v3408 = vadd.f32 0.0, %v3407
        %v3409 = vpop.f32.mrb[0].mxu0
        %v3410 = vadd.f32 0.0, %v3409
        %3411 = vdwg.mxu0
        %v3412 = vld [vmem:[%s1] sm:$0xff]
        %v3413 = vld [vmem:[%s1 + $0x8] sm:$0xff]
        %v3414 = vld [vmem:[%s1 + $0x10] sm:$0xff]
        %v3415 = vld [vmem:[%s1 + $0x18] sm:$0xff]
        %v3416 = vld [vmem:[%s1 + $0x20] sm:$0xff]
        %v3417 = vld [vmem:[%s1 + $0x28] sm:$0xff]
        %v3418 = vld [vmem:[%s1 + $0x30] sm:$0xff]
        %v3419 = vld [vmem:[%s1 + $0x38] sm:$0xff]
        %v3420 = vld [vmem:[%s1 + $0x40] sm:$0xff]
        %v3421 = vld [vmem:[%s1 + $0x48] sm:$0xff]
        %v3422 = vld [vmem:[%s1 + $0x50] sm:$0xff]
        %v3423 = vld [vmem:[%s1 + $0x58] sm:$0xff]
        %v3424 = vld [vmem:[%s1 + $0x60] sm:$0xff]
        %v3425 = vld [vmem:[%s1 + $0x68] sm:$0xff]
        %v3426 = vld [vmem:[%s1 + $0x70] sm:$0xff]
        %v3427 = vld [vmem:[%s1 + $0x78] sm:$0xff]
        %v3428 = vld [vmem:[%s1 + $0x80] sm:$0xff]
        %v3429 = vld [vmem:[%s1 + $0x88] sm:$0xff]
        %v3430 = vld [vmem:[%s1 + $0x90] sm:$0xff]
        %v3431 = vld [vmem:[%s1 + $0x98] sm:$0xff]
        %v3432 = vld [vmem:[%s1 + $0xa0] sm:$0xff]
        %v3433 = vld [vmem:[%s1 + $0xa8] sm:$0xff]
        %v3434 = vld [vmem:[%s1 + $0xb0] sm:$0xff]
        %v3435 = vld [vmem:[%s1 + $0xb8] sm:$0xff]
        %v3436 = vld [vmem:[%s1 + $0xc0] sm:$0xff]
        %v3437 = vld [vmem:[%s1 + $0xc8] sm:$0xff]
        %v3438 = vld [vmem:[%s1 + $0xd0] sm:$0xff]
        %v3439 = vld [vmem:[%s1 + $0xd8] sm:$0xff]
        %v3440 = vld [vmem:[%s1 + $0xe0] sm:$0xff]
        %v3441 = vld [vmem:[%s1 + $0xe8] sm:$0xff]
        %v3442 = vld [vmem:[%s1 + $0xf0] sm:$0xff]
        %v3443 = vld [vmem:[%s1 + $0xf8] sm:$0xff]
        %3444 = vmatprep.subr.mxu0 0.0
        %3445 = vmatpush1.msra.mxu0 %v3412
        %3446 = vmatprep.subr.mxu0 0.0
        %3447 = vmatpush1.msra.mxu0 %v3413
        %3448 = vmatprep.subr.mxu0 0.0
        %3449 = vmatpush1.msra.mxu0 %v3414
        %3450 = vmatprep.subr.mxu0 0.0
        %3451 = vmatpush1.msra.mxu0 %v3415
        %3452 = vmatprep.subr.mxu0 0.0
        %3453 = vmatpush1.msra.mxu0 %v3416
        %3454 = vmatprep.subr.mxu0 0.0
        %3455 = vmatpush1.msra.mxu0 %v3417
        %3456 = vmatprep.subr.mxu0 0.0
        %3457 = vmatpush1.msra.mxu0 %v3418
        %3458 = vmatprep.subr.mxu0 0.0
        %3459 = vmatpush1.msra.mxu0 %v3419
        %3460 = vmatprep.subr.mxu0 0.0
        %3461 = vmatpush1.msra.mxu0 %v3420
        %3462 = vmatprep.subr.mxu0 0.0
        %3463 = vmatpush1.msra.mxu0 %v3421
        %3464 = vmatprep.subr.mxu0 0.0
        %3465 = vmatpush1.msra.mxu0 %v3422
        %3466 = vmatprep.subr.mxu0 0.0
        %3467 = vmatpush1.msra.mxu0 %v3423
        %3468 = vmatprep.subr.mxu0 0.0
        %3469 = vmatpush1.msra.mxu0 %v3424
        %3470 = vmatprep.subr.mxu0 0.0
        %3471 = vmatpush1.msra.mxu0 %v3425
        %3472 = vmatprep.subr.mxu0 0.0
        %3473 = vmatpush1.msra.mxu0 %v3426
        %3474 = vmatprep.subr.mxu0 0.0
        %3475 = vmatpush1.msra.mxu0 %v3427
        %3476 = vmatprep.subr.mxu0 0.0
        %3477 = vmatpush1.msra.mxu0 %v3428
        %3478 = vmatprep.subr.mxu0 0.0
        %3479 = vmatpush1.msra.mxu0 %v3429
        %3480 = vmatprep.subr.mxu0 0.0
        %3481 = vmatpush1.msra.mxu0 %v3430
        %3482 = vmatprep.subr.mxu0 0.0
        %3483 = vmatpush1.msra.mxu0 %v3431
        %3484 = vmatprep.subr.mxu0 0.0
        %3485 = vmatpush1.msra.mxu0 %v3432
        %3486 = vmatprep.subr.mxu0 0.0
        %3487 = vmatpush1.msra.mxu0 %v3433
        %3488 = vmatprep.subr.mxu0 0.0
        %3489 = vmatpush1.msra.mxu0 %v3434
        %3490 = vmatprep.subr.mxu0 0.0
        %3491 = vmatpush1.msra.mxu0 %v3435
        %3492 = vmatprep.subr.mxu0 0.0
        %3493 = vmatpush1.msra.mxu0 %v3436
        %3494 = vmatprep.subr.mxu0 0.0
        %3495 = vmatpush1.msra.mxu0 %v3437
        %3496 = vmatprep.subr.mxu0 0.0
        %3497 = vmatpush1.msra.mxu0 %v3438
        %3498 = vmatprep.subr.mxu0 0.0
        %3499 = vmatpush1.msra.mxu0 %v3439
        %3500 = vmatprep.subr.mxu0 0.0
        %3501 = vmatpush1.msra.mxu0 %v3440
        %3502 = vmatprep.subr.mxu0 0.0
        %3503 = vmatpush1.msra.mxu0 %v3441
        %3504 = vmatprep.subr.mxu0 0.0
        %3505 = vmatpush1.msra.mxu0 %v3442
        %3506 = vmatprep.subr.mxu0 0.0
        %3507 = vmatpush1.msra.mxu0 %v3443
        %3508 = vmatprep.mubr.f32.mxu0 %v3297
        %3509 = vmatmul.mubr.f32.gmra.mrb[0].mxu0 %v3295
        %v3510 = vpop.f32.mrb[0].mxu0
        %v3511 = vadd.f32 0.0, %v3510
        %v3512 = vpop.f32.mrb[0].mxu0
        %3513 = vmatprep.mubr.f32.mxu0 %v3410
        %3514 = vmatmul.mubr.f32.gmra.mrb[0].mxu0 %v3408
        %v3515 = vpop.f32.mrb[0].mxu0
        %v3516 = vadd.f32 0.0, %v3515
        %v3517 = vpop.f32.mrb[0].mxu0
        %3518 = vdwg.mxu0
        %v3519 = vmul.f32 %v3511, 0.00390625
        %v3520 = vmul.f32 %v3516, 0.00390625
        %v3521 = vmul.f32 %v3519, %v3519
        %v3522 = vsub.f32 %v3520, %v3521
        %v3523 = vmax.f32 %v3522, 0.0
        %v3524 = vld [vmem:[#allocation8] sm:$0x1]
        %v3525 = vld [vmem:[#allocation8 + $0x1] sm:$0x1]
        %v3526 = vld [vmem:[#allocation8 + $0x2] sm:$0x1]
        %v3527 = vsel %vm1031, %v3519, 0.0
        %3528 = vadd.xlane.f32.xlu0 %v3527
        %v3529 = vpop.xlane.xlu0 %3528
        %v3530 = vmul.f32 %v3529, %v1035
        %v3531 = vsub.f32 %v3519, %v3530
        %v3532 = vmul.f32 %v3531, %v3531
        %v3533 = vsel %vm1031, %v3532, 0.0
        %3534 = vadd.xlane.f32.xlu0 %v3533
        %v3535 = vpop.xlane.xlu0 %3534
        %v3536 = vmul.f32 %v3535, 0.06666667
        %v3537 = vadd.f32 %v3536, 1e-05
        %v3538 = vrsqrt.pop %v3537
        %v3539 = vmul.f32 %v3531, %v3538
        %v3540 = vadd.f32 %v3523, 1e-05
        %v3541 = vrsqrt.pop %v3540
        %v3542 = vlaneseq
        %v3543 = vshrl.u32 %v3542, 7
        %v3544 = vsub.s32 0, %v3543
        %v3545 = vrot.slane %v3525, %v3544
        %v3546 = vmul.f32 %v3545, %v3541
        %v3547 = vmul.f32 %v3525, %v3524
        %v3548 = vlaneseq
        %v3549 = vshrl.u32 %v3548, 7
        %v3550 = vsub.s32 0, %v3549
        %v3551 = vrot.slane %v3547, %v3550
        %v3552 = vmul.f32 %v3551, %v3539
        %v3553 = vlaneseq
        %v3554 = vshrl.u32 %v3553, 7
        %v3555 = vsub.s32 0, %v3554
        %v3556 = vrot.slane %v3526, %v3555
        %v3557 = vadd.f32 %v3552, %v3556
        %v3558 = vmul.f32 %v3519, %v3546
        %v3559 = vsub.f32 %v3557, %v3558
        %v3560 = vld [vmem:[%s2] sm:$0xff]
        %v3561 = vld [vmem:[%s2 + $0x8] sm:$0xff]
        %v3562 = vld [vmem:[%s2 + $0x10] sm:$0xff]
        %v3563 = vld [vmem:[%s2 + $0x18] sm:$0xff]
        %v3565 = vsel %vm1031, %v3546, 0
        %v3568 = vsel %vm1031, %v3559, 0
        %3570 = vmatprep.subr.mxu0 %v3561
        %3571 = vmatpush1.msra.mxu0 %v3560
        %3572 = vmatprep.subr.mxu0 %v3563
        %3573 = vmatpush1.msra.mxu0 %v3562
        %3574 = vmatprep.subr.mxu0 0.0
        %3575 = vmatpush1.msra.mxu0 0.0
        %3576 = vmatprep.subr.mxu0 0.0
        %3577 = vmatpush1.msra.mxu0 0.0
        %3578 = vmatprep.subr.mxu0 0.0
        %3579 = vmatpush1.msra.mxu0 0.0
        %3580 = vmatprep.subr.mxu0 0.0
        %3581 = vmatpush1.msra.mxu0 0.0
        %3582 = vmatprep.subr.mxu0 0.0
        %3583 = vmatpush1.msra.mxu0 0.0
        %3584 = vmatprep.subr.mxu0 0.0
        %3585 = vmatpush1.msra.mxu0 0.0
        %3586 = vmatprep.subr.mxu0 0.0
        %3587 = vmatpush1.msra.mxu0 0.0
        %3588 = vmatprep.subr.mxu0 0.0
        %3589 = vmatpush1.msra.mxu0 0.0
        %3590 = vmatprep.subr.mxu0 0.0
        %3591 = vmatpush1.msra.mxu0 0.0
        %3592 = vmatprep.subr.mxu0 0.0
        %3593 = vmatpush1.msra.mxu0 0.0
        %3594 = vmatprep.subr.mxu0 0.0
        %3595 = vmatpush1.msra.mxu0 0.0
        %3596 = vmatprep.subr.mxu0 0.0
        %3597 = vmatpush1.msra.mxu0 0.0
        %3598 = vmatprep.subr.mxu0 0.0
        %3599 = vmatpush1.msra.mxu0 0.0
        %3600 = vmatprep.subr.mxu0 0.0
        %3601 = vmatpush1.msra.mxu0 0.0
        %3602 = vmatprep.subr.mxu0 0.0
        %3603 = vmatpush1.msra.mxu0 0.0
        %3604 = vmatprep.subr.mxu0 0.0
        %3605 = vmatpush1.msra.mxu0 0.0
        %3606 = vmatprep.subr.mxu0 0.0
        %3607 = vmatpush1.msra.mxu0 0.0
        %3608 = vmatprep.subr.mxu0 0.0
        %3609 = vmatpush1.msra.mxu0 0.0
        %3610 = vmatprep.subr.mxu0 0.0
        %3611 = vmatpush1.msra.mxu0 0.0
        %3612 = vmatprep.subr.mxu0 0.0
        %3613 = vmatpush1.msra.mxu0 0.0
        %3614 = vmatprep.subr.mxu0 0.0
        %3615 = vmatpush1.msra.mxu0 0.0
        %3616 = vmatprep.subr.mxu0 0.0
        %3617 = vmatpush1.msra.mxu0 0.0
        %3618 = vmatprep.subr.mxu0 0.0
        %3619 = vmatpush1.msra.mxu0 0.0
        %3620 = vmatprep.subr.mxu0 0.0
        %3621 = vmatpush1.msra.mxu0 0.0
        %3622 = vmatprep.subr.mxu0 0.0
        %3623 = vmatpush1.msra.mxu0 0.0
        %3624 = vmatprep.subr.mxu0 0.0
        %3625 = vmatpush1.msra.mxu0 0.0
        %3626 = vmatprep.subr.mxu0 0.0
        %3627 = vmatpush1.msra.mxu0 0.0
        %3628 = vmatprep.subr.mxu0 0.0
        %3629 = vmatpush1.msra.mxu0 0.0
        %3630 = vmatprep.subr.mxu0 0.0
        %3631 = vmatpush1.msra.mxu0 0.0
        %3632 = vmatprep.subr.mxu0 0.0
        %3633 = vmatpush1.msra.mxu0 0.0
        %3634 = vmatprep.mubr.f32.mxu0 0.0
        %3635 = vmatmul.mubr.f32.gmra.mrb[0].mxu0 %v3565
        %v3636 = vpop.f32.mrb[0].mxu0
        %v3637 = vadd.f32 0.0, %v3636
        %v3638 = vpop.f32.mrb[0].mxu0
        %v3639 = vadd.f32 0.0, %v3638
        %3640 = vmatprep.mubr.f32.mxu0 0.0
        %3641 = vmatmul.mubr.f32.gmra.mrb[0].mxu0 %v3568
        %v3642 = vpop.f32.mrb[0].mxu0
        %v3643 = vadd.f32 0.0, %v3642
        %v3644 = vpop.f32.mrb[0].mxu0
        %v3645 = vadd.f32 0.0, %v3644
        %3646 = vdwg.mxu0
        %v3647 = vld [vmem:[%s11] sm:$0xff]
        %v3648 = vld [vmem:[%s11 + $0x8] sm:$0xff]
        %v3649 = vld [vmem:[%s11 + $0x10] sm:$0xff]
        %v3650 = vld [vmem:[%s11 + $0x18] sm:$0xff]
        %v3651 = vld [vmem:[%s11 + $0x20] sm:$0xff]
        %v3652 = vld [vmem:[%s11 + $0x28] sm:$0xff]
        %v3653 = vld [vmem:[%s11 + $0x30] sm:$0xff]
        %v3654 = vld [vmem:[%s11 + $0x38] sm:$0xff]
        %v3655 = vld [vmem:[%s11 + $0x40] sm:$0xff]
        %v3656 = vld [vmem:[%s11 + $0x48] sm:$0xff]
        %v3657 = vld [vmem:[%s11 + $0x50] sm:$0xff]
        %v3658 = vld [vmem:[%s11 + $0x58] sm:$0xff]
        %v3659 = vld [vmem:[%s11 + $0x60] sm:$0xff]
        %v3660 = vld [vmem:[%s11 + $0x68] sm:$0xff]
        %v3661 = vld [vmem:[%s11 + $0x70] sm:$0xff]
        %v3662 = vld [vmem:[%s11 + $0x78] sm:$0xff]
        %v3663 = vld [vmem:[%s11 + $0x80] sm:$0xff]
        %v3664 = vld [vmem:[%s11 + $0x88] sm:$0x3f]
        %vm3665 = vcmask 64512
        %v3667 = vsel %vm3665, %v3647, 0
        %v3670 = vsel %vm3665, %v3648, 0
        %v3673 = vsel %vm3665, %v3649, 0
        %v3676 = vsel %vm3665, %v3650, 0
        %v3679 = vsel %vm3665, %v3651, 0
        %v3682 = vsel %vm3665, %v3652, 0
        %v3685 = vsel %vm3665, %v3653, 0
        %v3688 = vsel %vm3665, %v3654, 0
        %v3691 = vsel %vm3665, %v3655, 0
        %v3694 = vsel %vm3665, %v3656, 0
        %v3697 = vsel %vm3665, %v3657, 0
        %v3700 = vsel %vm3665, %v3658, 0
        %v3703 = vsel %vm3665, %v3659, 0
        %v3706 = vsel %vm3665, %v3660, 0
        %v3709 = vsel %vm3665, %v3661, 0
        %v3712 = vsel %vm3665, %v3662, 0
        %v3715 = vsel %vm3665, %v3663, 0
        %v3718 = vsel %vm3665, %v3664, 0
        %3720 = vmatprep.subr.mxu0 %v3639
        %3721 = vmatpush1.msra.mxu0 %v3637
        %3722 = vmatprep.subr.mxu0 0.0
        %3723 = vmatpush1.msra.mxu0 0.0
        %3724 = vmatprep.subr.mxu0 0.0
        %3725 = vmatpush1.msra.mxu0 0.0
        %3726 = vmatprep.subr.mxu0 0.0
        %3727 = vmatpush1.msra.mxu0 0.0
        %3728 = vmatprep.subr.mxu0 0.0
        %3729 = vmatpush1.msra.mxu0 0.0
        %3730 = vmatprep.subr.mxu0 0.0
        %3731 = vmatpush1.msra.mxu0 0.0
        %3732 = vmatprep.subr.mxu0 0.0
        %3733 = vmatpush1.msra.mxu0 0.0
        %3734 = vmatprep.subr.mxu0 0.0
        %3735 = vmatpush1.msra.mxu0 0.0
        %3736 = vmatprep.subr.mxu0 0.0
        %3737 = vmatpush1.msra.mxu0 0.0
        %3738 = vmatprep.subr.mxu0 0.0
        %3739 = vmatpush1.msra.mxu0 0.0
        %3740 = vmatprep.subr.mxu0 0.0
        %3741 = vmatpush1.msra.mxu0 0.0
        %3742 = vmatprep.subr.mxu0 0.0
        %3743 = vmatpush1.msra.mxu0 0.0
        %3744 = vmatprep.subr.mxu0 0.0
        %3745 = vmatpush1.msra.mxu0 0.0
        %3746 = vmatprep.subr.mxu0 0.0
        %3747 = vmatpush1.msra.mxu0 0.0
        %3748 = vmatprep.subr.mxu0 0.0
        %3749 = vmatpush1.msra.mxu0 0.0
        %3750 = vmatprep.subr.mxu0 0.0
        %3751 = vmatpush1.msra.mxu0 0.0
        %3752 = vmatprep.subr.mxu0 0.0
        %3753 = vmatpush1.msra.mxu0 0.0
        %3754 = vmatprep.subr.mxu0 0.0
        %3755 = vmatpush1.msra.mxu0 0.0
        %3756 = vmatprep.subr.mxu0 0.0
        %3757 = vmatpush1.msra.mxu0 0.0
        %3758 = vmatprep.subr.mxu0 0.0
        %3759 = vmatpush1.msra.mxu0 0.0
        %3760 = vmatprep.subr.mxu0 0.0
        %3761 = vmatpush1.msra.mxu0 0.0
        %3762 = vmatprep.subr.mxu0 0.0
        %3763 = vmatpush1.msra.mxu0 0.0
        %3764 = vmatprep.subr.mxu0 0.0
        %3765 = vmatpush1.msra.mxu0 0.0
        %3766 = vmatprep.subr.mxu0 0.0
        %3767 = vmatpush1.msra.mxu0 0.0
        %3768 = vmatprep.subr.mxu0 0.0
        %3769 = vmatpush1.msra.mxu0 0.0
        %3770 = vmatprep.subr.mxu0 0.0
        %3771 = vmatpush1.msra.mxu0 0.0
        %3772 = vmatprep.subr.mxu0 0.0
        %3773 = vmatpush1.msra.mxu0 0.0
        %3774 = vmatprep.subr.mxu0 0.0
        %3775 = vmatpush1.msra.mxu0 0.0
        %3776 = vmatprep.subr.mxu0 0.0
        %3777 = vmatpush1.msra.mxu0 0.0
        %3778 = vmatprep.subr.mxu0 0.0
        %3779 = vmatpush1.msra.mxu0 0.0
        %3780 = vmatprep.subr.mxu0 0.0
        %3781 = vmatpush1.msra.mxu0 0.0
        %3782 = vmatprep.subr.mxu0 0.0
        %3783 = vmatpush1.msra.mxu0 0.0
        %3784 = vmatprep.mubr.f32.mxu0 0.0
        %3785 = vmatmul.mubr.f32.gmra.mrb[0].mxu0 %v3667
        %v3786 = vpop.f32.mrb[0].mxu0
        %v3787 = vadd.f32 0.0, %v3786
        %v3788 = vpop.f32.mrb[0].mxu0
        %v3789 = vadd.f32 0.0, %v3788
        %3790 = vmatprep.mubr.f32.mxu0 0.0
        %3791 = vmatmul.mubr.f32.gmra.mrb[0].mxu0 %v3670
        %v3792 = vpop.f32.mrb[0].mxu0
        %v3793 = vadd.f32 0.0, %v3792
        %v3794 = vpop.f32.mrb[0].mxu0
        %v3795 = vadd.f32 0.0, %v3794
        %3796 = vmatprep.mubr.f32.mxu0 0.0
        %3797 = vmatmul.mubr.f32.gmra.mrb[0].mxu0 %v3673
        %v3798 = vpop.f32.mrb[0].mxu0
        %v3799 = vadd.f32 0.0, %v3798
        %v3800 = vpop.f32.mrb[0].mxu0
        %v3801 = vadd.f32 0.0, %v3800
        %3802 = vmatprep.mubr.f32.mxu0 0.0
        %3803 = vmatmul.mubr.f32.gmra.mrb[0].mxu0 %v3676
        %v3804 = vpop.f32.mrb[0].mxu0
        %v3805 = vadd.f32 0.0, %v3804
        %v3806 = vpop.f32.mrb[0].mxu0
        %v3807 = vadd.f32 0.0, %v3806
        %3808 = vmatprep.mubr.f32.mxu0 0.0
        %3809 = vmatmul.mubr.f32.gmra.mrb[0].mxu0 %v3679
        %v3810 = vpop.f32.mrb[0].mxu0
        %v3811 = vadd.f32 0.0, %v3810
        %v3812 = vpop.f32.mrb[0].mxu0
        %v3813 = vadd.f32 0.0, %v3812
        %3814 = vmatprep.mubr.f32.mxu0 0.0
        %3815 = vmatmul.mubr.f32.gmra.mrb[0].mxu0 %v3682
        %v3816 = vpop.f32.mrb[0].mxu0
        %v3817 = vadd.f32 0.0, %v3816
        %v3818 = vpop.f32.mrb[0].mxu0
        %v3819 = vadd.f32 0.0, %v3818
        %3820 = vmatprep.mubr.f32.mxu0 0.0
        %3821 = vmatmul.mubr.f32.gmra.mrb[0].mxu0 %v3685
        %v3822 = vpop.f32.mrb[0].mxu0
        %v3823 = vadd.f32 0.0, %v3822
        %v3824 = vpop.f32.mrb[0].mxu0
        %v3825 = vadd.f32 0.0, %v3824
        %3826 = vmatprep.mubr.f32.mxu0 0.0
        %3827 = vmatmul.mubr.f32.gmra.mrb[0].mxu0 %v3688
        %v3828 = vpop.f32.mrb[0].mxu0
        %v3829 = vadd.f32 0.0, %v3828
        %v3830 = vpop.f32.mrb[0].mxu0
        %v3831 = vadd.f32 0.0, %v3830
        %3832 = vmatprep.mubr.f32.mxu0 0.0
        %3833 = vmatmul.mubr.f32.gmra.mrb[0].mxu0 %v3691
        %v3834 = vpop.f32.mrb[0].mxu0
        %v3835 = vadd.f32 0.0, %v3834
        %v3836 = vpop.f32.mrb[0].mxu0
        %v3837 = vadd.f32 0.0, %v3836
        %3838 = vmatprep.mubr.f32.mxu0 0.0
        %3839 = vmatmul.mubr.f32.gmra.mrb[0].mxu0 %v3694
        %v3840 = vpop.f32.mrb[0].mxu0
        %v3841 = vadd.f32 0.0, %v3840
        %v3842 = vpop.f32.mrb[0].mxu0
        %v3843 = vadd.f32 0.0, %v3842
        %3844 = vmatprep.mubr.f32.mxu0 0.0
        %3845 = vmatmul.mubr.f32.gmra.mrb[0].mxu0 %v3697
        %v3846 = vpop.f32.mrb[0].mxu0
        %v3847 = vadd.f32 0.0, %v3846
        %v3848 = vpop.f32.mrb[0].mxu0
        %v3849 = vadd.f32 0.0, %v3848
        %3850 = vmatprep.mubr.f32.mxu0 0.0
        %3851 = vmatmul.mubr.f32.gmra.mrb[0].mxu0 %v3700
        %v3852 = vpop.f32.mrb[0].mxu0
        %v3853 = vadd.f32 0.0, %v3852
        %v3854 = vpop.f32.mrb[0].mxu0
        %v3855 = vadd.f32 0.0, %v3854
        %3856 = vmatprep.mubr.f32.mxu0 0.0
        %3857 = vmatmul.mubr.f32.gmra.mrb[0].mxu0 %v3703
        %v3858 = vpop.f32.mrb[0].mxu0
        %v3859 = vadd.f32 0.0, %v3858
        %v3860 = vpop.f32.mrb[0].mxu0
        %v3861 = vadd.f32 0.0, %v3860
        %3862 = vmatprep.mubr.f32.mxu0 0.0
        %3863 = vmatmul.mubr.f32.gmra.mrb[0].mxu0 %v3706
        %v3864 = vpop.f32.mrb[0].mxu0
        %v3865 = vadd.f32 0.0, %v3864
        %v3866 = vpop.f32.mrb[0].mxu0
        %v3867 = vadd.f32 0.0, %v3866
        %3868 = vmatprep.mubr.f32.mxu0 0.0
        %3869 = vmatmul.mubr.f32.gmra.mrb[0].mxu0 %v3709
        %v3870 = vpop.f32.mrb[0].mxu0
        %v3871 = vadd.f32 0.0, %v3870
        %v3872 = vpop.f32.mrb[0].mxu0
        %v3873 = vadd.f32 0.0, %v3872
        %3874 = vmatprep.mubr.f32.mxu0 0.0
        %3875 = vmatmul.mubr.f32.gmra.mrb[0].mxu0 %v3712
        %v3876 = vpop.f32.mrb[0].mxu0
        %v3877 = vadd.f32 0.0, %v3876
        %v3878 = vpop.f32.mrb[0].mxu0
        %v3879 = vadd.f32 0.0, %v3878
        %3880 = vmatprep.mubr.f32.mxu0 0.0
        %3881 = vmatmul.mubr.f32.gmra.mrb[0].mxu0 %v3715
        %v3882 = vpop.f32.mrb[0].mxu0
        %v3883 = vadd.f32 0.0, %v3882
        %v3884 = vpop.f32.mrb[0].mxu0
        %v3885 = vadd.f32 0.0, %v3884
        %3886 = vmatprep.mubr.f32.mxu0 0.0
        %3887 = vmatmul.mubr.f32.gmra.mrb[0].mxu0 %v3718
        %v3888 = vpop.f32.mrb[0].mxu0
        %v3889 = vadd.f32 0.0, %v3888
        %v3890 = vpop.f32.mrb[0].mxu0
        %v3891 = vadd.f32 0.0, %v3890
        %3892 = vdwg.mxu0
        %3893 = vmatprep.subr.mxu0 %v3645
        %3894 = vmatpush1.msra.mxu0 %v3643
        %3895 = vmatprep.subr.mxu0 0.0
        %3896 = vmatpush1.msra.mxu0 0.0
        %3897 = vmatprep.subr.mxu0 0.0
        %3898 = vmatpush1.msra.mxu0 0.0
        %3899 = vmatprep.subr.mxu0 0.0
        %3900 = vmatpush1.msra.mxu0 0.0
        %3901 = vmatprep.subr.mxu0 0.0
        %3902 = vmatpush1.msra.mxu0 0.0
        %3903 = vmatprep.subr.mxu0 0.0
        %3904 = vmatpush1.msra.mxu0 0.0
        %3905 = vmatprep.subr.mxu0 0.0
        %3906 = vmatpush1.msra.mxu0 0.0
        %3907 = vmatprep.subr.mxu0 0.0
        %3908 = vmatpush1.msra.mxu0 0.0
        %3909 = vmatprep.subr.mxu0 0.0
        %3910 = vmatpush1.msra.mxu0 0.0
        %3911 = vmatprep.subr.mxu0 0.0
        %3912 = vmatpush1.msra.mxu0 0.0
        %3913 = vmatprep.subr.mxu0 0.0
        %3914 = vmatpush1.msra.mxu0 0.0
        %3915 = vmatprep.subr.mxu0 0.0
        %3916 = vmatpush1.msra.mxu0 0.0
        %3917 = vmatprep.subr.mxu0 0.0
        %3918 = vmatpush1.msra.mxu0 0.0
        %3919 = vmatprep.subr.mxu0 0.0
        %3920 = vmatpush1.msra.mxu0 0.0
        %3921 = vmatprep.subr.mxu0 0.0
        %3922 = vmatpush1.msra.mxu0 0.0
        %3923 = vmatprep.subr.mxu0 0.0
        %3924 = vmatpush1.msra.mxu0 0.0
        %3925 = vmatprep.subr.mxu0 0.0
        %3926 = vmatpush1.msra.mxu0 0.0
        %3927 = vmatprep.subr.mxu0 0.0
        %3928 = vmatpush1.msra.mxu0 0.0
        %3929 = vmatprep.subr.mxu0 0.0
        %3930 = vmatpush1.msra.mxu0 0.0
        %3931 = vmatprep.subr.mxu0 0.0
        %3932 = vmatpush1.msra.mxu0 0.0
        %3933 = vmatprep.subr.mxu0 0.0
        %3934 = vmatpush1.msra.mxu0 0.0
        %3935 = vmatprep.subr.mxu0 0.0
        %3936 = vmatpush1.msra.mxu0 0.0
        %3937 = vmatprep.subr.mxu0 0.0
        %3938 = vmatpush1.msra.mxu0 0.0
        %3939 = vmatprep.subr.mxu0 0.0
        %3940 = vmatpush1.msra.mxu0 0.0
        %3941 = vmatprep.subr.mxu0 0.0
        %3942 = vmatpush1.msra.mxu0 0.0
        %3943 = vmatprep.subr.mxu0 0.0
        %3944 = vmatpush1.msra.mxu0 0.0
        %3945 = vmatprep.subr.mxu0 0.0
        %3946 = vmatpush1.msra.mxu0 0.0
        %3947 = vmatprep.subr.mxu0 0.0
        %3948 = vmatpush1.msra.mxu0 0.0
        %3949 = vmatprep.subr.mxu0 0.0
        %3950 = vmatpush1.msra.mxu0 0.0
        %3951 = vmatprep.subr.mxu0 0.0
        %3952 = vmatpush1.msra.mxu0 0.0
        %3953 = vmatprep.subr.mxu0 0.0
        %3954 = vmatpush1.msra.mxu0 0.0
        %3955 = vmatprep.subr.mxu0 0.0
        %3956 = vmatpush1.msra.mxu0 0.0
        %3957 = vmatprep.mubr.f32.mxu0 0.0
        %3958 = vmatmul.mubr.f32.gmra.mrb[0].mxu0 %v3667
        %v3959 = vpop.f32.mrb[0].mxu0
        %v3960 = vadd.f32 0.0, %v3959
        %v3961 = vpop.f32.mrb[0].mxu0
        %v3962 = vadd.f32 0.0, %v3961
        %3963 = vmatprep.mubr.f32.mxu0 0.0
        %3964 = vmatmul.mubr.f32.gmra.mrb[0].mxu0 %v3670
        %v3965 = vpop.f32.mrb[0].mxu0
        %v3966 = vadd.f32 0.0, %v3965
        %v3967 = vpop.f32.mrb[0].mxu0
        %v3968 = vadd.f32 0.0, %v3967
        %3969 = vmatprep.mubr.f32.mxu0 0.0
        %3970 = vmatmul.mubr.f32.gmra.mrb[0].mxu0 %v3673
        %v3971 = vpop.f32.mrb[0].mxu0
        %v3972 = vadd.f32 0.0, %v3971
        %v3973 = vpop.f32.mrb[0].mxu0
        %v3974 = vadd.f32 0.0, %v3973
        %3975 = vmatprep.mubr.f32.mxu0 0.0
        %3976 = vmatmul.mubr.f32.gmra.mrb[0].mxu0 %v3676
        %v3977 = vpop.f32.mrb[0].mxu0
        %v3978 = vadd.f32 0.0, %v3977
        %v3979 = vpop.f32.mrb[0].mxu0
        %v3980 = vadd.f32 0.0, %v3979
        %3981 = vmatprep.mubr.f32.mxu0 0.0
        %3982 = vmatmul.mubr.f32.gmra.mrb[0].mxu0 %v3679
        %v3983 = vpop.f32.mrb[0].mxu0
        %v3984 = vadd.f32 0.0, %v3983
        %v3985 = vpop.f32.mrb[0].mxu0
        %v3986 = vadd.f32 0.0, %v3985
        %3987 = vmatprep.mubr.f32.mxu0 0.0
        %3988 = vmatmul.mubr.f32.gmra.mrb[0].mxu0 %v3682
        %v3989 = vpop.f32.mrb[0].mxu0
        %v3990 = vadd.f32 0.0, %v3989
        %v3991 = vpop.f32.mrb[0].mxu0
        %v3992 = vadd.f32 0.0, %v3991
        %3993 = vmatprep.mubr.f32.mxu0 0.0
        %3994 = vmatmul.mubr.f32.gmra.mrb[0].mxu0 %v3685
        %v3995 = vpop.f32.mrb[0].mxu0
        %v3996 = vadd.f32 0.0, %v3995
        %v3997 = vpop.f32.mrb[0].mxu0
        %v3998 = vadd.f32 0.0, %v3997
        %3999 = vmatprep.mubr.f32.mxu0 0.0
        %4000 = vmatmul.mubr.f32.gmra.mrb[0].mxu0 %v3688
        %v4001 = vpop.f32.mrb[0].mxu0
        %v4002 = vadd.f32 0.0, %v4001
        %v4003 = vpop.f32.mrb[0].mxu0
        %v4004 = vadd.f32 0.0, %v4003
        %4005 = vmatprep.mubr.f32.mxu0 0.0
        %4006 = vmatmul.mubr.f32.gmra.mrb[0].mxu0 %v3691
        %v4007 = vpop.f32.mrb[0].mxu0
        %v4008 = vadd.f32 0.0, %v4007
        %v4009 = vpop.f32.mrb[0].mxu0
        %v4010 = vadd.f32 0.0, %v4009
        %4011 = vmatprep.mubr.f32.mxu0 0.0
        %4012 = vmatmul.mubr.f32.gmra.mrb[0].mxu0 %v3694
        %v4013 = vpop.f32.mrb[0].mxu0
        %v4014 = vadd.f32 0.0, %v4013
        %v4015 = vpop.f32.mrb[0].mxu0
        %v4016 = vadd.f32 0.0, %v4015
        %4017 = vmatprep.mubr.f32.mxu0 0.0
        %4018 = vmatmul.mubr.f32.gmra.mrb[0].mxu0 %v3697
        %v4019 = vpop.f32.mrb[0].mxu0
        %v4020 = vadd.f32 0.0, %v4019
        %v4021 = vpop.f32.mrb[0].mxu0
        %v4022 = vadd.f32 0.0, %v4021
        %4023 = vmatprep.mubr.f32.mxu0 0.0
        %4024 = vmatmul.mubr.f32.gmra.mrb[0].mxu0 %v3700
        %v4025 = vpop.f32.mrb[0].mxu0
        %v4026 = vadd.f32 0.0, %v4025
        %v4027 = vpop.f32.mrb[0].mxu0
        %v4028 = vadd.f32 0.0, %v4027
        %4029 = vmatprep.mubr.f32.mxu0 0.0
        %4030 = vmatmul.mubr.f32.gmra.mrb[0].mxu0 %v3703
        %v4031 = vpop.f32.mrb[0].mxu0
        %v4032 = vadd.f32 0.0, %v4031
        %v4033 = vpop.f32.mrb[0].mxu0
        %v4034 = vadd.f32 0.0, %v4033
        %4035 = vmatprep.mubr.f32.mxu0 0.0
        %4036 = vmatmul.mubr.f32.gmra.mrb[0].mxu0 %v3706
        %v4037 = vpop.f32.mrb[0].mxu0
        %v4038 = vadd.f32 0.0, %v4037
        %v4039 = vpop.f32.mrb[0].mxu0
        %v4040 = vadd.f32 0.0, %v4039
        %4041 = vmatprep.mubr.f32.mxu0 0.0
        %4042 = vmatmul.mubr.f32.gmra.mrb[0].mxu0 %v3709
        %v4043 = vpop.f32.mrb[0].mxu0
        %v4044 = vadd.f32 0.0, %v4043
        %v4045 = vpop.f32.mrb[0].mxu0
        %v4046 = vadd.f32 0.0, %v4045
        %4047 = vmatprep.mubr.f32.mxu0 0.0
        %4048 = vmatmul.mubr.f32.gmra.mrb[0].mxu0 %v3712
        %v4049 = vpop.f32.mrb[0].mxu0
        %v4050 = vadd.f32 0.0, %v4049
        %v4051 = vpop.f32.mrb[0].mxu0
        %v4052 = vadd.f32 0.0, %v4051
        %4053 = vmatprep.mubr.f32.mxu0 0.0
        %4054 = vmatmul.mubr.f32.gmra.mrb[0].mxu0 %v3715
        %v4055 = vpop.f32.mrb[0].mxu0
        %v4056 = vadd.f32 0.0, %v4055
        %v4057 = vpop.f32.mrb[0].mxu0
        %v4058 = vadd.f32 0.0, %v4057
        %4059 = vmatprep.mubr.f32.mxu0 0.0
        %4060 = vmatmul.mubr.f32.gmra.mrb[0].mxu0 %v3718
        %v4061 = vpop.f32.mrb[0].mxu0
        %v4062 = vadd.f32 0.0, %v4061
        %v4063 = vpop.f32.mrb[0].mxu0
        %v4064 = vadd.f32 0.0, %v4063
        %4065 = vdwg.mxu0
        %v4066 = vmul.f32 %v3179, %v3787
        %v4067 = vmul.f32 %v3180, %v3789
        %v4068 = vmul.f32 %v3181, %v3793
        %v4069 = vmul.f32 %v3182, %v3795
        %v4070 = vmul.f32 %v3183, %v3799
        %v4071 = vmul.f32 %v3184, %v3801
        %v4072 = vmul.f32 %v3185, %v3805
        %v4073 = vmul.f32 %v3186, %v3807
        %v4074 = vmul.f32 %v3187, %v3811
        %v4075 = vmul.f32 %v3188, %v3813
        %v4076 = vmul.f32 %v3189, %v3817
        %v4077 = vmul.f32 %v3190, %v3819
        %v4078 = vmul.f32 %v3191, %v3823
        %v4079 = vmul.f32 %v3192, %v3825
        %v4080 = vmul.f32 %v3193, %v3829
        %v4081 = vmul.f32 %v3194, %v3831
        %v4082 = vmul.f32 %v3195, %v3835
        %v4083 = vmul.f32 %v3196, %v3837
        %v4084 = vmul.f32 %v3197, %v3841
        %v4085 = vmul.f32 %v3198, %v3843
        %v4086 = vmul.f32 %v3199, %v3847
        %v4087 = vmul.f32 %v3200, %v3849
        %v4088 = vmul.f32 %v3201, %v3853
        %v4089 = vmul.f32 %v3202, %v3855
        %v4090 = vmul.f32 %v3203, %v3859
        %v4091 = vmul.f32 %v3204, %v3861
        %v4092 = vmul.f32 %v3205, %v3865
        %v4093 = vmul.f32 %v3206, %v3867
        %v4094 = vmul.f32 %v3207, %v3871
        %v4095 = vmul.f32 %v3208, %v3873
        %v4096 = vmul.f32 %v3209, %v3877
        %v4097 = vmul.f32 %v3210, %v3879
        %v4098 = vmul.f32 %v3211, %v3883
        %v4099 = vmul.f32 %v3212, %v3885
        %v4100 = vmul.f32 %v3213, %v3889
        %v4101 = vmul.f32 %v3214, %v3891
        %v4102 = vadd.f32 %v4066, %v3960
        %v4103 = vadd.f32 %v4067, %v3962
        %v4104 = vadd.f32 %v4068, %v3966
        %v4105 = vadd.f32 %v4069, %v3968
        %v4106 = vadd.f32 %v4070, %v3972
        %v4107 = vadd.f32 %v4071, %v3974
        %v4108 = vadd.f32 %v4072, %v3978
        %v4109 = vadd.f32 %v4073, %v3980
        %v4110 = vadd.f32 %v4074, %v3984
        %v4111 = vadd.f32 %v4075, %v3986
        %v4112 = vadd.f32 %v4076, %v3990
        %v4113 = vadd.f32 %v4077, %v3992
        %v4114 = vadd.f32 %v4078, %v3996
        %v4115 = vadd.f32 %v4079, %v3998
        %v4116 = vadd.f32 %v4080, %v4002
        %v4117 = vadd.f32 %v4081, %v4004
        %v4118 = vadd.f32 %v4082, %v4008
        %v4119 = vadd.f32 %v4083, %v4010
        %v4120 = vadd.f32 %v4084, %v4014
        %v4121 = vadd.f32 %v4085, %v4016
        %v4122 = vadd.f32 %v4086, %v4020
        %v4123 = vadd.f32 %v4087, %v4022
        %v4124 = vadd.f32 %v4088, %v4026
        %v4125 = vadd.f32 %v4089, %v4028
        %v4126 = vadd.f32 %v4090, %v4032
        %v4127 = vadd.f32 %v4091, %v4034
        %v4128 = vadd.f32 %v4092, %v4038
        %v4129 = vadd.f32 %v4093, %v4040
        %v4130 = vadd.f32 %v4094, %v4044
        %v4131 = vadd.f32 %v4095, %v4046
        %v4132 = vadd.f32 %v4096, %v4050
        %v4133 = vadd.f32 %v4097, %v4052
        %v4134 = vadd.f32 %v4098, %v4056
        %v4135 = vadd.f32 %v4099, %v4058
        %v4136 = vadd.f32 %v4100, %v4062
        %v4137 = vadd.f32 %v4101, %v4064
        %v4138 = vmax.f32 %v4102, 0.0
        %v4139 = vmax.f32 %v4103, 0.0
        %v4140 = vmax.f32 %v4104, 0.0
        %v4141 = vmax.f32 %v4105, 0.0
        %v4142 = vmax.f32 %v4106, 0.0
        %v4143 = vmax.f32 %v4107, 0.0
        %v4144 = vmax.f32 %v4108, 0.0
        %v4145 = vmax.f32 %v4109, 0.0
        %v4146 = vmax.f32 %v4110, 0.0
        %v4147 = vmax.f32 %v4111, 0.0
        %v4148 = vmax.f32 %v4112, 0.0
        %v4149 = vmax.f32 %v4113, 0.0
        %v4150 = vmax.f32 %v4114, 0.0
        %v4151 = vmax.f32 %v4115, 0.0
        %v4152 = vmax.f32 %v4116, 0.0
        %v4153 = vmax.f32 %v4117, 0.0
        %v4154 = vmax.f32 %v4118, 0.0
        %v4155 = vmax.f32 %v4119, 0.0
        %v4156 = vmax.f32 %v4120, 0.0
        %v4157 = vmax.f32 %v4121, 0.0
        %v4158 = vmax.f32 %v4122, 0.0
        %v4159 = vmax.f32 %v4123, 0.0
        %v4160 = vmax.f32 %v4124, 0.0
        %v4161 = vmax.f32 %v4125, 0.0
        %v4162 = vmax.f32 %v4126, 0.0
        %v4163 = vmax.f32 %v4127, 0.0
        %v4164 = vmax.f32 %v4128, 0.0
        %v4165 = vmax.f32 %v4129, 0.0
        %v4166 = vmax.f32 %v4130, 0.0
        %v4167 = vmax.f32 %v4131, 0.0
        %v4168 = vmax.f32 %v4132, 0.0
        %v4169 = vmax.f32 %v4133, 0.0
        %v4170 = vmax.f32 %v4134, 0.0
        %v4171 = vmax.f32 %v4135, 0.0
        %v4172 = vmax.f32 %v4136, 0.0
        %v4173 = vmax.f32 %v4137, 0.0
        %v4174 = vpack.c.bf16 %v4140, %v4138
        %v4175 = vpack.c.bf16 %v4141, %v4139
        %v4176 = vpack.c.bf16 %v4144, %v4142
        %v4177 = vpack.c.bf16 %v4145, %v4143
        %v4178 = vpack.c.bf16 %v4148, %v4146
        %v4179 = vpack.c.bf16 %v4149, %v4147
        %v4180 = vpack.c.bf16 %v4152, %v4150
        %v4181 = vpack.c.bf16 %v4153, %v4151
        %v4182 = vpack.c.bf16 %v4156, %v4154
        %v4183 = vpack.c.bf16 %v4157, %v4155
        %v4184 = vpack.c.bf16 %v4160, %v4158
        %v4185 = vpack.c.bf16 %v4161, %v4159
        %v4186 = vpack.c.bf16 %v4164, %v4162
        %v4187 = vpack.c.bf16 %v4165, %v4163
        %v4188 = vpack.c.bf16 %v4168, %v4166
        %v4189 = vpack.c.bf16 %v4169, %v4167
        %v4190 = vpack.c.bf16 %v4172, %v4170
        %v4191 = vpack.c.bf16 %v4173, %v4171
        %v4193 = vshrl.u32 %v4174, 16
        %v4195 = vrot.slane %v4193, 7
        %v4196 = vshll.u32 %v4174, 16
        %v4198 = vor.u32 %v4195, %v4196
        %v4200 = vshrl.u32 %v4175, 16
        %v4202 = vrot.slane %v4200, 7
        %v4203 = vshll.u32 %v4175, 16
        %v4205 = vor.u32 %v4202, %v4203
        %v4207 = vshrl.u32 %v4176, 16
        %v4209 = vrot.slane %v4207, 7
        %v4210 = vshll.u32 %v4176, 16
        %v4212 = vor.u32 %v4209, %v4210
        %v4213 = vsel %vm1530, %v4195, %v4212
        %v4215 = vshrl.u32 %v4177, 16
        %v4217 = vrot.slane %v4215, 7
        %v4218 = vshll.u32 %v4177, 16
        %v4220 = vor.u32 %v4217, %v4218
        %v4221 = vsel %vm1530, %v4202, %v4220
        %v4223 = vshrl.u32 %v4178, 16
        %v4225 = vrot.slane %v4223, 7
        %v4226 = vshll.u32 %v4178, 16
        %v4228 = vor.u32 %v4225, %v4226
        %v4229 = vsel %vm1530, %v4209, %v4228
        %v4231 = vshrl.u32 %v4179, 16
        %v4233 = vrot.slane %v4231, 7
        %v4234 = vshll.u32 %v4179, 16
        %v4236 = vor.u32 %v4233, %v4234
        %v4237 = vsel %vm1530, %v4217, %v4236
        %v4239 = vshrl.u32 %v4180, 16
        %v4241 = vrot.slane %v4239, 7
        %v4242 = vshll.u32 %v4180, 16
        %v4244 = vor.u32 %v4241, %v4242
        %v4245 = vsel %vm1530, %v4225, %v4244
        %v4247 = vshrl.u32 %v4181, 16
        %v4249 = vrot.slane %v4247, 7
        %v4250 = vshll.u32 %v4181, 16
        %v4252 = vor.u32 %v4249, %v4250
        %v4253 = vsel %vm1530, %v4233, %v4252
        %v4255 = vshrl.u32 %v4182, 16
        %v4257 = vrot.slane %v4255, 7
        %v4258 = vshll.u32 %v4182, 16
        %v4260 = vor.u32 %v4257, %v4258
        %v4261 = vsel %vm1530, %v4241, %v4260
        %v4263 = vshrl.u32 %v4183, 16
        %v4265 = vrot.slane %v4263, 7
        %v4266 = vshll.u32 %v4183, 16
        %v4268 = vor.u32 %v4265, %v4266
        %v4269 = vsel %vm1530, %v4249, %v4268
        %v4271 = vshrl.u32 %v4184, 16
        %v4273 = vrot.slane %v4271, 7
        %v4274 = vshll.u32 %v4184, 16
        %v4276 = vor.u32 %v4273, %v4274
        %v4277 = vsel %vm1530, %v4257, %v4276
        %v4279 = vshrl.u32 %v4185, 16
        %v4281 = vrot.slane %v4279, 7
        %v4282 = vshll.u32 %v4185, 16
        %v4284 = vor.u32 %v4281, %v4282
        %v4285 = vsel %vm1530, %v4265, %v4284
        %v4287 = vshrl.u32 %v4186, 16
        %v4289 = vrot.slane %v4287, 7
        %v4290 = vshll.u32 %v4186, 16
        %v4292 = vor.u32 %v4289, %v4290
        %v4293 = vsel %vm1530, %v4273, %v4292
        %v4295 = vshrl.u32 %v4187, 16
        %v4297 = vrot.slane %v4295, 7
        %v4298 = vshll.u32 %v4187, 16
        %v4300 = vor.u32 %v4297, %v4298
        %v4301 = vsel %vm1530, %v4281, %v4300
        %v4303 = vshrl.u32 %v4188, 16
        %v4305 = vrot.slane %v4303, 7
        %v4306 = vshll.u32 %v4188, 16
        %v4308 = vor.u32 %v4305, %v4306
        %v4309 = vsel %vm1530, %v4289, %v4308
        %v4311 = vshrl.u32 %v4189, 16
        %v4313 = vrot.slane %v4311, 7
        %v4314 = vshll.u32 %v4189, 16
        %v4316 = vor.u32 %v4313, %v4314
        %v4317 = vsel %vm1530, %v4297, %v4316
        %v4319 = vshrl.u32 %v4190, 16
        %v4321 = vrot.slane %v4319, 7
        %v4322 = vshll.u32 %v4190, 16
        %v4324 = vor.u32 %v4321, %v4322
        %v4325 = vsel %vm1530, %v4305, %v4324
        %v4327 = vshrl.u32 %v4191, 16
        %v4329 = vrot.slane %v4327, 7
        %v4330 = vshll.u32 %v4191, 16
        %v4332 = vor.u32 %v4329, %v4330
        %v4333 = vsel %vm1530, %v4313, %v4332
        %v4352 = vsel %vm1558, %v4198, %v1932
        %4353 = vst [vmem:[#allocation2] sm:$0xff] %v4352
        %v4354 = vld [vmem:[#allocation2 + $0x8] sm:$0xff]
        %v4355 = vsel %vm1558, %v4205, %v4354
        %4356 = vst [vmem:[#allocation2 + $0x8] sm:$0xff] %v4355
        %4357 = vst [vmem:[#allocation2 + $0x10] sm:$0xff] %v4213
        %4358 = vst [vmem:[#allocation2 + $0x18] sm:$0xff] %v4221
        %4359 = vst [vmem:[#allocation2 + $0x20] sm:$0xff] %v4229
        %4360 = vst [vmem:[#allocation2 + $0x28] sm:$0xff] %v4237
        %4361 = vst [vmem:[#allocation2 + $0x30] sm:$0xff] %v4245
        %4362 = vst [vmem:[#allocation2 + $0x38] sm:$0xff] %v4253
        %4363 = vst [vmem:[#allocation2 + $0x40] sm:$0xff] %v4261
        %4364 = vst [vmem:[#allocation2 + $0x48] sm:$0xff] %v4269
        %4365 = vst [vmem:[#allocation2 + $0x50] sm:$0xff] %v4277
        %4366 = vst [vmem:[#allocation2 + $0x58] sm:$0xff] %v4285
        %4367 = vst [vmem:[#allocation2 + $0x60] sm:$0xff] %v4293
        %4368 = vst [vmem:[#allocation2 + $0x68] sm:$0xff] %v4301
        %4369 = vst [vmem:[#allocation2 + $0x70] sm:$0xff] %v4309
        %4370 = vst [vmem:[#allocation2 + $0x78] sm:$0xff] %v4317
        %v4371 = vld [vmem:[#allocation2 + $0x80] sm:$0xff]
        %v4372 = vsel %vm1919, %v4325, %v4371
        %4373 = vst [vmem:[#allocation2 + $0x80] sm:$0xff] %v4372
        %v4374 = vld [vmem:[#allocation2 + $0x88] sm:$0xff]
        %v4375 = vsel %vm1919, %v4333, %v4374
        %4376 = vst [vmem:[#allocation2 + $0x88] sm:$0xff] %v4375
        %v4377 = vld [vmem:[#allocation2] sm:$0xff]
        %v4378 = vld [vmem:[#allocation2 + $0x8] sm:$0xff]
        %v4379 = vld [vmem:[#allocation2 + $0x10] sm:$0xff]
        %v4380 = vld [vmem:[#allocation2 + $0x18] sm:$0xff]
        %v4381 = vld [vmem:[#allocation2 + $0x20] sm:$0xff]
        %v4382 = vld [vmem:[#allocation2 + $0x28] sm:$0xff]
        %v4383 = vld [vmem:[#allocation2 + $0x30] sm:$0xff]
        %v4384 = vld [vmem:[#allocation2 + $0x38] sm:$0xff]
        %v4385 = vld [vmem:[#allocation2 + $0x40] sm:$0xff]
        %v4386 = vld [vmem:[#allocation2 + $0x48] sm:$0xff]
        %v4387 = vld [vmem:[#allocation2 + $0x50] sm:$0xff]
        %v4388 = vld [vmem:[#allocation2 + $0x58] sm:$0xff]
        %v4389 = vld [vmem:[#allocation2 + $0x60] sm:$0xff]
        %v4390 = vld [vmem:[#allocation2 + $0x68] sm:$0xff]
        %v4391 = vld [vmem:[#allocation2 + $0x70] sm:$0xff]
        %v4392 = vld [vmem:[#allocation2 + $0x78] sm:$0xff]
        %v4393 = vld [vmem:[#allocation2 + $0x80] sm:$0x7f]
        %v4394 = vld [vmem:[#allocation2 + $0x88] sm:$0x7f]
        %v4395 = vld [vmem:[#allocation11] sm:$0xff]
        %v4396 = vld [vmem:[#allocation11 + $0x8] sm:$0xff]
        %v4397 = vld [vmem:[#allocation11 + $0x10] sm:$0xff]
        %v4398 = vld [vmem:[#allocation11 + $0x18] sm:$0xff]
        %v4399 = vld [vmem:[#allocation11 + $0x20] sm:$0xff]
        %v4400 = vld [vmem:[#allocation11 + $0x28] sm:$0xff]
        %v4401 = vld [vmem:[#allocation11 + $0x30] sm:$0xff]
        %v4402 = vld [vmem:[#allocation11 + $0x38] sm:$0xff]
        %v4403 = vld [vmem:[#allocation11 + $0x40] sm:$0xff]
        %v4404 = vld [vmem:[#allocation11 + $0x48] sm:$0xff]
        %v4405 = vld [vmem:[#allocation11 + $0x50] sm:$0xff]
        %v4406 = vld [vmem:[#allocation11 + $0x58] sm:$0xff]
        %v4407 = vld [vmem:[#allocation11 + $0x60] sm:$0xff]
        %v4408 = vld [vmem:[#allocation11 + $0x68] sm:$0xff]
        %v4409 = vld [vmem:[#allocation11 + $0x70] sm:$0xff]
        %v4410 = vld [vmem:[#allocation11 + $0x78] sm:$0xff]
        %v4411 = vld [vmem:[#allocation11 + $0x80] sm:$0xff]
        %v4412 = vld [vmem:[#allocation11 + $0x88] sm:$0xff]
        %v4413 = vld [vmem:[#allocation11 + $0x90] sm:$0xff]
        %v4414 = vld [vmem:[#allocation11 + $0x98] sm:$0xff]
        %v4415 = vld [vmem:[#allocation11 + $0xa0] sm:$0xff]
        %v4416 = vld [vmem:[#allocation11 + $0xa8] sm:$0xff]
        %v4417 = vld [vmem:[#allocation11 + $0xb0] sm:$0xff]
        %v4418 = vld [vmem:[#allocation11 + $0xb8] sm:$0xff]
        %v4419 = vld [vmem:[#allocation11 + $0xc0] sm:$0xff]
        %v4420 = vld [vmem:[#allocation11 + $0xc8] sm:$0xff]
        %v4421 = vld [vmem:[#allocation11 + $0xd0] sm:$0xff]
        %v4422 = vld [vmem:[#allocation11 + $0xd8] sm:$0xff]
        %v4423 = vld [vmem:[#allocation11 + $0xe0] sm:$0xff]
        %v4424 = vld [vmem:[#allocation11 + $0xe8] sm:$0xff]
        %v4425 = vld [vmem:[#allocation11 + $0xf0] sm:$0xff]
        %v4426 = vld [vmem:[#allocation11 + $0xf8] sm:$0xff]
        %v4427 = vld [vmem:[#allocation2 + $0x80] sm:$0xff]
        %v4428 = vld [vmem:[#allocation2 + $0x88] sm:$0xff]
        %s4429 = scalar_lea.vmem [#allocation11], 256
        %v4430 = vld [vmem:[%s4429] sm:$0xff]
        %v4431 = vld [vmem:[%s4429 + $0x8] sm:$0xff]
        %v4432 = vld [vmem:[%s4429 + $0x10] sm:$0xff]
        %v4433 = vld [vmem:[%s4429 + $0x18] sm:$0xff]
        %v4434 = vld [vmem:[%s4429 + $0x20] sm:$0xff]
        %v4435 = vld [vmem:[%s4429 + $0x28] sm:$0xff]
        %v4436 = vld [vmem:[%s4429 + $0x30] sm:$0xff]
        %v4437 = vld [vmem:[%s4429 + $0x38] sm:$0xff]
        %v4438 = vld [vmem:[%s4429 + $0x40] sm:$0xff]
        %v4439 = vld [vmem:[%s4429 + $0x48] sm:$0xff]
        %v4440 = vld [vmem:[%s4429 + $0x50] sm:$0xff]
        %v4441 = vld [vmem:[%s4429 + $0x58] sm:$0xff]
        %v4442 = vld [vmem:[%s4429 + $0x60] sm:$0xff]
        %v4443 = vld [vmem:[%s4429 + $0x68] sm:$0xff]
        %v4444 = vld [vmem:[%s4429 + $0x70] sm:$0xff]
        %v4445 = vld [vmem:[%s4429 + $0x78] sm:$0xff]
        %v4446 = vld [vmem:[%s4429 + $0x80] sm:$0xff]
        %v4447 = vld [vmem:[%s4429 + $0x88] sm:$0xff]
        %v4448 = vld [vmem:[%s4429 + $0x90] sm:$0xff]
        %v4449 = vld [vmem:[%s4429 + $0x98] sm:$0xff]
        %v4450 = vld [vmem:[%s4429 + $0xa0] sm:$0xff]
        %v4451 = vld [vmem:[%s4429 + $0xa8] sm:$0xff]
        %v4452 = vld [vmem:[%s4429 + $0xb0] sm:$0xff]
        %v4453 = vld [vmem:[%s4429 + $0xb8] sm:$0xff]
        %v4454 = vld [vmem:[%s4429 + $0xc0] sm:$0xff]
        %v4455 = vld [vmem:[%s4429 + $0xc8] sm:$0xff]
        %v4456 = vld [vmem:[%s4429 + $0xd0] sm:$0xff]
        %v4457 = vld [vmem:[%s4429 + $0xd8] sm:$0xff]
        %v4458 = vld [vmem:[%s4429 + $0xe0] sm:$0xff]
        %v4459 = vld [vmem:[%s4429 + $0xe8] sm:$0xff]
        %v4460 = vld [vmem:[%s4429 + $0xf0] sm:$0xff]
        %v4461 = vld [vmem:[%s4429 + $0xf8] sm:$0xff]
        %v4463 = vshrl.u32 %v4377, 16
        %v4465 = vshll.u32 %v4377, 16
        %v4467 = vrot.slane %v4465, 1
        %v4468 = vor.u32 %v4463, %v4467
        %v4470 = vshll.u32 %v4379, 16
        %v4472 = vrot.slane %v4470, 1
        %v4473 = vsel %vm1885, %v4468, %v4472
        %v4475 = vshrl.u32 %v4378, 16
        %v4477 = vshll.u32 %v4378, 16
        %v4479 = vrot.slane %v4477, 1
        %v4480 = vor.u32 %v4475, %v4479
        %v4482 = vshll.u32 %v4380, 16
        %v4484 = vrot.slane %v4482, 1
        %v4485 = vsel %vm1885, %v4480, %v4484
        %v4486 = vshrl.u32 %v4379, 16
        %v4488 = vor.u32 %v4486, %v4472
        %v4490 = vshll.u32 %v4381, 16
        %v4492 = vrot.slane %v4490, 1
        %v4493 = vsel %vm1885, %v4488, %v4492
        %v4494 = vshrl.u32 %v4380, 16
        %v4496 = vor.u32 %v4494, %v4484
        %v4498 = vshll.u32 %v4382, 16
        %v4500 = vrot.slane %v4498, 1
        %v4501 = vsel %vm1885, %v4496, %v4500
        %v4502 = vshrl.u32 %v4381, 16
        %v4504 = vor.u32 %v4502, %v4492
        %v4506 = vshll.u32 %v4383, 16
        %v4508 = vrot.slane %v4506, 1
        %v4509 = vsel %vm1885, %v4504, %v4508
        %v4510 = vshrl.u32 %v4382, 16
        %v4512 = vor.u32 %v4510, %v4500
        %v4514 = vshll.u32 %v4384, 16
        %v4516 = vrot.slane %v4514, 1
        %v4517 = vsel %vm1885, %v4512, %v4516
        %v4518 = vshrl.u32 %v4383, 16
        %v4520 = vor.u32 %v4518, %v4508
        %v4522 = vshll.u32 %v4385, 16
        %v4524 = vrot.slane %v4522, 1
        %v4525 = vsel %vm1885, %v4520, %v4524
        %v4526 = vshrl.u32 %v4384, 16
        %v4528 = vor.u32 %v4526, %v4516
        %v4530 = vshll.u32 %v4386, 16
        %v4532 = vrot.slane %v4530, 1
        %v4533 = vsel %vm1885, %v4528, %v4532
        %v4534 = vshrl.u32 %v4385, 16
        %v4536 = vor.u32 %v4534, %v4524
        %v4538 = vshll.u32 %v4387, 16
        %v4540 = vrot.slane %v4538, 1
        %v4541 = vsel %vm1885, %v4536, %v4540
        %v4542 = vshrl.u32 %v4386, 16
        %v4544 = vor.u32 %v4542, %v4532
        %v4546 = vshll.u32 %v4388, 16
        %v4548 = vrot.slane %v4546, 1
        %v4549 = vsel %vm1885, %v4544, %v4548
        %v4550 = vshrl.u32 %v4387, 16
        %v4552 = vor.u32 %v4550, %v4540
        %v4554 = vshll.u32 %v4389, 16
        %v4556 = vrot.slane %v4554, 1
        %v4557 = vsel %vm1885, %v4552, %v4556
        %v4558 = vshrl.u32 %v4388, 16
        %v4560 = vor.u32 %v4558, %v4548
        %v4562 = vshll.u32 %v4390, 16
        %v4564 = vrot.slane %v4562, 1
        %v4565 = vsel %vm1885, %v4560, %v4564
        %v4566 = vshrl.u32 %v4389, 16
        %v4568 = vor.u32 %v4566, %v4556
        %v4570 = vshll.u32 %v4391, 16
        %v4572 = vrot.slane %v4570, 1
        %v4573 = vsel %vm1885, %v4568, %v4572
        %v4574 = vshrl.u32 %v4390, 16
        %v4576 = vor.u32 %v4574, %v4564
        %v4578 = vshll.u32 %v4392, 16
        %v4580 = vrot.slane %v4578, 1
        %v4581 = vsel %vm1885, %v4576, %v4580
        %v4582 = vshrl.u32 %v4391, 16
        %v4584 = vor.u32 %v4582, %v4572
        %v4586 = vshll.u32 %v4427, 16
        %v4588 = vrot.slane %v4586, 1
        %v4589 = vsel %vm1885, %v4584, %v4588
        %v4590 = vshrl.u32 %v4392, 16
        %v4592 = vor.u32 %v4590, %v4580
        %v4594 = vshll.u32 %v4428, 16
        %v4596 = vrot.slane %v4594, 1
        %v4597 = vsel %vm1885, %v4592, %v4596
        %v4598 = vshrl.u32 %v4427, 16
        %v4600 = vor.u32 %v4598, %v4588
        %v4601 = vshrl.u32 %v4428, 16
        %v4603 = vor.u32 %v4601, %v4596
        %v4654 = vunpack.c.l.b16 %v4430
        %v4655 = vunpack.c.h.b16 %v4430
        %v4656 = vunpack.c.l.b16 %v4431
        %v4657 = vunpack.c.h.b16 %v4431
        %v4658 = vunpack.c.l.b16 %v4432
        %v4659 = vunpack.c.h.b16 %v4432
        %v4660 = vunpack.c.l.b16 %v4433
        %v4661 = vunpack.c.h.b16 %v4433
        %v4662 = vunpack.c.l.b16 %v4434
        %v4663 = vunpack.c.h.b16 %v4434
        %v4664 = vunpack.c.l.b16 %v4435
        %v4665 = vunpack.c.h.b16 %v4435
        %v4666 = vunpack.c.l.b16 %v4436
        %v4667 = vunpack.c.h.b16 %v4436
        %v4668 = vunpack.c.l.b16 %v4437
        %v4669 = vunpack.c.h.b16 %v4437
        %v4670 = vunpack.c.l.b16 %v4438
        %v4671 = vunpack.c.h.b16 %v4438
        %v4672 = vunpack.c.l.b16 %v4439
        %v4673 = vunpack.c.h.b16 %v4439
        %v4674 = vunpack.c.l.b16 %v4440
        %v4675 = vunpack.c.h.b16 %v4440
        %v4676 = vunpack.c.l.b16 %v4441
        %v4677 = vunpack.c.h.b16 %v4441
        %v4678 = vunpack.c.l.b16 %v4442
        %v4679 = vunpack.c.h.b16 %v4442
        %v4680 = vunpack.c.l.b16 %v4443
        %v4681 = vunpack.c.h.b16 %v4443
        %v4682 = vunpack.c.l.b16 %v4444
        %v4683 = vunpack.c.h.b16 %v4444
        %v4684 = vunpack.c.l.b16 %v4445
        %v4685 = vunpack.c.h.b16 %v4445
        %v4686 = vunpack.c.l.b16 %v4446
        %v4687 = vunpack.c.h.b16 %v4446
        %v4688 = vunpack.c.l.b16 %v4447
        %v4689 = vunpack.c.h.b16 %v4447
        %v4690 = vunpack.c.l.b16 %v4448
        %v4691 = vunpack.c.h.b16 %v4448
        %v4692 = vunpack.c.l.b16 %v4449
        %v4693 = vunpack.c.h.b16 %v4449
        %v4694 = vunpack.c.l.b16 %v4450
        %v4695 = vunpack.c.h.b16 %v4450
        %v4696 = vunpack.c.l.b16 %v4451
        %v4697 = vunpack.c.h.b16 %v4451
        %v4698 = vunpack.c.l.b16 %v4452
        %v4699 = vunpack.c.h.b16 %v4452
        %v4700 = vunpack.c.l.b16 %v4453
        %v4701 = vunpack.c.h.b16 %v4453
        %v4702 = vunpack.c.l.b16 %v4454
        %v4703 = vunpack.c.h.b16 %v4454
        %v4704 = vunpack.c.l.b16 %v4455
        %v4705 = vunpack.c.h.b16 %v4455
        %v4706 = vunpack.c.l.b16 %v4456
        %v4707 = vunpack.c.h.b16 %v4456
        %v4708 = vunpack.c.l.b16 %v4457
        %v4709 = vunpack.c.h.b16 %v4457
        %v4710 = vunpack.c.l.b16 %v4458
        %v4711 = vunpack.c.h.b16 %v4458
        %v4712 = vunpack.c.l.b16 %v4459
        %v4713 = vunpack.c.h.b16 %v4459
        %v4714 = vunpack.c.l.b16 %v4460
        %v4715 = vunpack.c.h.b16 %v4460
        %v4716 = vunpack.c.l.b16 %v4461
        %v4717 = vunpack.c.h.b16 %v4461
        %v4718 = vpack.c.b16 %v4656, %v4654
        %v4719 = vpack.c.b16 %v4657, %v4655
        %v4720 = vpack.c.b16 %v4660, %v4658
        %v4721 = vpack.c.b16 %v4661, %v4659
        %v4722 = vpack.c.b16 %v4664, %v4662
        %v4723 = vpack.c.b16 %v4665, %v4663
        %v4724 = vpack.c.b16 %v4668, %v4666
        %v4725 = vpack.c.b16 %v4669, %v4667
        %v4726 = vpack.c.b16 %v4672, %v4670
        %v4727 = vpack.c.b16 %v4673, %v4671
        %v4728 = vpack.c.b16 %v4676, %v4674
        %v4729 = vpack.c.b16 %v4677, %v4675
        %v4730 = vpack.c.b16 %v4680, %v4678
        %v4731 = vpack.c.b16 %v4681, %v4679
        %v4732 = vpack.c.b16 %v4684, %v4682
        %v4733 = vpack.c.b16 %v4685, %v4683
        %v4734 = vpack.c.b16 %v4688, %v4686
        %v4735 = vpack.c.b16 %v4689, %v4687
        %v4736 = vpack.c.b16 %v4692, %v4690
        %v4737 = vpack.c.b16 %v4693, %v4691
        %v4738 = vpack.c.b16 %v4696, %v4694
        %v4739 = vpack.c.b16 %v4697, %v4695
        %v4740 = vpack.c.b16 %v4700, %v4698
        %v4741 = vpack.c.b16 %v4701, %v4699
        %v4742 = vpack.c.b16 %v4704, %v4702
        %v4743 = vpack.c.b16 %v4705, %v4703
        %v4744 = vpack.c.b16 %v4708, %v4706
        %v4745 = vpack.c.b16 %v4709, %v4707
        %v4746 = vpack.c.b16 %v4712, %v4710
        %v4747 = vpack.c.b16 %v4713, %v4711
        %v4748 = vpack.c.b16 %v4716, %v4714
        %v4749 = vpack.c.b16 %v4717, %v4715
        %4782 = vmatprep.subr.bf16.mxu0 %v4719
        %4783 = vmatpush1.bf16.msra.mxu0 %v4718
        %4784 = vmatprep.subr.bf16.mxu0 %v4721
        %4785 = vmatpush1.bf16.msra.mxu0 %v4720
        %4786 = vmatprep.subr.bf16.mxu0 %v4723
        %4787 = vmatpush1.bf16.msra.mxu0 %v4722
        %4788 = vmatprep.subr.bf16.mxu0 %v4725
        %4789 = vmatpush1.bf16.msra.mxu0 %v4724
        %4790 = vmatprep.subr.bf16.mxu0 %v4727
        %4791 = vmatpush1.bf16.msra.mxu0 %v4726
        %4792 = vmatprep.subr.bf16.mxu0 %v4729
        %4793 = vmatpush1.bf16.msra.mxu0 %v4728
        %4794 = vmatprep.subr.bf16.mxu0 %v4731
        %4795 = vmatpush1.bf16.msra.mxu0 %v4730
        %4796 = vmatprep.subr.bf16.mxu0 %v4733
        %4797 = vmatpush1.bf16.msra.mxu0 %v4732
        %4798 = vmatprep.subr.bf16.mxu0 %v4735
        %4799 = vmatpush1.bf16.msra.mxu0 %v4734
        %4800 = vmatprep.subr.bf16.mxu0 %v4737
        %4801 = vmatpush1.bf16.msra.mxu0 %v4736
        %4802 = vmatprep.subr.bf16.mxu0 %v4739
        %4803 = vmatpush1.bf16.msra.mxu0 %v4738
        %4804 = vmatprep.subr.bf16.mxu0 %v4741
        %4805 = vmatpush1.bf16.msra.mxu0 %v4740
        %4806 = vmatprep.subr.bf16.mxu0 %v4743
        %4807 = vmatpush1.bf16.msra.mxu0 %v4742
        %4808 = vmatprep.subr.bf16.mxu0 %v4745
        %4809 = vmatpush1.bf16.msra.mxu0 %v4744
        %4810 = vmatprep.subr.bf16.mxu0 %v4747
        %4811 = vmatpush1.bf16.msra.mxu0 %v4746
        %4812 = vmatprep.subr.bf16.mxu0 %v4749
        %4813 = vmatpush1.bf16.msra.mxu0 %v4748
        %4814 = vmatprep.mubr.bf16.mxu0 %v4485
        %4815 = vmatmul.mubr.bf16.gmra.mrb[0].mxu0 %v4473
        %v4816 = vpop.f32.mrb[0].mxu0
        %v4817 = vadd.f32 0.0, %v4816
        %v4818 = vpop.f32.mrb[0].mxu0
        %v4819 = vadd.f32 0.0, %v4818
        %v4820 = vpop.f32.mrb[0].mxu0
        %v4821 = vadd.f32 0.0, %v4820
        %v4822 = vpop.f32.mrb[0].mxu0
        %v4823 = vadd.f32 0.0, %v4822
        %4824 = vmatprep.mubr.bf16.mxu0 %v4501
        %4825 = vmatmul.mubr.bf16.gmra.mrb[0].mxu0 %v4493
        %v4826 = vpop.f32.mrb[0].mxu0
        %v4827 = vadd.f32 0.0, %v4826
        %v4828 = vpop.f32.mrb[0].mxu0
        %v4829 = vadd.f32 0.0, %v4828
        %v4830 = vpop.f32.mrb[0].mxu0
        %v4831 = vadd.f32 0.0, %v4830
        %v4832 = vpop.f32.mrb[0].mxu0
        %v4833 = vadd.f32 0.0, %v4832
        %4834 = vmatprep.mubr.bf16.mxu0 %v4517
        %4835 = vmatmul.mubr.bf16.gmra.mrb[0].mxu0 %v4509
        %v4836 = vpop.f32.mrb[0].mxu0
        %v4837 = vadd.f32 0.0, %v4836
        %v4838 = vpop.f32.mrb[0].mxu0
        %v4839 = vadd.f32 0.0, %v4838
        %v4840 = vpop.f32.mrb[0].mxu0
        %v4841 = vadd.f32 0.0, %v4840
        %v4842 = vpop.f32.mrb[0].mxu0
        %v4843 = vadd.f32 0.0, %v4842
        %4844 = vmatprep.mubr.bf16.mxu0 %v4533
        %4845 = vmatmul.mubr.bf16.gmra.mrb[0].mxu0 %v4525
        %v4846 = vpop.f32.mrb[0].mxu0
        %v4847 = vadd.f32 0.0, %v4846
        %v4848 = vpop.f32.mrb[0].mxu0
        %v4849 = vadd.f32 0.0, %v4848
        %v4850 = vpop.f32.mrb[0].mxu0
        %v4851 = vadd.f32 0.0, %v4850
        %v4852 = vpop.f32.mrb[0].mxu0
        %v4853 = vadd.f32 0.0, %v4852
        %4854 = vmatprep.mubr.bf16.mxu0 %v4549
        %4855 = vmatmul.mubr.bf16.gmra.mrb[0].mxu0 %v4541
        %v4856 = vpop.f32.mrb[0].mxu0
        %v4857 = vadd.f32 0.0, %v4856
        %v4858 = vpop.f32.mrb[0].mxu0
        %v4859 = vadd.f32 0.0, %v4858
        %v4860 = vpop.f32.mrb[0].mxu0
        %v4861 = vadd.f32 0.0, %v4860
        %v4862 = vpop.f32.mrb[0].mxu0
        %v4863 = vadd.f32 0.0, %v4862
        %4864 = vmatprep.mubr.bf16.mxu0 %v4565
        %4865 = vmatmul.mubr.bf16.gmra.mrb[0].mxu0 %v4557
        %v4866 = vpop.f32.mrb[0].mxu0
        %v4867 = vadd.f32 0.0, %v4866
        %v4868 = vpop.f32.mrb[0].mxu0
        %v4869 = vadd.f32 0.0, %v4868
        %v4870 = vpop.f32.mrb[0].mxu0
        %v4871 = vadd.f32 0.0, %v4870
        %v4872 = vpop.f32.mrb[0].mxu0
        %v4873 = vadd.f32 0.0, %v4872
        %4874 = vmatprep.mubr.bf16.mxu0 %v4581
        %4875 = vmatmul.mubr.bf16.gmra.mrb[0].mxu0 %v4573
        %v4876 = vpop.f32.mrb[0].mxu0
        %v4877 = vadd.f32 0.0, %v4876
        %v4878 = vpop.f32.mrb[0].mxu0
        %v4879 = vadd.f32 0.0, %v4878
        %v4880 = vpop.f32.mrb[0].mxu0
        %v4881 = vadd.f32 0.0, %v4880
        %v4882 = vpop.f32.mrb[0].mxu0
        %v4883 = vadd.f32 0.0, %v4882
        %4884 = vmatprep.mubr.bf16.mxu0 %v4597
        %4885 = vmatmul.mubr.bf16.gmra.mrb[0].mxu0 %v4589
        %v4886 = vpop.f32.mrb[0].mxu0
        %v4887 = vadd.f32 0.0, %v4886
        %v4888 = vpop.f32.mrb[0].mxu0
        %v4889 = vadd.f32 0.0, %v4888
        %v4890 = vpop.f32.mrb[0].mxu0
        %v4891 = vadd.f32 0.0, %v4890
        %v4892 = vpop.f32.mrb[0].mxu0
        %v4893 = vadd.f32 0.0, %v4892
        %4894 = vmatprep.mubr.bf16.mxu0 %v4603
        %4895 = vmatmul.mubr.bf16.gmra.mrb[0].mxu0 %v4600
        %v4896 = vpop.f32.mrb[0].mxu0
        %v4897 = vadd.f32 0.0, %v4896
        %v4898 = vpop.f32.mrb[0].mxu0
        %v4899 = vadd.f32 0.0, %v4898
        %v4900 = vpop.f32.mrb[0].mxu0
        %v4901 = vadd.f32 0.0, %v4900
        %v4902 = vpop.f32.mrb[0].mxu0
        %v4903 = vadd.f32 0.0, %v4902
        %4904 = vdwg.mxu0
        %v4937 = vunpack.c.l.b16 %v4395
        %v4938 = vunpack.c.h.b16 %v4395
        %v4939 = vunpack.c.l.b16 %v4396
        %v4940 = vunpack.c.h.b16 %v4396
        %v4941 = vunpack.c.l.b16 %v4397
        %v4942 = vunpack.c.h.b16 %v4397
        %v4943 = vunpack.c.l.b16 %v4398
        %v4944 = vunpack.c.h.b16 %v4398
        %v4945 = vunpack.c.l.b16 %v4399
        %v4946 = vunpack.c.h.b16 %v4399
        %v4947 = vunpack.c.l.b16 %v4400
        %v4948 = vunpack.c.h.b16 %v4400
        %v4949 = vunpack.c.l.b16 %v4401
        %v4950 = vunpack.c.h.b16 %v4401
        %v4951 = vunpack.c.l.b16 %v4402
        %v4952 = vunpack.c.h.b16 %v4402
        %v4953 = vunpack.c.l.b16 %v4403
        %v4954 = vunpack.c.h.b16 %v4403
        %v4955 = vunpack.c.l.b16 %v4404
        %v4956 = vunpack.c.h.b16 %v4404
        %v4957 = vunpack.c.l.b16 %v4405
        %v4958 = vunpack.c.h.b16 %v4405
        %v4959 = vunpack.c.l.b16 %v4406
        %v4960 = vunpack.c.h.b16 %v4406
        %v4961 = vunpack.c.l.b16 %v4407
        %v4962 = vunpack.c.h.b16 %v4407
        %v4963 = vunpack.c.l.b16 %v4408
        %v4964 = vunpack.c.h.b16 %v4408
        %v4965 = vunpack.c.l.b16 %v4409
        %v4966 = vunpack.c.h.b16 %v4409
        %v4967 = vunpack.c.l.b16 %v4410
        %v4968 = vunpack.c.h.b16 %v4410
        %v4969 = vunpack.c.l.b16 %v4411
        %v4970 = vunpack.c.h.b16 %v4411
        %v4971 = vunpack.c.l.b16 %v4412
        %v4972 = vunpack.c.h.b16 %v4412
        %v4973 = vunpack.c.l.b16 %v4413
        %v4974 = vunpack.c.h.b16 %v4413
        %v4975 = vunpack.c.l.b16 %v4414
        %v4976 = vunpack.c.h.b16 %v4414
        %v4977 = vunpack.c.l.b16 %v4415
        %v4978 = vunpack.c.h.b16 %v4415
        %v4979 = vunpack.c.l.b16 %v4416
        %v4980 = vunpack.c.h.b16 %v4416
        %v4981 = vunpack.c.l.b16 %v4417
        %v4982 = vunpack.c.h.b16 %v4417
        %v4983 = vunpack.c.l.b16 %v4418
        %v4984 = vunpack.c.h.b16 %v4418
        %v4985 = vunpack.c.l.b16 %v4419
        %v4986 = vunpack.c.h.b16 %v4419
        %v4987 = vunpack.c.l.b16 %v4420
        %v4988 = vunpack.c.h.b16 %v4420
        %v4989 = vunpack.c.l.b16 %v4421
        %v4990 = vunpack.c.h.b16 %v4421
        %v4991 = vunpack.c.l.b16 %v4422
        %v4992 = vunpack.c.h.b16 %v4422
        %v4993 = vunpack.c.l.b16 %v4423
        %v4994 = vunpack.c.h.b16 %v4423
        %v4995 = vunpack.c.l.b16 %v4424
        %v4996 = vunpack.c.h.b16 %v4424
        %v4997 = vunpack.c.l.b16 %v4425
        %v4998 = vunpack.c.h.b16 %v4425
        %v4999 = vunpack.c.l.b16 %v4426
        %v5000 = vunpack.c.h.b16 %v4426
        %v5001 = vpack.c.b16 %v4939, %v4937
        %v5002 = vpack.c.b16 %v4940, %v4938
        %v5003 = vpack.c.b16 %v4943, %v4941
        %v5004 = vpack.c.b16 %v4944, %v4942
        %v5005 = vpack.c.b16 %v4947, %v4945
        %v5006 = vpack.c.b16 %v4948, %v4946
        %v5007 = vpack.c.b16 %v4951, %v4949
        %v5008 = vpack.c.b16 %v4952, %v4950
        %v5009 = vpack.c.b16 %v4955, %v4953
        %v5010 = vpack.c.b16 %v4956, %v4954
        %v5011 = vpack.c.b16 %v4959, %v4957
        %v5012 = vpack.c.b16 %v4960, %v4958
        %v5013 = vpack.c.b16 %v4963, %v4961
        %v5014 = vpack.c.b16 %v4964, %v4962
        %v5015 = vpack.c.b16 %v4967, %v4965
        %v5016 = vpack.c.b16 %v4968, %v4966
        %v5017 = vpack.c.b16 %v4971, %v4969
        %v5018 = vpack.c.b16 %v4972, %v4970
        %v5019 = vpack.c.b16 %v4975, %v4973
        %v5020 = vpack.c.b16 %v4976, %v4974
        %v5021 = vpack.c.b16 %v4979, %v4977
        %v5022 = vpack.c.b16 %v4980, %v4978
        %v5023 = vpack.c.b16 %v4983, %v4981
        %v5024 = vpack.c.b16 %v4984, %v4982
        %v5025 = vpack.c.b16 %v4987, %v4985
        %v5026 = vpack.c.b16 %v4988, %v4986
        %v5027 = vpack.c.b16 %v4991, %v4989
        %v5028 = vpack.c.b16 %v4992, %v4990
        %v5029 = vpack.c.b16 %v4995, %v4993
        %v5030 = vpack.c.b16 %v4996, %v4994
        %v5031 = vpack.c.b16 %v4999, %v4997
        %v5032 = vpack.c.b16 %v5000, %v4998
        %5065 = vmatprep.subr.bf16.mxu0 %v5002
        %5066 = vmatpush1.bf16.msra.mxu0 %v5001
        %5067 = vmatprep.subr.bf16.mxu0 %v5004
        %5068 = vmatpush1.bf16.msra.mxu0 %v5003
        %5069 = vmatprep.subr.bf16.mxu0 %v5006
        %5070 = vmatpush1.bf16.msra.mxu0 %v5005
        %5071 = vmatprep.subr.bf16.mxu0 %v5008
        %5072 = vmatpush1.bf16.msra.mxu0 %v5007
        %5073 = vmatprep.subr.bf16.mxu0 %v5010
        %5074 = vmatpush1.bf16.msra.mxu0 %v5009
        %5075 = vmatprep.subr.bf16.mxu0 %v5012
        %5076 = vmatpush1.bf16.msra.mxu0 %v5011
        %5077 = vmatprep.subr.bf16.mxu0 %v5014
        %5078 = vmatpush1.bf16.msra.mxu0 %v5013
        %5079 = vmatprep.subr.bf16.mxu0 %v5016
        %5080 = vmatpush1.bf16.msra.mxu0 %v5015
        %5081 = vmatprep.subr.bf16.mxu0 %v5018
        %5082 = vmatpush1.bf16.msra.mxu0 %v5017
        %5083 = vmatprep.subr.bf16.mxu0 %v5020
        %5084 = vmatpush1.bf16.msra.mxu0 %v5019
        %5085 = vmatprep.subr.bf16.mxu0 %v5022
        %5086 = vmatpush1.bf16.msra.mxu0 %v5021
        %5087 = vmatprep.subr.bf16.mxu0 %v5024
        %5088 = vmatpush1.bf16.msra.mxu0 %v5023
        %5089 = vmatprep.subr.bf16.mxu0 %v5026
        %5090 = vmatpush1.bf16.msra.mxu0 %v5025
        %5091 = vmatprep.subr.bf16.mxu0 %v5028
        %5092 = vmatpush1.bf16.msra.mxu0 %v5027
        %5093 = vmatprep.subr.bf16.mxu0 %v5030
        %5094 = vmatpush1.bf16.msra.mxu0 %v5029
        %5095 = vmatprep.subr.bf16.mxu0 %v5032
        %5096 = vmatpush1.bf16.msra.mxu0 %v5031
        %5097 = vmatprep.mubr.bf16.mxu0 %v4378
        %5098 = vmatmul.mubr.bf16.gmra.mrb[0].mxu0 %v4377
        %v5099 = vpop.f32.mrb[0].mxu0
        %v5100 = vadd.f32 %v4817, %v5099
        %v5101 = vpop.f32.mrb[0].mxu0
        %v5102 = vadd.f32 %v4819, %v5101
        %v5103 = vpop.f32.mrb[0].mxu0
        %v5104 = vadd.f32 %v4821, %v5103
        %v5105 = vpop.f32.mrb[0].mxu0
        %v5106 = vadd.f32 %v4823, %v5105
        %5107 = vmatprep.mubr.bf16.mxu0 %v4380
        %5108 = vmatmul.mubr.bf16.gmra.mrb[0].mxu0 %v4379
        %v5109 = vpop.f32.mrb[0].mxu0
        %v5110 = vadd.f32 %v4827, %v5109
        %v5111 = vpop.f32.mrb[0].mxu0
        %v5112 = vadd.f32 %v4829, %v5111
        %v5113 = vpop.f32.mrb[0].mxu0
        %v5114 = vadd.f32 %v4831, %v5113
        %v5115 = vpop.f32.mrb[0].mxu0
        %v5116 = vadd.f32 %v4833, %v5115
        %5117 = vmatprep.mubr.bf16.mxu0 %v4382
        %5118 = vmatmul.mubr.bf16.gmra.mrb[0].mxu0 %v4381
        %v5119 = vpop.f32.mrb[0].mxu0
        %v5120 = vadd.f32 %v4837, %v5119
        %v5121 = vpop.f32.mrb[0].mxu0
        %v5122 = vadd.f32 %v4839, %v5121
        %v5123 = vpop.f32.mrb[0].mxu0
        %v5124 = vadd.f32 %v4841, %v5123
        %v5125 = vpop.f32.mrb[0].mxu0
        %v5126 = vadd.f32 %v4843, %v5125
        %5127 = vmatprep.mubr.bf16.mxu0 %v4384
        %5128 = vmatmul.mubr.bf16.gmra.mrb[0].mxu0 %v4383
        %v5129 = vpop.f32.mrb[0].mxu0
        %v5130 = vadd.f32 %v4847, %v5129
        %v5131 = vpop.f32.mrb[0].mxu0
        %v5132 = vadd.f32 %v4849, %v5131
        %v5133 = vpop.f32.mrb[0].mxu0
        %v5134 = vadd.f32 %v4851, %v5133
        %v5135 = vpop.f32.mrb[0].mxu0
        %v5136 = vadd.f32 %v4853, %v5135
        %5137 = vmatprep.mubr.bf16.mxu0 %v4386
        %5138 = vmatmul.mubr.bf16.gmra.mrb[0].mxu0 %v4385
        %v5139 = vpop.f32.mrb[0].mxu0
        %v5140 = vadd.f32 %v4857, %v5139
        %v5141 = vpop.f32.mrb[0].mxu0
        %v5142 = vadd.f32 %v4859, %v5141
        %v5143 = vpop.f32.mrb[0].mxu0
        %v5144 = vadd.f32 %v4861, %v5143
        %v5145 = vpop.f32.mrb[0].mxu0
        %v5146 = vadd.f32 %v4863, %v5145
        %5147 = vmatprep.mubr.bf16.mxu0 %v4388
        %5148 = vmatmul.mubr.bf16.gmra.mrb[0].mxu0 %v4387
        %v5149 = vpop.f32.mrb[0].mxu0
        %v5150 = vadd.f32 %v4867, %v5149
        %v5151 = vpop.f32.mrb[0].mxu0
        %v5152 = vadd.f32 %v4869, %v5151
        %v5153 = vpop.f32.mrb[0].mxu0
        %v5154 = vadd.f32 %v4871, %v5153
        %v5155 = vpop.f32.mrb[0].mxu0
        %v5156 = vadd.f32 %v4873, %v5155
        %5157 = vmatprep.mubr.bf16.mxu0 %v4390
        %5158 = vmatmul.mubr.bf16.gmra.mrb[0].mxu0 %v4389
        %v5159 = vpop.f32.mrb[0].mxu0
        %v5160 = vadd.f32 %v4877, %v5159
        %v5161 = vpop.f32.mrb[0].mxu0
        %v5162 = vadd.f32 %v4879, %v5161
        %v5163 = vpop.f32.mrb[0].mxu0
        %v5164 = vadd.f32 %v4881, %v5163
        %v5165 = vpop.f32.mrb[0].mxu0
        %v5166 = vadd.f32 %v4883, %v5165
        %5167 = vmatprep.mubr.bf16.mxu0 %v4392
        %5168 = vmatmul.mubr.bf16.gmra.mrb[0].mxu0 %v4391
        %v5169 = vpop.f32.mrb[0].mxu0
        %v5170 = vadd.f32 %v4887, %v5169
        %v5171 = vpop.f32.mrb[0].mxu0
        %v5172 = vadd.f32 %v4889, %v5171
        %v5173 = vpop.f32.mrb[0].mxu0
        %v5174 = vadd.f32 %v4891, %v5173
        %v5175 = vpop.f32.mrb[0].mxu0
        %v5176 = vadd.f32 %v4893, %v5175
        %5177 = vmatprep.mubr.bf16.mxu0 %v4394
        %5178 = vmatmul.mubr.bf16.gmra.mrb[0].mxu0 %v4393
        %v5179 = vpop.f32.mrb[0].mxu0
        %v5180 = vadd.f32 %v4897, %v5179
        %v5181 = vpop.f32.mrb[0].mxu0
        %v5182 = vadd.f32 %v4899, %v5181
        %v5183 = vpop.f32.mrb[0].mxu0
        %v5184 = vadd.f32 %v4901, %v5183
        %v5185 = vpop.f32.mrb[0].mxu0
        %v5186 = vadd.f32 %v4903, %v5185
        %5187 = vdwg.mxu0
        %v5188 = vld [vmem:[#allocation2] sm:$0xfe]
        %v5189 = vld [vmem:[#allocation2 + $0x8] sm:$0xfe]
        %s5190 = scalar_lea.vmem [#allocation11], 512
        %v5191 = vld [vmem:[%s5190] sm:$0xff]
        %v5192 = vld [vmem:[%s5190 + $0x8] sm:$0xff]
        %v5193 = vld [vmem:[%s5190 + $0x10] sm:$0xff]
        %v5194 = vld [vmem:[%s5190 + $0x18] sm:$0xff]
        %v5195 = vld [vmem:[%s5190 + $0x20] sm:$0xff]
        %v5196 = vld [vmem:[%s5190 + $0x28] sm:$0xff]
        %v5197 = vld [vmem:[%s5190 + $0x30] sm:$0xff]
        %v5198 = vld [vmem:[%s5190 + $0x38] sm:$0xff]
        %v5199 = vld [vmem:[%s5190 + $0x40] sm:$0xff]
        %v5200 = vld [vmem:[%s5190 + $0x48] sm:$0xff]
        %v5201 = vld [vmem:[%s5190 + $0x50] sm:$0xff]
        %v5202 = vld [vmem:[%s5190 + $0x58] sm:$0xff]
        %v5203 = vld [vmem:[%s5190 + $0x60] sm:$0xff]
        %v5204 = vld [vmem:[%s5190 + $0x68] sm:$0xff]
        %v5205 = vld [vmem:[%s5190 + $0x70] sm:$0xff]
        %v5206 = vld [vmem:[%s5190 + $0x78] sm:$0xff]
        %v5207 = vld [vmem:[%s5190 + $0x80] sm:$0xff]
        %v5208 = vld [vmem:[%s5190 + $0x88] sm:$0xff]
        %v5209 = vld [vmem:[%s5190 + $0x90] sm:$0xff]
        %v5210 = vld [vmem:[%s5190 + $0x98] sm:$0xff]
        %v5211 = vld [vmem:[%s5190 + $0xa0] sm:$0xff]
        %v5212 = vld [vmem:[%s5190 + $0xa8] sm:$0xff]
        %v5213 = vld [vmem:[%s5190 + $0xb0] sm:$0xff]
        %v5214 = vld [vmem:[%s5190 + $0xb8] sm:$0xff]
        %v5215 = vld [vmem:[%s5190 + $0xc0] sm:$0xff]
        %v5216 = vld [vmem:[%s5190 + $0xc8] sm:$0xff]
        %v5217 = vld [vmem:[%s5190 + $0xd0] sm:$0xff]
        %v5218 = vld [vmem:[%s5190 + $0xd8] sm:$0xff]
        %v5219 = vld [vmem:[%s5190 + $0xe0] sm:$0xff]
        %v5220 = vld [vmem:[%s5190 + $0xe8] sm:$0xff]
        %v5221 = vld [vmem:[%s5190 + $0xf0] sm:$0xff]
        %v5222 = vld [vmem:[%s5190 + $0xf8] sm:$0xff]
        %v5241 = vrot.slane %v5188, 1
        %v5242 = vrot.slane %v4379, 1
        %v5243 = vsel %vm1869, %v5241, %v5242
        %v5244 = vrot.slane %v5189, 1
        %v5245 = vrot.slane %v4380, 1
        %v5246 = vsel %vm1869, %v5244, %v5245
        %v5247 = vrot.slane %v4381, 1
        %v5248 = vsel %vm1869, %v5242, %v5247
        %v5249 = vrot.slane %v4382, 1
        %v5250 = vsel %vm1869, %v5245, %v5249
        %v5251 = vrot.slane %v4383, 1
        %v5252 = vsel %vm1869, %v5247, %v5251
        %v5253 = vrot.slane %v4384, 1
        %v5254 = vsel %vm1869, %v5249, %v5253
        %v5255 = vrot.slane %v4385, 1
        %v5256 = vsel %vm1869, %v5251, %v5255
        %v5257 = vrot.slane %v4386, 1
        %v5258 = vsel %vm1869, %v5253, %v5257
        %v5259 = vrot.slane %v4387, 1
        %v5260 = vsel %vm1869, %v5255, %v5259
        %v5261 = vrot.slane %v4388, 1
        %v5262 = vsel %vm1869, %v5257, %v5261
        %v5263 = vrot.slane %v4389, 1
        %v5264 = vsel %vm1869, %v5259, %v5263
        %v5265 = vrot.slane %v4390, 1
        %v5266 = vsel %vm1869, %v5261, %v5265
        %v5267 = vrot.slane %v4391, 1
        %v5268 = vsel %vm1869, %v5263, %v5267
        %v5269 = vrot.slane %v4392, 1
        %v5270 = vsel %vm1869, %v5265, %v5269
        %v5271 = vrot.slane %v4427, 1
        %v5272 = vsel %vm1869, %v5267, %v5271
        %v5273 = vrot.slane %v4428, 1
        %v5274 = vsel %vm1869, %v5269, %v5273
        %v5325 = vunpack.c.l.b16 %v5191
        %v5326 = vunpack.c.h.b16 %v5191
        %v5327 = vunpack.c.l.b16 %v5192
        %v5328 = vunpack.c.h.b16 %v5192
        %v5329 = vunpack.c.l.b16 %v5193
        %v5330 = vunpack.c.h.b16 %v5193
        %v5331 = vunpack.c.l.b16 %v5194
        %v5332 = vunpack.c.h.b16 %v5194
        %v5333 = vunpack.c.l.b16 %v5195
        %v5334 = vunpack.c.h.b16 %v5195
        %v5335 = vunpack.c.l.b16 %v5196
        %v5336 = vunpack.c.h.b16 %v5196
        %v5337 = vunpack.c.l.b16 %v5197
        %v5338 = vunpack.c.h.b16 %v5197
        %v5339 = vunpack.c.l.b16 %v5198
        %v5340 = vunpack.c.h.b16 %v5198
        %v5341 = vunpack.c.l.b16 %v5199
        %v5342 = vunpack.c.h.b16 %v5199
        %v5343 = vunpack.c.l.b16 %v5200
        %v5344 = vunpack.c.h.b16 %v5200
        %v5345 = vunpack.c.l.b16 %v5201
        %v5346 = vunpack.c.h.b16 %v5201
        %v5347 = vunpack.c.l.b16 %v5202
        %v5348 = vunpack.c.h.b16 %v5202
        %v5349 = vunpack.c.l.b16 %v5203
        %v5350 = vunpack.c.h.b16 %v5203
        %v5351 = vunpack.c.l.b16 %v5204
        %v5352 = vunpack.c.h.b16 %v5204
        %v5353 = vunpack.c.l.b16 %v5205
        %v5354 = vunpack.c.h.b16 %v5205
        %v5355 = vunpack.c.l.b16 %v5206
        %v5356 = vunpack.c.h.b16 %v5206
        %v5357 = vunpack.c.l.b16 %v5207
        %v5358 = vunpack.c.h.b16 %v5207
        %v5359 = vunpack.c.l.b16 %v5208
        %v5360 = vunpack.c.h.b16 %v5208
        %v5361 = vunpack.c.l.b16 %v5209
        %v5362 = vunpack.c.h.b16 %v5209
        %v5363 = vunpack.c.l.b16 %v5210
        %v5364 = vunpack.c.h.b16 %v5210
        %v5365 = vunpack.c.l.b16 %v5211
        %v5366 = vunpack.c.h.b16 %v5211
        %v5367 = vunpack.c.l.b16 %v5212
        %v5368 = vunpack.c.h.b16 %v5212
        %v5369 = vunpack.c.l.b16 %v5213
        %v5370 = vunpack.c.h.b16 %v5213
        %v5371 = vunpack.c.l.b16 %v5214
        %v5372 = vunpack.c.h.b16 %v5214
        %v5373 = vunpack.c.l.b16 %v5215
        %v5374 = vunpack.c.h.b16 %v5215
        %v5375 = vunpack.c.l.b16 %v5216
        %v5376 = vunpack.c.h.b16 %v5216
        %v5377 = vunpack.c.l.b16 %v5217
        %v5378 = vunpack.c.h.b16 %v5217
        %v5379 = vunpack.c.l.b16 %v5218
        %v5380 = vunpack.c.h.b16 %v5218
        %v5381 = vunpack.c.l.b16 %v5219
        %v5382 = vunpack.c.h.b16 %v5219
        %v5383 = vunpack.c.l.b16 %v5220
        %v5384 = vunpack.c.h.b16 %v5220
        %v5385 = vunpack.c.l.b16 %v5221
        %v5386 = vunpack.c.h.b16 %v5221
        %v5387 = vunpack.c.l.b16 %v5222
        %v5388 = vunpack.c.h.b16 %v5222
        %v5389 = vpack.c.b16 %v5327, %v5325
        %v5390 = vpack.c.b16 %v5328, %v5326
        %v5391 = vpack.c.b16 %v5331, %v5329
        %v5392 = vpack.c.b16 %v5332, %v5330
        %v5393 = vpack.c.b16 %v5335, %v5333
        %v5394 = vpack.c.b16 %v5336, %v5334
        %v5395 = vpack.c.b16 %v5339, %v5337
        %v5396 = vpack.c.b16 %v5340, %v5338
        %v5397 = vpack.c.b16 %v5343, %v5341
        %v5398 = vpack.c.b16 %v5344, %v5342
        %v5399 = vpack.c.b16 %v5347, %v5345
        %v5400 = vpack.c.b16 %v5348, %v5346
        %v5401 = vpack.c.b16 %v5351, %v5349
        %v5402 = vpack.c.b16 %v5352, %v5350
        %v5403 = vpack.c.b16 %v5355, %v5353
        %v5404 = vpack.c.b16 %v5356, %v5354
        %v5405 = vpack.c.b16 %v5359, %v5357
        %v5406 = vpack.c.b16 %v5360, %v5358
        %v5407 = vpack.c.b16 %v5363, %v5361
        %v5408 = vpack.c.b16 %v5364, %v5362
        %v5409 = vpack.c.b16 %v5367, %v5365
        %v5410 = vpack.c.b16 %v5368, %v5366
        %v5411 = vpack.c.b16 %v5371, %v5369
        %v5412 = vpack.c.b16 %v5372, %v5370
        %v5413 = vpack.c.b16 %v5375, %v5373
        %v5414 = vpack.c.b16 %v5376, %v5374
        %v5415 = vpack.c.b16 %v5379, %v5377
        %v5416 = vpack.c.b16 %v5380, %v5378
        %v5417 = vpack.c.b16 %v5383, %v5381
        %v5418 = vpack.c.b16 %v5384, %v5382
        %v5419 = vpack.c.b16 %v5387, %v5385
        %v5420 = vpack.c.b16 %v5388, %v5386
        %5453 = vmatprep.subr.bf16.mxu0 %v5390
        %5454 = vmatpush1.bf16.msra.mxu0 %v5389
        %5455 = vmatprep.subr.bf16.mxu0 %v5392
        %5456 = vmatpush1.bf16.msra.mxu0 %v5391
        %5457 = vmatprep.subr.bf16.mxu0 %v5394
        %5458 = vmatpush1.bf16.msra.mxu0 %v5393
        %5459 = vmatprep.subr.bf16.mxu0 %v5396
        %5460 = vmatpush1.bf16.msra.mxu0 %v5395
        %5461 = vmatprep.subr.bf16.mxu0 %v5398
        %5462 = vmatpush1.bf16.msra.mxu0 %v5397
        %5463 = vmatprep.subr.bf16.mxu0 %v5400
        %5464 = vmatpush1.bf16.msra.mxu0 %v5399
        %5465 = vmatprep.subr.bf16.mxu0 %v5402
        %5466 = vmatpush1.bf16.msra.mxu0 %v5401
        %5467 = vmatprep.subr.bf16.mxu0 %v5404
        %5468 = vmatpush1.bf16.msra.mxu0 %v5403
        %5469 = vmatprep.subr.bf16.mxu0 %v5406
        %5470 = vmatpush1.bf16.msra.mxu0 %v5405
        %5471 = vmatprep.subr.bf16.mxu0 %v5408
        %5472 = vmatpush1.bf16.msra.mxu0 %v5407
        %5473 = vmatprep.subr.bf16.mxu0 %v5410
        %5474 = vmatpush1.bf16.msra.mxu0 %v5409
        %5475 = vmatprep.subr.bf16.mxu0 %v5412
        %5476 = vmatpush1.bf16.msra.mxu0 %v5411
        %5477 = vmatprep.subr.bf16.mxu0 %v5414
        %5478 = vmatpush1.bf16.msra.mxu0 %v5413
        %5479 = vmatprep.subr.bf16.mxu0 %v5416
        %5480 = vmatpush1.bf16.msra.mxu0 %v5415
        %5481 = vmatprep.subr.bf16.mxu0 %v5418
        %5482 = vmatpush1.bf16.msra.mxu0 %v5417
        %5483 = vmatprep.subr.bf16.mxu0 %v5420
        %5484 = vmatpush1.bf16.msra.mxu0 %v5419
        %5485 = vmatprep.mubr.bf16.mxu0 %v5246
        %5486 = vmatmul.mubr.bf16.gmra.mrb[0].mxu0 %v5243
        %v5487 = vpop.f32.mrb[0].mxu0
        %v5488 = vadd.f32 0.0, %v5487
        %v5489 = vpop.f32.mrb[0].mxu0
        %v5490 = vadd.f32 0.0, %v5489
        %v5491 = vpop.f32.mrb[0].mxu0
        %v5492 = vadd.f32 0.0, %v5491
        %v5493 = vpop.f32.mrb[0].mxu0
        %v5494 = vadd.f32 0.0, %v5493
        %5495 = vmatprep.mubr.bf16.mxu0 %v5250
        %5496 = vmatmul.mubr.bf16.gmra.mrb[0].mxu0 %v5248
        %v5497 = vpop.f32.mrb[0].mxu0
        %v5498 = vadd.f32 0.0, %v5497
        %v5499 = vpop.f32.mrb[0].mxu0
        %v5500 = vadd.f32 0.0, %v5499
        %v5501 = vpop.f32.mrb[0].mxu0
        %v5502 = vadd.f32 0.0, %v5501
        %v5503 = vpop.f32.mrb[0].mxu0
        %v5504 = vadd.f32 0.0, %v5503
        %5505 = vmatprep.mubr.bf16.mxu0 %v5254
        %5506 = vmatmul.mubr.bf16.gmra.mrb[0].mxu0 %v5252
        %v5507 = vpop.f32.mrb[0].mxu0
        %v5508 = vadd.f32 0.0, %v5507
        %v5509 = vpop.f32.mrb[0].mxu0
        %v5510 = vadd.f32 0.0, %v5509
        %v5511 = vpop.f32.mrb[0].mxu0
        %v5512 = vadd.f32 0.0, %v5511
        %v5513 = vpop.f32.mrb[0].mxu0
        %v5514 = vadd.f32 0.0, %v5513
        %5515 = vmatprep.mubr.bf16.mxu0 %v5258
        %5516 = vmatmul.mubr.bf16.gmra.mrb[0].mxu0 %v5256
        %v5517 = vpop.f32.mrb[0].mxu0
        %v5518 = vadd.f32 0.0, %v5517
        %v5519 = vpop.f32.mrb[0].mxu0
        %v5520 = vadd.f32 0.0, %v5519
        %v5521 = vpop.f32.mrb[0].mxu0
        %v5522 = vadd.f32 0.0, %v5521
        %v5523 = vpop.f32.mrb[0].mxu0
        %v5524 = vadd.f32 0.0, %v5523
        %5525 = vmatprep.mubr.bf16.mxu0 %v5262
        %5526 = vmatmul.mubr.bf16.gmra.mrb[0].mxu0 %v5260
        %v5527 = vpop.f32.mrb[0].mxu0
        %v5528 = vadd.f32 0.0, %v5527
        %v5529 = vpop.f32.mrb[0].mxu0
        %v5530 = vadd.f32 0.0, %v5529
        %v5531 = vpop.f32.mrb[0].mxu0
        %v5532 = vadd.f32 0.0, %v5531
        %v5533 = vpop.f32.mrb[0].mxu0
        %v5534 = vadd.f32 0.0, %v5533
        %5535 = vmatprep.mubr.bf16.mxu0 %v5266
        %5536 = vmatmul.mubr.bf16.gmra.mrb[0].mxu0 %v5264
        %v5537 = vpop.f32.mrb[0].mxu0
        %v5538 = vadd.f32 0.0, %v5537
        %v5539 = vpop.f32.mrb[0].mxu0
        %v5540 = vadd.f32 0.0, %v5539
        %v5541 = vpop.f32.mrb[0].mxu0
        %v5542 = vadd.f32 0.0, %v5541
        %v5543 = vpop.f32.mrb[0].mxu0
        %v5544 = vadd.f32 0.0, %v5543
        %5545 = vmatprep.mubr.bf16.mxu0 %v5270
        %5546 = vmatmul.mubr.bf16.gmra.mrb[0].mxu0 %v5268
        %v5547 = vpop.f32.mrb[0].mxu0
        %v5548 = vadd.f32 0.0, %v5547
        %v5549 = vpop.f32.mrb[0].mxu0
        %v5550 = vadd.f32 0.0, %v5549
        %v5551 = vpop.f32.mrb[0].mxu0
        %v5552 = vadd.f32 0.0, %v5551
        %v5553 = vpop.f32.mrb[0].mxu0
        %v5554 = vadd.f32 0.0, %v5553
        %5555 = vmatprep.mubr.bf16.mxu0 %v5274
        %5556 = vmatmul.mubr.bf16.gmra.mrb[0].mxu0 %v5272
        %v5557 = vpop.f32.mrb[0].mxu0
        %v5558 = vadd.f32 0.0, %v5557
        %v5559 = vpop.f32.mrb[0].mxu0
        %v5560 = vadd.f32 0.0, %v5559
        %v5561 = vpop.f32.mrb[0].mxu0
        %v5562 = vadd.f32 0.0, %v5561
        %v5563 = vpop.f32.mrb[0].mxu0
        %v5564 = vadd.f32 0.0, %v5563
        %5565 = vmatprep.mubr.bf16.mxu0 %v5273
        %5566 = vmatmul.mubr.bf16.gmra.mrb[0].mxu0 %v5271
        %v5567 = vpop.f32.mrb[0].mxu0
        %v5568 = vadd.f32 0.0, %v5567
        %v5569 = vpop.f32.mrb[0].mxu0
        %v5570 = vadd.f32 0.0, %v5569
        %v5571 = vpop.f32.mrb[0].mxu0
        %v5572 = vadd.f32 0.0, %v5571
        %v5573 = vpop.f32.mrb[0].mxu0
        %v5574 = vadd.f32 0.0, %v5573
        %5575 = vdwg.mxu0
        %v5576 = vadd.f32 %v5100, %v5488
        %v5577 = vadd.f32 %v5102, %v5490
        %v5578 = vadd.f32 %v5104, %v5492
        %v5579 = vadd.f32 %v5106, %v5494
        %v5580 = vadd.f32 %v5110, %v5498
        %v5581 = vadd.f32 %v5112, %v5500
        %v5582 = vadd.f32 %v5114, %v5502
        %v5583 = vadd.f32 %v5116, %v5504
        %v5584 = vadd.f32 %v5120, %v5508
        %v5585 = vadd.f32 %v5122, %v5510
        %v5586 = vadd.f32 %v5124, %v5512
        %v5587 = vadd.f32 %v5126, %v5514
        %v5588 = vadd.f32 %v5130, %v5518
        %v5589 = vadd.f32 %v5132, %v5520
        %v5590 = vadd.f32 %v5134, %v5522
        %v5591 = vadd.f32 %v5136, %v5524
        %v5592 = vadd.f32 %v5140, %v5528
        %v5593 = vadd.f32 %v5142, %v5530
        %v5594 = vadd.f32 %v5144, %v5532
        %v5595 = vadd.f32 %v5146, %v5534
        %v5596 = vadd.f32 %v5150, %v5538
        %v5597 = vadd.f32 %v5152, %v5540
        %v5598 = vadd.f32 %v5154, %v5542
        %v5599 = vadd.f32 %v5156, %v5544
        %v5600 = vadd.f32 %v5160, %v5548
        %v5601 = vadd.f32 %v5162, %v5550
        %v5602 = vadd.f32 %v5164, %v5552
        %v5603 = vadd.f32 %v5166, %v5554
        %v5604 = vadd.f32 %v5170, %v5558
        %v5605 = vadd.f32 %v5172, %v5560
        %v5606 = vadd.f32 %v5174, %v5562
        %v5607 = vadd.f32 %v5176, %v5564
        %v5608 = vadd.f32 %v5180, %v5568
        %v5609 = vadd.f32 %v5182, %v5570
        %v5610 = vadd.f32 %v5184, %v5572
        %v5611 = vadd.f32 %v5186, %v5574
        %v5612 = vld [vmem:[%s12] sm:$0xff]
        %v5613 = vld [vmem:[%s12 + $0x8] sm:$0xff]
        %v5614 = vld [vmem:[%s12 + $0x10] sm:$0xff]
        %v5615 = vld [vmem:[%s12 + $0x18] sm:$0xff]
        %v5616 = vld [vmem:[%s12 + $0x20] sm:$0xff]
        %v5617 = vld [vmem:[%s12 + $0x28] sm:$0xff]
        %v5618 = vld [vmem:[%s12 + $0x30] sm:$0xff]
        %v5619 = vld [vmem:[%s12 + $0x38] sm:$0xff]
        %v5620 = vld [vmem:[%s12 + $0x40] sm:$0xff]
        %v5621 = vld [vmem:[%s12 + $0x48] sm:$0xff]
        %v5622 = vld [vmem:[%s12 + $0x50] sm:$0xff]
        %v5623 = vld [vmem:[%s12 + $0x58] sm:$0xff]
        %v5624 = vld [vmem:[%s12 + $0x60] sm:$0xff]
        %v5625 = vld [vmem:[%s12 + $0x68] sm:$0xff]
        %v5626 = vld [vmem:[%s12 + $0x70] sm:$0xff]
        %v5627 = vld [vmem:[%s12 + $0x78] sm:$0xff]
        %v5628 = vpack.c.bf16 %v559, %v557
        %v5629 = vpack.c.bf16 %v560, %v558
        %v5630 = vpack.c.bf16 %v563, %v561
        %v5631 = vpack.c.bf16 %v564, %v562
        %v5632 = vpack.c.bf16 %v567, %v565
        %v5633 = vpack.c.bf16 %v568, %v566
        %v5634 = vpack.c.bf16 %v571, %v569
        %v5635 = vpack.c.bf16 %v572, %v570
        %v5636 = vpack.c.bf16 %v575, %v573
        %v5637 = vpack.c.bf16 %v576, %v574
        %v5638 = vpack.c.bf16 %v579, %v577
        %v5639 = vpack.c.bf16 %v580, %v578
        %v5640 = vpack.c.bf16 %v583, %v581
        %v5641 = vpack.c.bf16 %v584, %v582
        %v5642 = vpack.c.bf16 %v587, %v585
        %v5643 = vpack.c.bf16 %v588, %v586
        %v5644 = vld [vmem:[%s13] sm:$0xf]
        %v5645 = vld [vmem:[%s13 + $0x4] sm:$0xf]
        %v5646 = vld [vmem:[%s13 + $0x8] sm:$0xf]
        %v5647 = vld [vmem:[%s13 + $0xc] sm:$0xf]
        %v5648 = vld [vmem:[%s13 + $0x10] sm:$0xf]
        %v5649 = vld [vmem:[%s13 + $0x14] sm:$0xf]
        %v5650 = vld [vmem:[%s13 + $0x18] sm:$0xf]
        %v5651 = vld [vmem:[%s13 + $0x1c] sm:$0xf]
        %v5660 = vunpack.c.l.b16 %v5644
        %v5661 = vunpack.c.l.b16 %v5645
        %v5662 = vunpack.c.l.b16 %v5646
        %v5663 = vunpack.c.l.b16 %v5647
        %v5664 = vunpack.c.l.b16 %v5648
        %v5665 = vunpack.c.l.b16 %v5649
        %v5666 = vunpack.c.l.b16 %v5650
        %v5667 = vunpack.c.l.b16 %v5651
        %v5668 = vpack.c.b16 %v5661, %v5660
        %v5669 = vpack.c.b16 %v5663, %v5662
        %v5670 = vpack.c.b16 %v5665, %v5664
        %v5671 = vpack.c.b16 %v5667, %v5666
        %5676 = vmatprep.subr.bf16.mxu0 %v5629
        %5677 = vmatpush1.bf16.msra.mxu0 %v5628
        %5678 = vmatprep.subr.bf16.mxu0 %v5631
        %5679 = vmatpush1.bf16.msra.mxu0 %v5630
        %5680 = vmatprep.subr.bf16.mxu0 %v5633
        %5681 = vmatpush1.bf16.msra.mxu0 %v5632
        %5682 = vmatprep.subr.bf16.mxu0 %v5635
        %5683 = vmatpush1.bf16.msra.mxu0 %v5634
        %5684 = vmatprep.subr.bf16.mxu0 %v5637
        %5685 = vmatpush1.bf16.msra.mxu0 %v5636
        %5686 = vmatprep.subr.bf16.mxu0 %v5639
        %5687 = vmatpush1.bf16.msra.mxu0 %v5638
        %5688 = vmatprep.subr.bf16.mxu0 %v5641
        %5689 = vmatpush1.bf16.msra.mxu0 %v5640
        %5690 = vmatprep.subr.bf16.mxu0 %v5643
        %5691 = vmatpush1.bf16.msra.mxu0 %v5642
        %5692 = vmatprep.subr.bf16.mxu0 0
        %5693 = vmatpush1.bf16.msra.mxu0 0
        %5694 = vmatprep.subr.bf16.mxu0 0
        %5695 = vmatpush1.bf16.msra.mxu0 0
        %5696 = vmatprep.subr.bf16.mxu0 0
        %5697 = vmatpush1.bf16.msra.mxu0 0
        %5698 = vmatprep.subr.bf16.mxu0 0
        %5699 = vmatpush1.bf16.msra.mxu0 0
        %5700 = vmatprep.subr.bf16.mxu0 0
        %5701 = vmatpush1.bf16.msra.mxu0 0
        %5702 = vmatprep.subr.bf16.mxu0 0
        %5703 = vmatpush1.bf16.msra.mxu0 0
        %5704 = vmatprep.subr.bf16.mxu0 0
        %5705 = vmatpush1.bf16.msra.mxu0 0
        %5706 = vmatprep.subr.bf16.mxu0 0
        %5707 = vmatpush1.bf16.msra.mxu0 0
        %5708 = vmatprep.mubr.bf16.mxu0 0
        %5709 = vmatmul.mubr.bf16.gmra.mrb[0].mxu0 %v5668
        %v5710 = vpop.f32.mrb[0].mxu0
        %v5711 = vadd.f32 0.0, %v5710
        %v5712 = vpop.f32.mrb[0].mxu0
        %v5713 = vadd.f32 0.0, %v5712
        %v5714 = vpop.f32.mrb[0].mxu0
        %v5715 = vadd.f32 0.0, %v5714
        %v5716 = vpop.f32.mrb[0].mxu0
        %v5717 = vadd.f32 0.0, %v5716
        %5718 = vmatprep.mubr.bf16.mxu0 0
        %5719 = vmatmul.mubr.bf16.gmra.mrb[0].mxu0 %v5669
        %v5720 = vpop.f32.mrb[0].mxu0
        %v5721 = vadd.f32 0.0, %v5720
        %v5722 = vpop.f32.mrb[0].mxu0
        %v5723 = vadd.f32 0.0, %v5722
        %v5724 = vpop.f32.mrb[0].mxu0
        %v5725 = vadd.f32 0.0, %v5724
        %v5726 = vpop.f32.mrb[0].mxu0
        %v5727 = vadd.f32 0.0, %v5726
        %5728 = vmatprep.mubr.bf16.mxu0 0
        %5729 = vmatmul.mubr.bf16.gmra.mrb[0].mxu0 %v5670
        %v5730 = vpop.f32.mrb[0].mxu0
        %v5731 = vadd.f32 0.0, %v5730
        %v5732 = vpop.f32.mrb[0].mxu0
        %v5733 = vadd.f32 0.0, %v5732
        %v5734 = vpop.f32.mrb[0].mxu0
        %v5735 = vadd.f32 0.0, %v5734
        %v5736 = vpop.f32.mrb[0].mxu0
        %v5737 = vadd.f32 0.0, %v5736
        %5738 = vmatprep.mubr.bf16.mxu0 0
        %5739 = vmatmul.mubr.bf16.gmra.mrb[0].mxu0 %v5671
        %v5740 = vpop.f32.mrb[0].mxu0
        %v5741 = vadd.f32 0.0, %v5740
        %v5742 = vpop.f32.mrb[0].mxu0
        %v5743 = vadd.f32 0.0, %v5742
        %v5744 = vpop.f32.mrb[0].mxu0
        %v5745 = vadd.f32 0.0, %v5744
        %v5746 = vpop.f32.mrb[0].mxu0
        %v5747 = vadd.f32 0.0, %v5746
        %5748 = vdwg.mxu0
        %v5749 = vpack.c.bf16 %v5715, %v5711
        %v5750 = vpack.c.bf16 %v5717, %v5713
        %v5751 = vpack.c.bf16 %v5725, %v5721
        %v5752 = vpack.c.bf16 %v5727, %v5723
        %v5753 = vpack.c.bf16 %v5735, %v5731
        %v5754 = vpack.c.bf16 %v5737, %v5733
        %v5755 = vpack.c.bf16 %v5745, %v5741
        %v5756 = vpack.c.bf16 %v5747, %v5743
        %v5757 = vld [vmem:[%s8] sm:$0xff]
        %v5758 = vld [vmem:[%s8 + $0x8] sm:$0xff]
        %v5759 = vld [vmem:[%s8 + $0x10] sm:$0xff]
        %v5760 = vld [vmem:[%s8 + $0x18] sm:$0xff]
        %v5761 = vld [vmem:[%s8 + $0x20] sm:$0xff]
        %v5762 = vld [vmem:[%s8 + $0x28] sm:$0xff]
        %v5763 = vld [vmem:[%s8 + $0x30] sm:$0xff]
        %v5764 = vld [vmem:[%s8 + $0x38] sm:$0xff]
        %v5765 = vld [vmem:[%s8 + $0x40] sm:$0xff]
        %v5766 = vld [vmem:[%s8 + $0x48] sm:$0xff]
        %v5767 = vld [vmem:[%s8 + $0x50] sm:$0xff]
        %v5768 = vld [vmem:[%s8 + $0x58] sm:$0xff]
        %v5769 = vld [vmem:[%s8 + $0x60] sm:$0xff]
        %v5770 = vld [vmem:[%s8 + $0x68] sm:$0xff]
        %v5771 = vld [vmem:[%s8 + $0x70] sm:$0xff]
        %v5772 = vld [vmem:[%s8 + $0x78] sm:$0xff]
        %v5773 = vld [vmem:[%s8 + $0x80] sm:$0xff]
        %v5774 = vld [vmem:[%s8 + $0x88] sm:$0xff]
        %v5775 = vld [vmem:[%s8 + $0x90] sm:$0xff]
        %v5776 = vld [vmem:[%s8 + $0x98] sm:$0xff]
        %v5777 = vld [vmem:[%s8 + $0xa0] sm:$0xff]
        %v5778 = vld [vmem:[%s8 + $0xa8] sm:$0xff]
        %v5779 = vld [vmem:[%s8 + $0xb0] sm:$0xff]
        %v5780 = vld [vmem:[%s8 + $0xb8] sm:$0xff]
        %v5781 = vld [vmem:[%s8 + $0xc0] sm:$0xff]
        %v5782 = vld [vmem:[%s8 + $0xc8] sm:$0xff]
        %v5783 = vld [vmem:[%s8 + $0xd0] sm:$0xff]
        %v5784 = vld [vmem:[%s8 + $0xd8] sm:$0xff]
        %v5785 = vld [vmem:[%s8 + $0xe0] sm:$0xff]
        %v5786 = vld [vmem:[%s8 + $0xe8] sm:$0xff]
        %v5787 = vld [vmem:[%s8 + $0xf0] sm:$0xff]
        %v5788 = vld [vmem:[%s8 + $0xf8] sm:$0xff]
        %v5821 = vunpack.c.l.b16 %v5757
        %v5822 = vunpack.c.h.b16 %v5757
        %v5823 = vunpack.c.l.b16 %v5758
        %v5824 = vunpack.c.h.b16 %v5758
        %v5825 = vunpack.c.l.b16 %v5759
        %v5826 = vunpack.c.h.b16 %v5759
        %v5827 = vunpack.c.l.b16 %v5760
        %v5828 = vunpack.c.h.b16 %v5760
        %v5829 = vunpack.c.l.b16 %v5761
        %v5830 = vunpack.c.h.b16 %v5761
        %v5831 = vunpack.c.l.b16 %v5762
        %v5832 = vunpack.c.h.b16 %v5762
        %v5833 = vunpack.c.l.b16 %v5763
        %v5834 = vunpack.c.h.b16 %v5763
        %v5835 = vunpack.c.l.b16 %v5764
        %v5836 = vunpack.c.h.b16 %v5764
        %v5837 = vunpack.c.l.b16 %v5765
        %v5838 = vunpack.c.h.b16 %v5765
        %v5839 = vunpack.c.l.b16 %v5766
        %v5840 = vunpack.c.h.b16 %v5766
        %v5841 = vunpack.c.l.b16 %v5767
        %v5842 = vunpack.c.h.b16 %v5767
        %v5843 = vunpack.c.l.b16 %v5768
        %v5844 = vunpack.c.h.b16 %v5768
        %v5845 = vunpack.c.l.b16 %v5769
        %v5846 = vunpack.c.h.b16 %v5769
        %v5847 = vunpack.c.l.b16 %v5770
        %v5848 = vunpack.c.h.b16 %v5770
        %v5849 = vunpack.c.l.b16 %v5771
        %v5850 = vunpack.c.h.b16 %v5771
        %v5851 = vunpack.c.l.b16 %v5772
        %v5852 = vunpack.c.h.b16 %v5772
        %v5853 = vunpack.c.l.b16 %v5773
        %v5854 = vunpack.c.h.b16 %v5773
        %v5855 = vunpack.c.l.b16 %v5774
        %v5856 = vunpack.c.h.b16 %v5774
        %v5857 = vunpack.c.l.b16 %v5775
        %v5858 = vunpack.c.h.b16 %v5775
        %v5859 = vunpack.c.l.b16 %v5776
        %v5860 = vunpack.c.h.b16 %v5776
        %v5861 = vunpack.c.l.b16 %v5777
        %v5862 = vunpack.c.h.b16 %v5777
        %v5863 = vunpack.c.l.b16 %v5778
        %v5864 = vunpack.c.h.b16 %v5778
        %v5865 = vunpack.c.l.b16 %v5779
        %v5866 = vunpack.c.h.b16 %v5779
        %v5867 = vunpack.c.l.b16 %v5780
        %v5868 = vunpack.c.h.b16 %v5780
        %v5869 = vunpack.c.l.b16 %v5781
        %v5870 = vunpack.c.h.b16 %v5781
        %v5871 = vunpack.c.l.b16 %v5782
        %v5872 = vunpack.c.h.b16 %v5782
        %v5873 = vunpack.c.l.b16 %v5783
        %v5874 = vunpack.c.h.b16 %v5783
        %v5875 = vunpack.c.l.b16 %v5784
        %v5876 = vunpack.c.h.b16 %v5784
        %v5877 = vunpack.c.l.b16 %v5785
        %v5878 = vunpack.c.h.b16 %v5785
        %v5879 = vunpack.c.l.b16 %v5786
        %v5880 = vunpack.c.h.b16 %v5786
        %v5881 = vunpack.c.l.b16 %v5787
        %v5882 = vunpack.c.h.b16 %v5787
        %v5883 = vunpack.c.l.b16 %v5788
        %v5884 = vunpack.c.h.b16 %v5788
        %v5885 = vpack.c.b16 %v5823, %v5821
        %v5886 = vpack.c.b16 %v5824, %v5822
        %v5887 = vpack.c.b16 %v5827, %v5825
        %v5888 = vpack.c.b16 %v5828, %v5826
        %v5889 = vpack.c.b16 %v5831, %v5829
        %v5890 = vpack.c.b16 %v5832, %v5830
        %v5891 = vpack.c.b16 %v5835, %v5833
        %v5892 = vpack.c.b16 %v5836, %v5834
        %v5893 = vpack.c.b16 %v5839, %v5837
        %v5894 = vpack.c.b16 %v5840, %v5838
        %v5895 = vpack.c.b16 %v5843, %v5841
        %v5896 = vpack.c.b16 %v5844, %v5842
        %v5897 = vpack.c.b16 %v5847, %v5845
        %v5898 = vpack.c.b16 %v5848, %v5846
        %v5899 = vpack.c.b16 %v5851, %v5849
        %v5900 = vpack.c.b16 %v5852, %v5850
        %v5901 = vpack.c.b16 %v5855, %v5853
        %v5902 = vpack.c.b16 %v5856, %v5854
        %v5903 = vpack.c.b16 %v5859, %v5857
        %v5904 = vpack.c.b16 %v5860, %v5858
        %v5905 = vpack.c.b16 %v5863, %v5861
        %v5906 = vpack.c.b16 %v5864, %v5862
        %v5907 = vpack.c.b16 %v5867, %v5865
        %v5908 = vpack.c.b16 %v5868, %v5866
        %v5909 = vpack.c.b16 %v5871, %v5869
        %v5910 = vpack.c.b16 %v5872, %v5870
        %v5911 = vpack.c.b16 %v5875, %v5873
        %v5912 = vpack.c.b16 %v5876, %v5874
        %v5913 = vpack.c.b16 %v5879, %v5877
        %v5914 = vpack.c.b16 %v5880, %v5878
        %v5915 = vpack.c.b16 %v5883, %v5881
        %v5916 = vpack.c.b16 %v5884, %v5882
        %5949 = vmatprep.subr.bf16.mxu0 %v5886
        %5950 = vmatpush1.bf16.msra.mxu0 %v5885
        %5951 = vmatprep.subr.bf16.mxu0 %v5888
        %5952 = vmatpush1.bf16.msra.mxu0 %v5887
        %5953 = vmatprep.subr.bf16.mxu0 %v5890
        %5954 = vmatpush1.bf16.msra.mxu0 %v5889
        %5955 = vmatprep.subr.bf16.mxu0 %v5892
        %5956 = vmatpush1.bf16.msra.mxu0 %v5891
        %5957 = vmatprep.subr.bf16.mxu0 %v5894
        %5958 = vmatpush1.bf16.msra.mxu0 %v5893
        %5959 = vmatprep.subr.bf16.mxu0 %v5896
        %5960 = vmatpush1.bf16.msra.mxu0 %v5895
        %5961 = vmatprep.subr.bf16.mxu0 %v5898
        %5962 = vmatpush1.bf16.msra.mxu0 %v5897
        %5963 = vmatprep.subr.bf16.mxu0 %v5900
        %5964 = vmatpush1.bf16.msra.mxu0 %v5899
        %5965 = vmatprep.subr.bf16.mxu0 %v5902
        %5966 = vmatpush1.bf16.msra.mxu0 %v5901
        %5967 = vmatprep.subr.bf16.mxu0 %v5904
        %5968 = vmatpush1.bf16.msra.mxu0 %v5903
        %5969 = vmatprep.subr.bf16.mxu0 %v5906
        %5970 = vmatpush1.bf16.msra.mxu0 %v5905
        %5971 = vmatprep.subr.bf16.mxu0 %v5908
        %5972 = vmatpush1.bf16.msra.mxu0 %v5907
        %5973 = vmatprep.subr.bf16.mxu0 %v5910
        %5974 = vmatpush1.bf16.msra.mxu0 %v5909
        %5975 = vmatprep.subr.bf16.mxu0 %v5912
        %5976 = vmatpush1.bf16.msra.mxu0 %v5911
        %5977 = vmatprep.subr.bf16.mxu0 %v5914
        %5978 = vmatpush1.bf16.msra.mxu0 %v5913
        %5979 = vmatprep.subr.bf16.mxu0 %v5916
        %5980 = vmatpush1.bf16.msra.mxu0 %v5915
        %5981 = vmatprep.mubr.bf16.mxu0 %v5750
        %5982 = vmatmul.mubr.bf16.gmra.mrb[0].mxu0 %v5749
        %v5983 = vpop.f32.mrb[0].mxu0
        %v5984 = vadd.f32 0.0, %v5983
        %v5985 = vpop.f32.mrb[0].mxu0
        %v5986 = vadd.f32 0.0, %v5985
        %v5987 = vpop.f32.mrb[0].mxu0
        %v5988 = vadd.f32 0.0, %v5987
        %v5989 = vpop.f32.mrb[0].mxu0
        %v5990 = vadd.f32 0.0, %v5989
        %5991 = vmatprep.mubr.bf16.mxu0 %v5752
        %5992 = vmatmul.mubr.bf16.gmra.mrb[0].mxu0 %v5751
        %v5993 = vpop.f32.mrb[0].mxu0
        %v5994 = vadd.f32 0.0, %v5993
        %v5995 = vpop.f32.mrb[0].mxu0
        %v5996 = vadd.f32 0.0, %v5995
        %v5997 = vpop.f32.mrb[0].mxu0
        %v5998 = vadd.f32 0.0, %v5997
        %v5999 = vpop.f32.mrb[0].mxu0
        %v6000 = vadd.f32 0.0, %v5999
        %6001 = vmatprep.mubr.bf16.mxu0 %v5754
        %6002 = vmatmul.mubr.bf16.gmra.mrb[0].mxu0 %v5753
        %v6003 = vpop.f32.mrb[0].mxu0
        %v6004 = vadd.f32 0.0, %v6003
        %v6005 = vpop.f32.mrb[0].mxu0
        %v6006 = vadd.f32 0.0, %v6005
        %v6007 = vpop.f32.mrb[0].mxu0
        %v6008 = vadd.f32 0.0, %v6007
        %v6009 = vpop.f32.mrb[0].mxu0
        %v6010 = vadd.f32 0.0, %v6009
        %6011 = vmatprep.mubr.bf16.mxu0 %v5756
        %6012 = vmatmul.mubr.bf16.gmra.mrb[0].mxu0 %v5755
        %v6013 = vpop.f32.mrb[0].mxu0
        %v6014 = vadd.f32 0.0, %v6013
        %v6015 = vpop.f32.mrb[0].mxu0
        %v6016 = vadd.f32 0.0, %v6015
        %v6017 = vpop.f32.mrb[0].mxu0
        %v6018 = vadd.f32 0.0, %v6017
        %v6019 = vpop.f32.mrb[0].mxu0
        %v6020 = vadd.f32 0.0, %v6019
        %6021 = vdwg.mxu0
        %v6023 = vsel %vm3217, %v5613, 0
        %v6026 = vsel %vm3217, %v5615, 0
        %v6029 = vsel %vm3217, %v5617, 0
        %v6032 = vsel %vm3217, %v5619, 0
        %v6035 = vsel %vm3217, %v5621, 0
        %v6038 = vsel %vm3217, %v5623, 0
        %v6041 = vsel %vm3217, %v5625, 0
        %v6044 = vsel %vm3217, %v5627, 0
        %v6047 = vsel %vm3221, %v5610, 0
        %v6050 = vsel %vm3221, %v5611, 0
        %6052 = vmatprep.subr.mxu0 %v5577
        %6053 = vmatpush1.msra.mxu0 %v5576
        %6054 = vmatprep.subr.mxu0 %v5579
        %6055 = vmatpush1.msra.mxu0 %v5578
        %6056 = vmatprep.subr.mxu0 %v5581
        %6057 = vmatpush1.msra.mxu0 %v5580
        %6058 = vmatprep.subr.mxu0 %v5583
        %6059 = vmatpush1.msra.mxu0 %v5582
        %6060 = vmatprep.subr.mxu0 %v5585
        %6061 = vmatpush1.msra.mxu0 %v5584
        %6062 = vmatprep.subr.mxu0 %v5587
        %6063 = vmatpush1.msra.mxu0 %v5586
        %6064 = vmatprep.subr.mxu0 %v5589
        %6065 = vmatpush1.msra.mxu0 %v5588
        %6066 = vmatprep.subr.mxu0 %v5591
        %6067 = vmatpush1.msra.mxu0 %v5590
        %6068 = vmatprep.subr.mxu0 %v5593
        %6069 = vmatpush1.msra.mxu0 %v5592
        %6070 = vmatprep.subr.mxu0 %v5595
        %6071 = vmatpush1.msra.mxu0 %v5594
        %6072 = vmatprep.subr.mxu0 %v5597
        %6073 = vmatpush1.msra.mxu0 %v5596
        %6074 = vmatprep.subr.mxu0 %v5599
        %6075 = vmatpush1.msra.mxu0 %v5598
        %6076 = vmatprep.subr.mxu0 %v5601
        %6077 = vmatpush1.msra.mxu0 %v5600
        %6078 = vmatprep.subr.mxu0 %v5603
        %6079 = vmatpush1.msra.mxu0 %v5602
        %6080 = vmatprep.subr.mxu0 %v5605
        %6081 = vmatpush1.msra.mxu0 %v5604
        %6082 = vmatprep.subr.mxu0 %v5607
        %6083 = vmatpush1.msra.mxu0 %v5606
        %6084 = vmatprep.subr.mxu0 %v5609
        %6085 = vmatpush1.msra.mxu0 %v5608
        %6086 = vmatprep.subr.mxu0 %v6050
        %6087 = vmatpush1.msra.mxu0 %v6047
        %6088 = vmatprep.subr.mxu0 0.0
        %6089 = vmatpush1.msra.mxu0 0.0
        %6090 = vmatprep.subr.mxu0 0.0
        %6091 = vmatpush1.msra.mxu0 0.0
        %6092 = vmatprep.subr.mxu0 0.0
        %6093 = vmatpush1.msra.mxu0 0.0
        %6094 = vmatprep.subr.mxu0 0.0
        %6095 = vmatpush1.msra.mxu0 0.0
        %6096 = vmatprep.subr.mxu0 0.0
        %6097 = vmatpush1.msra.mxu0 0.0
        %6098 = vmatprep.subr.mxu0 0.0
        %6099 = vmatpush1.msra.mxu0 0.0
        %6100 = vmatprep.subr.mxu0 0.0
        %6101 = vmatpush1.msra.mxu0 0.0
        %6102 = vmatprep.subr.mxu0 0.0
        %6103 = vmatpush1.msra.mxu0 0.0
        %6104 = vmatprep.subr.mxu0 0.0
        %6105 = vmatpush1.msra.mxu0 0.0
        %6106 = vmatprep.subr.mxu0 0.0
        %6107 = vmatpush1.msra.mxu0 0.0
        %6108 = vmatprep.subr.mxu0 0.0
        %6109 = vmatpush1.msra.mxu0 0.0
        %6110 = vmatprep.subr.mxu0 0.0
        %6111 = vmatpush1.msra.mxu0 0.0
        %6112 = vmatprep.subr.mxu0 0.0
        %6113 = vmatpush1.msra.mxu0 0.0
        %6114 = vmatprep.subr.mxu0 0.0
        %6115 = vmatpush1.msra.mxu0 0.0
        %6116 = vmatprep.mubr.f32.mxu0 %v6023
        %6117 = vmatmul.mubr.f32.gmra.mrb[0].mxu0 %v5612
        %v6118 = vpop.f32.mrb[0].mxu0
        %v6119 = vadd.f32 %v5984, %v6118
        %v6120 = vpop.f32.mrb[0].mxu0
        %v6121 = vadd.f32 %v5986, %v6120
        %6122 = vmatprep.mubr.f32.mxu0 %v6026
        %6123 = vmatmul.mubr.f32.gmra.mrb[0].mxu0 %v5614
        %v6124 = vpop.f32.mrb[0].mxu0
        %v6125 = vadd.f32 %v5988, %v6124
        %v6126 = vpop.f32.mrb[0].mxu0
        %v6127 = vadd.f32 %v5990, %v6126
        %6128 = vmatprep.mubr.f32.mxu0 %v6029
        %6129 = vmatmul.mubr.f32.gmra.mrb[0].mxu0 %v5616
        %v6130 = vpop.f32.mrb[0].mxu0
        %v6131 = vadd.f32 %v5994, %v6130
        %v6132 = vpop.f32.mrb[0].mxu0
        %v6133 = vadd.f32 %v5996, %v6132
        %6134 = vmatprep.mubr.f32.mxu0 %v6032
        %6135 = vmatmul.mubr.f32.gmra.mrb[0].mxu0 %v5618
        %v6136 = vpop.f32.mrb[0].mxu0
        %v6137 = vadd.f32 %v5998, %v6136
        %v6138 = vpop.f32.mrb[0].mxu0
        %v6139 = vadd.f32 %v6000, %v6138
        %6140 = vmatprep.mubr.f32.mxu0 %v6035
        %6141 = vmatmul.mubr.f32.gmra.mrb[0].mxu0 %v5620
        %v6142 = vpop.f32.mrb[0].mxu0
        %v6143 = vadd.f32 %v6004, %v6142
        %v6144 = vpop.f32.mrb[0].mxu0
        %v6145 = vadd.f32 %v6006, %v6144
        %6146 = vmatprep.mubr.f32.mxu0 %v6038
        %6147 = vmatmul.mubr.f32.gmra.mrb[0].mxu0 %v5622
        %v6148 = vpop.f32.mrb[0].mxu0
        %v6149 = vadd.f32 %v6008, %v6148
        %v6150 = vpop.f32.mrb[0].mxu0
        %v6151 = vadd.f32 %v6010, %v6150
        %6152 = vmatprep.mubr.f32.mxu0 %v6041
        %6153 = vmatmul.mubr.f32.gmra.mrb[0].mxu0 %v5624
        %v6154 = vpop.f32.mrb[0].mxu0
        %v6155 = vadd.f32 %v6014, %v6154
        %v6156 = vpop.f32.mrb[0].mxu0
        %v6157 = vadd.f32 %v6016, %v6156
        %6158 = vmatprep.mubr.f32.mxu0 %v6044
        %6159 = vmatmul.mubr.f32.gmra.mrb[0].mxu0 %v5626
        %v6160 = vpop.f32.mrb[0].mxu0
        %v6161 = vadd.f32 %v6018, %v6160
        %v6162 = vpop.f32.mrb[0].mxu0
        %v6163 = vadd.f32 %v6020, %v6162
        %6164 = vdwg.mxu0
        %v6165 = vld [vmem:[#allocation12] sm:$0x3]
        %v6167 = vlaneseq
        %v6168 = vshrl.u32 %v6167, 7
        %v6169 = vsub.s32 0, %v6168
        %v6170 = vrot.slane %v6165, %v6169
        %v6171 = vlaneseq
        %v6172 = vshrl.u32 %v6171, 7
        %v6173 = vsub.s32 1, %v6172
        %v6174 = vrot.slane %v6165, %v6173
        %v6177 = vadd.f32 %v6119, %v6170
        %v6178 = vadd.f32 %v6121, %v6174
        %v6179 = vadd.f32 %v6125, %v6170
        %v6180 = vadd.f32 %v6127, %v6174
        %v6181 = vadd.f32 %v6131, %v6170
        %v6182 = vadd.f32 %v6133, %v6174
        %v6183 = vadd.f32 %v6137, %v6170
        %v6184 = vadd.f32 %v6139, %v6174
        %v6185 = vadd.f32 %v6143, %v6170
        %v6186 = vadd.f32 %v6145, %v6174
        %v6187 = vadd.f32 %v6149, %v6170
        %v6188 = vadd.f32 %v6151, %v6174
        %v6189 = vadd.f32 %v6155, %v6170
        %v6190 = vadd.f32 %v6157, %v6174
        %v6191 = vadd.f32 %v6161, %v6170
        %v6192 = vadd.f32 %v6163, %v6174
        %6193 = vst [vmem:[%s553] sm:$0xff] %v6177
        %6194 = vst [vmem:[%s553 + $0x8] sm:$0xff] %v6178
        %6195 = vst [vmem:[%s553 + $0x10] sm:$0xff] %v6179
        %6196 = vst [vmem:[%s553 + $0x18] sm:$0xff] %v6180
        %6197 = vst [vmem:[%s553 + $0x20] sm:$0xff] %v6181
        %6198 = vst [vmem:[%s553 + $0x28] sm:$0xff] %v6182
        %6199 = vst [vmem:[%s553 + $0x30] sm:$0xff] %v6183
        %6200 = vst [vmem:[%s553 + $0x38] sm:$0xff] %v6184
        %6201 = vst [vmem:[%s553 + $0x40] sm:$0xff] %v6185
        %6202 = vst [vmem:[%s553 + $0x48] sm:$0xff] %v6186
        %6203 = vst [vmem:[%s553 + $0x50] sm:$0xff] %v6187
        %6204 = vst [vmem:[%s553 + $0x58] sm:$0xff] %v6188
        %6205 = vst [vmem:[%s553 + $0x60] sm:$0xff] %v6189
        %6206 = vst [vmem:[%s553 + $0x68] sm:$0xff] %v6190
        %6207 = vst [vmem:[%s553 + $0x70] sm:$0xff] %v6191
        %6208 = vst [vmem:[%s553 + $0x78] sm:$0xff] %v6192
        %s6209 = sand.u32 %s341, 1
        %s6210 = scalar_lea.sflag [#allocation5], %s6209
        %s6211 = sand.u32 %s341, 1
        %s6212 = smul.addr %s6211, 128
        %s6213 = scalar_lea.vmem [#allocation14], %s6212
        // Predicated region
        $region101: #{tpu_custom_call.1} parent=75 // pred_check
          %p6214 = pneg %p351
        $region102: #{tpu_custom_call.1} parent=75 // pred_check_branch
          %6216 = sbr.rel (%p6214) target = $region104
        $region103: #{tpu_custom_call.1} parent=75 // pred_region
          %s6217 = smul.u32 8, %s34
          %s6219 = ssub.s32 2048, 2048
          %6220 = vsyncadd %s6210, %s6219
          %s6221 = smul.addr %s6217, 2
          %s6222 = smul.addr %s6221, 128
          %s6223 = scalar_lea.hbm %s14, %s6222
          %s6224 = sshll.u32 %s6213, 4
          %s6225 = int_to_ptr.vmem [resolvable:$true] %s6224
          %6230 = dma.vmem_to_hbm [thread:$0]  %s6225, 2048, %s6223, %s6210, 256, 256, 16
        $region104: #{tpu_custom_call.1} parent=75 // pred_fallthru
          _
      $region76: #{tpu_custom_call.1} parent=5 // pred_fallthru
        _
      %p6231 = scmp.le.s32.totalorder 2, %s29
      // Predicated region
      $region105: #{tpu_custom_call.1} parent=5 // pred_check
        %p6232 = pneg %p6231
      $region106: #{tpu_custom_call.1} parent=5 // pred_check_branch
        %6234 = sbr.rel (%p6232) target = $region108
      $region107: #{tpu_custom_call.1} parent=5 // pred_region
        %s6235 = ssub.s32 %s29, 2
        // Predicated region
        $region109: #{tpu_custom_call.1} parent=107 // pred_check
          %p6236 = pneg %p357
        $region110: #{tpu_custom_call.1} parent=107 // pred_check_branch
          %6238 = sbr.rel (%p6236) target = $region112
        $region111: #{tpu_custom_call.1} parent=107 // pred_region
          %s6239 = sand.u32 %s342, 1
          %s6240 = scalar_lea.sflag [#allocation5], %s6239
          %s6241 = sand.u32 %s342, 1
          %s6242 = smul.addr %s6241, 128
          %s6243 = scalar_lea.vmem [#allocation14], %s6242
          %6244 = dma.done %s6240, 2048
        $region112: #{tpu_custom_call.1} parent=107 // pred_fallthru
          _
      $region108: #{tpu_custom_call.1} parent=5 // pred_fallthru
        _
    $region6: #{tpu_custom_call.1} parent=1 // loop_footer
      %s33 = sadd.s32 1, %s29
    $region7: #{tpu_custom_call.1} parent=1 // loop_footer_branch
      %28 = sbr.rel target = $region3
    $region8: #{tpu_custom_call.1} parent=1 // loop_exit
      _
    %6245 = vsyncpa [#allocation4], 1
    %s6246 = scalar_lea.sflag [#allocation4], 1
    %6247 = vsyncpa %s6246, 1
    %6248 = vsyncpa [#allocation7], 1
    %6249 = vsyncpa [#allocation10], 1
    %6250 = vsyncpa [#allocation13], 1
    %6251 = vsyncpa [#allocation5], 1
    %s6252 = scalar_lea.sflag [#allocation5], 1
    %6253 = vsyncpa %s6252, 1

</llo_original>
